<compile_context>
chip_gen: v7x
topology: tpu7x:2x2x1
jax: 0.10.0
libtpu: 0.0.40
codegen_flags: <defaults>
</compile_context>

<pallas_src>
import functools
import math

import jax
import jax.numpy as jnp
from jax.experimental import pallas as pl
from jax.experimental.pallas import tpu as pltpu

NEG_INF = -1e9


def _round_up(x, m):
    return (x + m - 1) // m * m


def _pick_tile(dim, cap, align):
    """Return (tile, padded_dim). Full dim if it fits under cap, else the
    largest `align`-multiple <= cap dividing dim; pad only as a last resort."""
    if dim <= cap:
        return dim, dim
    t = (cap // align) * align
    while t >= align:
        if dim % t == 0:
            return t, dim
        t -= align
    t = (cap // align) * align
    return t, _round_up(dim, t)


@functools.lru_cache(maxsize=None)
def _hw():
    """Per-generation tiling / VMEM budget (v5e/v6e: 128 MiB, v7x: 64 MiB)."""
    try:
        cap = int(pltpu.get_tpu_info().vmem_capacity_bytes)
    except Exception:  # pragma: no cover - conservative fallback
        cap = 128 << 20
    big = cap >= (100 << 20)
    return dict(vmem_limit=min(96 << 20, (cap * 3) // 4),
                tm=512 if big else 256,
                tn=512 if big else 256,
                tk=512)


# ----------------------------------------------------------------------------
# Kernel 1: tiled linear  out = x @ w + b    (bf16 MXU, f32 accumulation)
# ----------------------------------------------------------------------------
def _linear_kernel(x_ref, w_ref, b_ref, o_ref, acc_ref):
    @pl.when(pl.program_id(2) == 0)
    def _():
        acc_ref[...] = jnp.zeros_like(acc_ref)

    acc_ref[...] += jnp.dot(x_ref[...], w_ref[...],
                            preferred_element_type=jnp.float32)

    @pl.when(pl.program_id(2) == pl.num_programs(2) - 1)
    def _():
        o_ref[...] = (acc_ref[...] + b_ref[...]).astype(o_ref.dtype)


def linear(x, w, b, *, out_dtype=jnp.bfloat16):
    """x: (M, K), w: (K, N), b: (N,)  ->  (M, N) in out_dtype."""
    M, K = x.shape
    N = w.shape[1]
    hw = _hw()
    tm, Mp = _pick_tile(M, hw["tm"], 8)
    tn, Np = _pick_tile(N, hw["tn"], 128)
    tk, Kp = _pick_tile(K, hw["tk"], 128)

    x = x.astype(jnp.bfloat16)
    w = w.astype(jnp.bfloat16)
    b = b.astype(jnp.float32).reshape(1, N)
    if Mp != M or Kp != K:
        x = jnp.pad(x, ((0, Mp - M), (0, Kp - K)))
    if Kp != K or Np != N:
        w = jnp.pad(w, ((0, Kp - K), (0, Np - N)))
    if Np != N:
        b = jnp.pad(b, ((0, 0), (0, Np - N)))

    out = pl.pallas_call(
        _linear_kernel,
        out_shape=jax.ShapeDtypeStruct((Mp, Np), out_dtype),
        grid=(Mp // tm, Np // tn, Kp // tk),
        in_specs=[
            pl.BlockSpec((tm, tk), lambda i, j, k: (i, k)),
            pl.BlockSpec((tk, tn), lambda i, j, k: (k, j)),
            pl.BlockSpec((1, tn), lambda i, j, k: (0, j)),
        ],
        out_specs=pl.BlockSpec((tm, tn), lambda i, j, k: (i, j)),
        scratch_shapes=[pltpu.VMEM((tm, tn), jnp.float32)],
        compiler_params=pltpu.CompilerParams(
            dimension_semantics=("parallel", "parallel", "arbitrary"),
            vmem_limit_bytes=hw["vmem_limit"]),
    )(x, w, b)
    if Mp != M or Np != N:
        out = out[:M, :N]
    return out


# ----------------------------------------------------------------------------
# Kernel 2: fused  LayerNorm( (x @ w + b) + residual )  -> bf16
# ----------------------------------------------------------------------------
def _linear_ln_kernel(x_ref, w_ref, b_ref, r_ref, g_ref, be_ref, o_ref, acc_ref):
    @pl.when(pl.program_id(1) == 0)
    def _():
        acc_ref[...] = jnp.zeros_like(acc_ref)

    acc_ref[...] += jnp.dot(x_ref[...], w_ref[...],
                            preferred_element_type=jnp.float32)

    @pl.when(pl.program_id(1) == pl.num_programs(1) - 1)
    def _():
        h = acc_ref[...] + b_ref[...] + r_ref[...].astype(jnp.float32)
        mu = jnp.mean(h, axis=-1, keepdims=True)
        var = jnp.mean(jnp.square(h - mu), axis=-1, keepdims=True)
        y = (h - mu) * jax.lax.rsqrt(var + 1e-5) * g_ref[...] + be_ref[...]
        o_ref[...] = y.astype(o_ref.dtype)


def linear_ln(x, w, b, residual, gamma, beta):
    """Fused projection + residual + LayerNorm; N (= model_dim) is one tile."""
    M, K = x.shape
    N = w.shape[1]
    hw = _hw()
    tm, Mp = _pick_tile(M, hw["tm"], 8)
    tk, Kp = _pick_tile(K, hw["tk"], 128)

    x = x.astype(jnp.bfloat16)
    w = w.astype(jnp.bfloat16)
    residual = residual.astype(jnp.bfloat16)
    b = b.astype(jnp.float32).reshape(1, N)
    g = gamma.astype(jnp.float32).reshape(1, N)
    be = beta.astype(jnp.float32).reshape(1, N)
    if Mp != M or Kp != K:
        x = jnp.pad(x, ((0, Mp - M), (0, Kp - K)))
    if Mp != M:
        residual = jnp.pad(residual, ((0, Mp - M), (0, 0)))
    if Kp != K:
        w = jnp.pad(w, ((0, Kp - K), (0, 0)))

    out = pl.pallas_call(
        _linear_ln_kernel,
        out_shape=jax.ShapeDtypeStruct((Mp, N), jnp.bfloat16),
        grid=(Mp // tm, Kp // tk),
        in_specs=[
            pl.BlockSpec((tm, tk), lambda i, k: (i, k)),
            pl.BlockSpec((tk, N), lambda i, k: (k, 0)),
            pl.BlockSpec((1, N), lambda i, k: (0, 0)),
            pl.BlockSpec((tm, N), lambda i, k: (i, 0)),
            pl.BlockSpec((1, N), lambda i, k: (0, 0)),
            pl.BlockSpec((1, N), lambda i, k: (0, 0)),
        ],
        out_specs=pl.BlockSpec((tm, N), lambda i, k: (i, 0)),
        scratch_shapes=[pltpu.VMEM((tm, N), jnp.float32)],
        compiler_params=pltpu.CompilerParams(
            dimension_semantics=("parallel", "arbitrary"),
            vmem_limit_bytes=hw["vmem_limit"]),
    )(x, w, b, residual, g, be)
    if Mp != M:
        out = out[:M]
    return out


# ----------------------------------------------------------------------------
# Kernel 3: flash-style multi-head attention (head-interleaved (B, S, D) layout)
# ----------------------------------------------------------------------------
def _attn_kernel(q_ref, k_ref, v_ref, pm_ref, o_ref, m_ref, l_ref, acc_ref,
                 *, H, scale, causal):
    qi = pl.program_id(1)
    kv = pl.program_id(2)
    nkv = pl.num_programs(2)
    tq = q_ref.shape[1]
    tkv = k_ref.shape[1]
    D = q_ref.shape[2]
    hd = D // H

    @pl.when(kv == 0)
    def _():
        m_ref[...] = jnp.full_like(m_ref, -1e30)
        l_ref[...] = jnp.zeros_like(l_ref)
        acc_ref[...] = jnp.zeros_like(acc_ref)

    def _compute():
        q = q_ref[0]                       # (tq, D)  bf16
        k = k_ref[0]                       # (tkv, D) bf16
        v = v_ref[0]                       # (tkv, D) bf16
        pad = pm_ref[0]                    # (1, tkv) f32, 1.0 where key is pad

        mask = pad > 0.5                   # hoisted out of the per-head loop
        if causal:
            rows = jax.lax.broadcasted_iota(jnp.int32, (tq, tkv), 0) + qi * tq
            cols = jax.lax.broadcasted_iota(jnp.int32, (tq, tkv), 1) + kv * tkv
            mask = jnp.logical_or(mask, cols > rows)

        for h in range(H):                 # heads batched per grid step
            sl = slice(h * hd, (h + 1) * hd)
            s = jax.lax.dot_general(q[:, sl], k[:, sl],
                                    (((1,), (1,)), ((), ())),
                                    preferred_element_type=jnp.float32) * scale
            s = jnp.where(mask, NEG_INF, s)
            m_prev = m_ref[:, h:h + 1]
            m_new = jnp.maximum(m_prev, jnp.max(s, axis=-1, keepdims=True))
            alpha = jnp.exp(m_prev - m_new)
            p = jnp.exp(s - m_new)
            l_ref[:, h:h + 1] = alpha * l_ref[:, h:h + 1] + \
                jnp.sum(p, axis=-1, keepdims=True)
            acc_ref[:, sl] = alpha * acc_ref[:, sl] + jax.lax.dot_general(
                p.astype(v.dtype), v[:, sl], (((1,), (0,)), ((), ())),
                preferred_element_type=jnp.float32)
            m_ref[:, h:h + 1] = m_new

    if causal:
        # Skip kv tiles that lie entirely above the diagonal for this q tile.
        pl.when(kv * tkv <= qi * tq + (tq - 1))(_compute)
    else:
        _compute()

    @pl.when(kv == nkv - 1)
    def _():
        inv = pl.reciprocal(l_ref[...], approx=True)     # (tq, H), EUP slot
        for h in range(H):
            sl = slice(h * hd, (h + 1) * hd)
            o_ref[0, :, sl] = (acc_ref[:, sl] * inv[:, h:h + 1]).astype(o_ref.dtype)


def attention(q, k, v, pad_mask, *, head_count, causal):
    """q: (B, Sq, D) bf16, k/v: (B, Sk, D) bf16, pad_mask: (B, 1, Sk) f32."""
    B, Sq, D = q.shape
    Sk = k.shape[1]
    hw = _hw()
    tq, Sqp = _pick_tile(Sq, 512, 8)
    tkv, Skp = _pick_tile(Sk, 512, 128)
    if Sqp != Sq:
        q = jnp.pad(q, ((0, 0), (0, Sqp - Sq), (0, 0)))
    if Skp != Sk:
        k = jnp.pad(k, ((0, 0), (0, Skp - Sk), (0, 0)))
        v = jnp.pad(v, ((0, 0), (0, Skp - Sk), (0, 0)))
        pad_mask = jnp.pad(pad_mask, ((0, 0), (0, 0), (0, Skp - Sk)),
                           constant_values=1.0)
    hd = D // head_count

    out = pl.pallas_call(
        functools.partial(_attn_kernel, H=head_count,
                          scale=1.0 / math.sqrt(hd), causal=causal),
        out_shape=jax.ShapeDtypeStruct((B, Sqp, D), jnp.bfloat16),
        grid=(B, Sqp // tq, Skp // tkv),
        in_specs=[
            pl.BlockSpec((1, tq, D), lambda b, i, j: (b, i, 0)),
            pl.BlockSpec((1, tkv, D), lambda b, i, j: (b, j, 0)),
            pl.BlockSpec((1, tkv, D), lambda b, i, j: (b, j, 0)),
            pl.BlockSpec((1, 1, tkv), lambda b, i, j: (b, 0, j)),
        ],
        out_specs=pl.BlockSpec((1, tq, D), lambda b, i, j: (b, i, 0)),
        scratch_shapes=[
            pltpu.VMEM((tq, head_count), jnp.float32),   # running max  m
            pltpu.VMEM((tq, head_count), jnp.float32),   # running sum  l
            pltpu.VMEM((tq, D), jnp.float32),            # lane-dense acc
        ],
        compiler_params=pltpu.CompilerParams(
            dimension_semantics=("parallel", "parallel", "arbitrary"),
            vmem_limit_bytes=hw["vmem_limit"]),
    )(q, k, v, pad_mask)
    if Sqp != Sq:
        out = out[:, :Sq]
    return out


# ----------------------------------------------------------------------------
# Model glue (embedding gather / reshapes in plain JAX)
# ----------------------------------------------------------------------------
def positional_encoding(seq_len, model_dim):
    pos = jnp.arange(seq_len, dtype=jnp.float32)[:, None]
    i = jnp.arange(model_dim, dtype=jnp.float32)[None, :]
    angle = pos / jnp.power(10000.0, (2.0 * jnp.floor(i / 2.0)) / model_dim)
    return jnp.where((jnp.arange(model_dim) % 2) == 0, jnp.sin(angle), jnp.cos(angle))


def get_masks(inputs, pad_index=0):
    return inputs == pad_index          # (B, S) bool, True where pad


def multi_head_attention(p, q_in, kv_in, key_mask, head_count, causal, self_attn):
    """Returns the pre-output-projection context (B, Sq, D) bf16."""
    B, Sq, D = q_in.shape
    Sk = kv_in.shape[1]
    if self_attn:
        qkv = linear(q_in.reshape(-1, D), p["w_qkv"], p["b_qkv"]).reshape(B, Sq, 3 * D)
        q, k, v = qkv[..., :D], qkv[..., D:2 * D], qkv[..., 2 * D:]
    else:
        q = linear(q_in.reshape(-1, D), p["wq"], p["bq"]).reshape(B, Sq, D)
        kv = linear(kv_in.reshape(-1, D), p["w_kv"], p["b_kv"]).reshape(B, Sk, 2 * D)
        k, v = kv[..., :D], kv[..., D:]
    pad = key_mask.astype(jnp.float32).reshape(B, 1, Sk)
    return attention(q, k, v, pad, head_count=head_count, causal=causal)


def attn_sublayer(p_attn, p_ln, q_in, kv_in, key_mask, head_count, causal, self_attn):
    """LayerNorm(q_in + OutProj(Attention(...)))  -- output proj fused with LN."""
    B, Sq, D = q_in.shape
    ctx = multi_head_attention(p_attn, q_in, kv_in, key_mask, head_count,
                               causal, self_attn)
    out = linear_ln(ctx.reshape(-1, D), p_attn["wo"], p_attn["bo"],
                    q_in.reshape(-1, D), p_ln["g"], p_ln["b"])
    return out.reshape(B, Sq, D)


def ff_sublayer(p_ff, p_ln, h):
    """LayerNorm(h + FF(h)); FF collapsed to one matmul at prepare time."""
    B, S, D = h.shape
    out = linear_ln(h.reshape(-1, D), p_ff["w"], p_ff["b"],
                    h.reshape(-1, D), p_ln["g"], p_ln["b"])
    return out.reshape(B, S, D)


def encoder_block(p, h, mask, head_count):
    h = attn_sublayer(p["attn"], p["ln1"], h, h, mask, head_count,
                      causal=False, self_attn=True)
    h = ff_sublayer(p["ff"], p["ln2"], h)
    return h


def decoder_block(p, h, kv, self_mask, kv_mask, head_count):
    h = attn_sublayer(p["self_attn"], p["ln1"], h, h, self_mask, head_count,
                      causal=True, self_attn=True)
    h = attn_sublayer(p["cross_attn"], p["ln2"], h, kv, kv_mask, head_count,
                      causal=False, self_attn=False)
    h = ff_sublayer(p["ff"], p["ln3"], h)
    return h


def transformer_forward(params, encoder_inputs, decoder_inputs, head_count):
    D = params["enc_emb"].shape[1]

    # ----- encode -----
    h = params["enc_emb"][encoder_inputs]
    h = h + positional_encoding(encoder_inputs.shape[1], D)[None]
    h = h.astype(jnp.bfloat16)
    enc_masks = get_masks(encoder_inputs)
    for bp in params["enc_blocks"]:
        h = encoder_block(bp, h, enc_masks, head_count)
    encoder_outputs = h

    # ----- decode -----
    h = params["dec_emb"][decoder_inputs]
    h = h + positional_encoding(decoder_inputs.shape[1], D)[None]
    h = h.astype(jnp.bfloat16)
    dec_masks = get_masks(decoder_inputs)
    for bp in params["dec_blocks"]:
        h = decoder_block(bp, h, encoder_outputs, dec_masks, enc_masks, head_count)

    B, Sd, _ = h.shape
    logits = linear(h.reshape(-1, D), params["out_w"], params["out_b"],
                    out_dtype=jnp.float32)
    return logits.reshape(B, Sd, params["out_w"].shape[1])


# ----------------------------------------------------------------------------
# Parameter init (PyTorch-default-style) and one-time kernel-ready preparation
# ----------------------------------------------------------------------------
def init_linear(key, fan_in, fan_out):
    k1, k2 = jax.random.split(key)
    bound = 1.0 / math.sqrt(fan_in)
    return (jax.random.uniform(k1, (fan_in, fan_out), jnp.float32, -bound, bound),
            jax.random.uniform(k2, (fan_out,), jnp.float32, -bound, bound))


def init_mha(key, model_dim):
    ks = jax.random.split(key, 4)
    wq, bq = init_linear(ks[0], model_dim, model_dim)
    wk, bk = init_linear(ks[1], model_dim, model_dim)
    wv, bv = init_linear(ks[2], model_dim, model_dim)
    wo, bo = init_linear(ks[3], model_dim, model_dim)
    return dict(wq=wq, bq=bq, wk=wk, bk=bk, wv=wv, bv=bv, wo=wo, bo=bo)


def init_ln(model_dim):
    return dict(g=jnp.ones((model_dim,), jnp.float32),
                b=jnp.zeros((model_dim,), jnp.float32))


def init_ff(key, model_dim, ff_dim):
    k1, k2 = jax.random.split(key)
    w1, b1 = init_linear(k1, model_dim, ff_dim)
    w2, b2 = init_linear(k2, ff_dim, model_dim)
    return dict(w1=w1, b1=b1, w2=w2, b2=b2)


def init_params(key, enc_vocab, dec_vocab, model_dim, ff_dim, n_enc, n_dec):
    keys = jax.random.split(key, 5 + n_enc + n_dec)
    enc_emb = jax.random.normal(keys[0], (enc_vocab, model_dim), jnp.float32)
    dec_emb = jax.random.normal(keys[1], (dec_vocab, model_dim), jnp.float32)

    enc_blocks = []
    for i in range(n_enc):
        k1, k2 = jax.random.split(keys[2 + i])
        enc_blocks.append(dict(attn=init_mha(k1, model_dim), ln1=init_ln(model_dim),
                               ff=init_ff(k2, model_dim, ff_dim), ln2=init_ln(model_dim)))

    dec_blocks = []
    for i in range(n_dec):
        k1, k2, k3 = jax.random.split(keys[2 + n_enc + i], 3)
        dec_blocks.append(dict(self_attn=init_mha(k1, model_dim), ln1=init_ln(model_dim),
                               cross_attn=init_mha(k2, model_dim), ln2=init_ln(model_dim),
                               ff=init_ff(k3, model_dim, ff_dim), ln3=init_ln(model_dim)))

    out_w, out_b = init_linear(keys[-1], model_dim, dec_vocab)
    return dict(enc_emb=enc_emb, dec_emb=dec_emb, enc_blocks=enc_blocks,
                dec_blocks=dec_blocks, out_w=out_w, out_b=out_b)


def prepare_params(p):
    """One-time weight prep: QKV / KV concatenation, FF collapse, bf16 casts."""
    def mha(q):
        return dict(
            w_qkv=jnp.concatenate([q["wq"], q["wk"], q["wv"]], axis=1).astype(jnp.bfloat16),
            b_qkv=jnp.concatenate([q["bq"], q["bk"], q["bv"]]).astype(jnp.float32),
            wq=q["wq"].astype(jnp.bfloat16), bq=q["bq"].astype(jnp.float32),
            w_kv=jnp.concatenate([q["wk"], q["wv"]], axis=1).astype(jnp.bfloat16),
            b_kv=jnp.concatenate([q["bk"], q["bv"]]).astype(jnp.float32),
            wo=q["wo"].astype(jnp.bfloat16), bo=q["bo"].astype(jnp.float32))

    def ff(q):
        # Reference has NO nonlinearity between hidden_layer and output_layer,
        # so the two linears collapse algebraically into one.
        w = jnp.dot(q["w1"], q["w2"])
        b = jnp.dot(q["b1"], q["w2"]) + q["b2"]
        return dict(w=w.astype(jnp.bfloat16), b=b.astype(jnp.float32))

    def ln(q):
        return dict(g=q["g"].astype(jnp.float32), b=q["b"].astype(jnp.float32))

    enc_blocks = [dict(attn=mha(bp["attn"]), ln1=ln(bp["ln1"]),
                       ff=ff(bp["ff"]), ln2=ln(bp["ln2"]))
                  for bp in p["enc_blocks"]]
    dec_blocks = [dict(self_attn=mha(bp["self_attn"]), ln1=ln(bp["ln1"]),
                       cross_attn=mha(bp["cross_attn"]), ln2=ln(bp["ln2"]),
                       ff=ff(bp["ff"]), ln3=ln(bp["ln3"]))
                  for bp in p["dec_blocks"]]
    return dict(enc_emb=p["enc_emb"], dec_emb=p["dec_emb"],
                enc_blocks=enc_blocks, dec_blocks=dec_blocks,
                out_w=p["out_w"].astype(jnp.bfloat16),
                out_b=p["out_b"].astype(jnp.float32))


# ----------------------------------------------------------------------------
if __name__ == "__main__":
    enc_vocab, dec_vocab = 16, 16
    model_dim, head_count, ff_dim = 32, 4, 64
    n_enc_blocks, n_dec_blocks = 2, 2
    B, Se, Sd = 2, 8, 8

    key = jax.random.PRNGKey(0)
    kp, ke, kd = jax.random.split(key, 3)

    params = init_params(kp, enc_vocab, dec_vocab, model_dim, ff_dim,
                         n_enc_blocks, n_dec_blocks)
    prepared = prepare_params(params)      # one-time, outside the jitted forward

    # token ids; pad index is 0 -> keep a couple of real pads on the encoder side
    encoder_inputs = jax.random.randint(ke, (B, Se), 1, enc_vocab, dtype=jnp.int32)
    encoder_inputs = encoder_inputs.at[:, -2:].set(0)
    decoder_inputs = jax.random.randint(kd, (B, Sd), 1, dec_vocab, dtype=jnp.int32)

    fwd = jax.jit(functools.partial(transformer_forward, head_count=head_count))
    out = jax.block_until_ready(fwd(prepared, encoder_inputs, decoder_inputs))

    assert out.shape == (B, Sd, dec_vocab), out.shape
    assert bool(jnp.all(jnp.isfinite(out)))
    print("KERNEL_OK")
</pallas_src>

<mosaic_0001>
module attributes {stable_mosaic.version = 11 : i64} {
  func.func @_linear_kernel(%arg0: i32, %arg1: i32, %arg2: i32, %arg3: memref<16x32xbf16, #tpu.memory_space<vmem>>, %arg4: memref<32x96xbf16, #tpu.memory_space<vmem>>, %arg5: memref<1x96xf32, #tpu.memory_space<vmem>>, %arg6: memref<16x96xbf16, #tpu.memory_space<vmem>>, %arg7: memref<16x96xf32, #tpu.memory_space<vmem>>) attributes {dimension_semantics = [#tpu.dimension_semantics<parallel>, #tpu.dimension_semantics<parallel>, #tpu.dimension_semantics<arbitrary>], iteration_bounds = array<i64: 1, 1, 1>, scalar_prefetch = 0 : i64, scratch_operands = 1 : i64, tpu.core_type = #tpu.core_type<tc>, window_params = [{transform_indices = @transform_0, window_bounds = array<i64: 16, 32>}, {transform_indices = @transform_1, window_bounds = array<i64: 32, 96>}, {transform_indices = @transform_2, window_bounds = array<i64: 1, 96>}, {transform_indices = @transform_3, window_bounds = array<i64: 16, 96>}]} {
    %c0_i32 = arith.constant 0 : i32
    %0 = arith.cmpi eq, %arg2, %c0_i32 : i32
    %1 = arith.extui %0 : i1 to i32
    %c0_i32_0 = arith.constant 0 : i32
    %2 = arith.cmpi ne, %1, %c0_i32_0 : i32
    scf.if %2 {
      %cst_10 = arith.constant 0.000000e+00 : f32
      %12 = vector.broadcast %cst_10 : f32 to vector<16x96xf32>
      %c0_11 = arith.constant 0 : index
      %c0_12 = arith.constant 0 : index
      %13 = vector.load %arg7[%c0_11, %c0_12] : memref<16x96xf32, #tpu.memory_space<vmem>>, vector<16x96xf32>
      tpu.vector_store %arg7[%c0_11, %c0_12], %12 {strides = array<i32>} : memref<16x96xf32, #tpu.memory_space<vmem>>, vector<16x96xf32>,
    } else {
    }
    %c0 = arith.constant 0 : index
    %c0_1 = arith.constant 0 : index
    %3 = vector.load %arg7[%c0, %c0_1] : memref<16x96xf32, #tpu.memory_space<vmem>>, vector<16x96xf32>
    %c0_2 = arith.constant 0 : index
    %c0_3 = arith.constant 0 : index
    %4 = vector.load %arg3[%c0_2, %c0_3] : memref<16x32xbf16, #tpu.memory_space<vmem>>, vector<16x32xbf16>
    %c0_4 = arith.constant 0 : index
    %c0_5 = arith.constant 0 : index
    %5 = vector.load %arg4[%c0_4, %c0_5] : memref<32x96xbf16, #tpu.memory_space<vmem>>, vector<32x96xbf16>
    %cst = arith.constant dense<0.000000e+00> : vector<16x96xf32>
    %6 = tpu.matmul %4, %5, %cst {dimension_numbers = #tpu.dot_dimension_numbers<[1], [0], [0], [1], [0, 0, 1, 1], [], []>} : vector<16x32xbf16>, vector<32x96xbf16>, vector<16x96xf32> -> vector<16x96xf32>
    %7 = arith.addf %3, %6 : vector<16x96xf32>
    %c0_6 = arith.constant 0 : index
    %c0_7 = arith.constant 0 : index
    %8 = vector.load %arg7[%c0_6, %c0_7] : memref<16x96xf32, #tpu.memory_space<vmem>>, vector<16x96xf32>
    tpu.vector_store %arg7[%c0_6, %c0_7], %7 {strides = array<i32>} : memref<16x96xf32, #tpu.memory_space<vmem>>, vector<16x96xf32>,
    %c0_i32_8 = arith.constant 0 : i32
    %9 = arith.cmpi eq, %arg2, %c0_i32_8 : i32
    %10 = arith.extui %9 : i1 to i32
    %c0_i32_9 = arith.constant 0 : i32
    %11 = arith.cmpi ne, %10, %c0_i32_9 : i32
    scf.if %11 {
      %c0_10 = arith.constant 0 : index
      %c0_11 = arith.constant 0 : index
      %12 = vector.load %arg7[%c0_10, %c0_11] : memref<16x96xf32, #tpu.memory_space<vmem>>, vector<16x96xf32>
      %c0_12 = arith.constant 0 : index
      %c0_13 = arith.constant 0 : index
      %13 = vector.load %arg5[%c0_12, %c0_13] : memref<1x96xf32, #tpu.memory_space<vmem>>, vector<1x96xf32>
      %14 = vector.broadcast %13 : vector<1x96xf32> to vector<16x96xf32>
      %15 = arith.addf %12, %14 : vector<16x96xf32>
      %16 = arith.truncf %15 : vector<16x96xf32> to vector<16x96xbf16>
      %c0_14 = arith.constant 0 : index
      %c0_15 = arith.constant 0 : index
      %17 = vector.load %arg6[%c0_14, %c0_15] : memref<16x96xbf16, #tpu.memory_space<vmem>>, vector<16x96xbf16>
      tpu.vector_store %arg6[%c0_14, %c0_15], %16 {strides = array<i32>} : memref<16x96xbf16, #tpu.memory_space<vmem>>, vector<16x96xbf16>,
    } else {
    }
    return
  }
  func.func @transform_0(%arg0: i32, %arg1: i32, %arg2: i32) -> (i32, i32) {
    %c0_i32 = arith.constant 0 : i32
    return %arg0, %arg2 : i32, i32
  }
  func.func @transform_1(%arg0: i32, %arg1: i32, %arg2: i32) -> (i32, i32) {
    %c0_i32 = arith.constant 0 : i32
    return %arg2, %arg1 : i32, i32
  }
  func.func @transform_2(%arg0: i32, %arg1: i32, %arg2: i32) -> (i32, i32) {
    %c0_i32 = arith.constant 0 : i32
    %c0_i32_0 = arith.constant 0 : i32
    return %c0_i32, %arg1 : i32, i32
  }
  func.func @transform_3(%arg0: i32, %arg1: i32, %arg2: i32) -> (i32, i32) {
    %c0_i32 = arith.constant 0 : i32
    return %arg0, %arg1 : i32, i32
  }
}

module attributes {stable_mosaic.version = 11 : i64} {
  func.func @_attn_kernel(%arg0: i32, %arg1: i32, %arg2: i32, %arg3: memref<1x8x32xbf16, #tpu.memory_space<vmem>>, %arg4: memref<1x8x32xbf16, #tpu.memory_space<vmem>>, %arg5: memref<1x8x32xbf16, #tpu.memory_space<vmem>>, %arg6: memref<1x1x8xf32, #tpu.memory_space<vmem>>, %arg7: memref<1x8x32xbf16, #tpu.memory_space<vmem>>, %arg8: memref<8x4xf32, #tpu.memory_space<vmem>>, %arg9: memref<8x4xf32, #tpu.memory_space<vmem>>, %arg10: memref<8x32xf32, #tpu.memory_space<vmem>>) attributes {dimension_semantics = [#tpu.dimension_semantics<parallel>, #tpu.dimension_semantics<parallel>, #tpu.dimension_semantics<arbitrary>], iteration_bounds = array<i64: 2, 1, 1>, scalar_prefetch = 0 : i64, scratch_operands = 3 : i64, tpu.core_type = #tpu.core_type<tc>, window_params = [{transform_indices = @transform_0, window_bounds = array<i64: 1, 8, 32>}, {transform_indices = @transform_1, window_bounds = array<i64: 1, 8, 32>}, {transform_indices = @transform_2, window_bounds = array<i64: 1, 8, 32>}, {transform_indices = @transform_3, window_bounds = array<i64: 1, 1, 8>}, {transform_indices = @transform_4, window_bounds = array<i64: 1, 8, 32>}]} {
    %c0_i32 = arith.constant 0 : i32
    %0 = arith.cmpi eq, %arg2, %c0_i32 : i32
    %1 = arith.extui %0 : i1 to i32
    %c0_i32_0 = arith.constant 0 : i32
    %2 = arith.cmpi ne, %1, %c0_i32_0 : i32
    scf.if %2 {
      %cst = arith.constant -1.000000e+30 : f32
      %12 = vector.broadcast %cst : f32 to vector<8x4xf32>
      %c0 = arith.constant 0 : index
      %c0_5 = arith.constant 0 : index
      %13 = vector.load %arg8[%c0, %c0_5] : memref<8x4xf32, #tpu.memory_space<vmem>>, vector<8x4xf32>
      tpu.vector_store %arg8[%c0, %c0_5], %12 {strides = array<i32>} : memref<8x4xf32, #tpu.memory_space<vmem>>, vector<8x4xf32>,
      %cst_6 = arith.constant 0.000000e+00 : f32
      %14 = vector.broadcast %cst_6 : f32 to vector<8x4xf32>
      %c0_7 = arith.constant 0 : index
      %c0_8 = arith.constant 0 : index
      %15 = vector.load %arg9[%c0_7, %c0_8] : memref<8x4xf32, #tpu.memory_space<vmem>>, vector<8x4xf32>
      tpu.vector_store %arg9[%c0_7, %c0_8], %14 {strides = array<i32>} : memref<8x4xf32, #tpu.memory_space<vmem>>, vector<8x4xf32>,
      %cst_9 = arith.constant 0.000000e+00 : f32
      %16 = vector.broadcast %cst_9 : f32 to vector<8x32xf32>
      %c0_10 = arith.constant 0 : index
      %c0_11 = arith.constant 0 : index
      %17 = vector.load %arg10[%c0_10, %c0_11] : memref<8x32xf32, #tpu.memory_space<vmem>>, vector<8x32xf32>
      tpu.vector_store %arg10[%c0_10, %c0_11], %16 {strides = array<i32>} : memref<8x32xf32, #tpu.memory_space<vmem>>, vector<8x32xf32>,
    } else {
    }
    %c8_i32 = arith.constant 8 : i32
    %3 = arith.muli %arg2, %c8_i32 : i32
    %c8_i32_1 = arith.constant 8 : i32
    %4 = arith.muli %arg1, %c8_i32_1 : i32
    %c7_i32 = arith.constant 7 : i32
    %5 = arith.addi %4, %c7_i32 : i32
    %6 = arith.cmpi sle, %3, %5 : i32
    %7 = arith.extui %6 : i1 to i32
    %c0_i32_2 = arith.constant 0 : i32
    %8 = arith.cmpi ne, %7, %c0_i32_2 : i32
    scf.if %8 {
      %c0 = arith.constant 0 : index
      %c0_5 = arith.constant 0 : index
      %c0_6 = arith.constant 0 : index
      %12 = vector.load %arg3[%c0, %c0_5, %c0_6] : memref<1x8x32xbf16, #tpu.memory_space<vmem>>, vector<1x8x32xbf16>
      %13 = vector.shape_cast %12 : vector<1x8x32xbf16> to vector<8x32xbf16>
      %c0_7 = arith.constant 0 : index
      %c0_8 = arith.constant 0 : index
      %c0_9 = arith.constant 0 : index
      %14 = vector.load %arg4[%c0_7, %c0_8, %c0_9] : memref<1x8x32xbf16, #tpu.memory_space<vmem>>, vector<1x8x32xbf16>
      %15 = vector.shape_cast %14 : vector<1x8x32xbf16> to vector<8x32xbf16>
      %c0_10 = arith.constant 0 : index
      %c0_11 = arith.constant 0 : index
      %c0_12 = arith.constant 0 : index
      %16 = vector.load %arg5[%c0_10, %c0_11, %c0_12] : memref<1x8x32xbf16, #tpu.memory_space<vmem>>, vector<1x8x32xbf16>
      %17 = vector.shape_cast %16 : vector<1x8x32xbf16> to vector<8x32xbf16>
      %c0_13 = arith.constant 0 : index
      %c0_14 = arith.constant 0 : index
      %c0_15 = arith.constant 0 : index
      %18 = vector.load %arg6[%c0_13, %c0_14, %c0_15] : memref<1x1x8xf32, #tpu.memory_space<vmem>>, vector<1x1x8xf32>
      %19 = vector.shape_cast %18 : vector<1x1x8xf32> to vector<1x8xf32>
      %cst = arith.constant 5.000000e-01 : f32
      %20 = vector.broadcast %cst : f32 to vector<1x8xf32>
      %21 = arith.cmpf ogt, %19, %20 : vector<1x8xf32>
      %22 = tpu.iota {dimensions = array<i32: 0>} : vector<8x8xi32>
      %c8_i32_16 = arith.constant 8 : i32
      %23 = arith.muli %arg1, %c8_i32_16 : i32
      %24 = vector.broadcast %23 : i32 to vector<8x8xi32>
      %25 = arith.addi %22, %24 : vector<8x8xi32>
      %26 = tpu.iota {dimensions = array<i32: 1>} : vector<8x8xi32>
      %c8_i32_17 = arith.constant 8 : i32
      %27 = arith.muli %arg2, %c8_i32_17 : i32
      %28 = vector.broadcast %27 : i32 to vector<8x8xi32>
      %29 = arith.addi %26, %28 : vector<8x8xi32>
      %30 = arith.cmpi sgt, %29, %25 : vector<8x8xi32>
      %31 = vector.broadcast %21 : vector<1x8xi1> to vector<8x8xi1>
      %32 = arith.ori %31, %30 : vector<8x8xi1>
      %33 = vector.extract_strided_slice %13 {offsets = [0, 0], sizes = [8, 8], strides = [1, 1]} : vector<8x32xbf16> to vector<8x8xbf16>
      %34 = vector.extract_strided_slice %15 {offsets = [0, 0], sizes = [8, 8], strides = [1, 1]} : vector<8x32xbf16> to vector<8x8xbf16>
      %cst_18 = arith.constant dense<0.000000e+00> : vector<8x8xf32>
      %35 = tpu.matmul %33, %34, %cst_18 {dimension_numbers = #tpu.dot_dimension_numbers<[1], [1], [0], [0], [0, 0, 1, 0], [], []>} : vector<8x8xbf16>, vector<8x8xbf16>, vector<8x8xf32> -> vector<8x8xf32>
      %cst_19 = arith.constant 0.353553385 : f32
      %36 = vector.broadcast %cst_19 : f32 to vector<8x8xf32>
      %37 = arith.mulf %35, %36 : vector<8x8xf32>
      %cst_20 = arith.constant -1.000000e+09 : f32
      %38 = vector.broadcast %cst_20 : f32 to vector<8x8xf32>
      %39 = arith.select %32, %38, %37 : vector<8x8xi1>, vector<8x8xf32>
      %c0_21 = arith.constant 0 : index
      %c0_22 = arith.constant 0 : index
      %40 = vector.load %arg8[%c0_21, %c0_22] : memref<8x4xf32, #tpu.memory_space<vmem>>, vector<8x1xf32>
      %cst_23 = arith.constant dense<0xFF800000> : vector<8xf32>
      %41 = vector.multi_reduction <maximumf>, %39, %cst_23 [1] : vector<8x8xf32> to vector<8xf32>
      %42 = vector.shape_cast %41 : vector<8xf32> to vector<8x1xf32>
      %43 = arith.maximumf %40, %42 : vector<8x1xf32>
      %44 = arith.subf %40, %43 : vector<8x1xf32>
      %45 = math.exp %44 : vector<8x1xf32>
      %46 = vector.broadcast %43 : vector<8x1xf32> to vector<8x8xf32>
      %47 = arith.subf %39, %46 : vector<8x8xf32>
      %48 = math.exp %47 : vector<8x8xf32>
      %c0_24 = arith.constant 0 : index
      %c0_25 = arith.constant 0 : index
      %49 = vector.load %arg9[%c0_24, %c0_25] : memref<8x4xf32, #tpu.memory_space<vmem>>, vector<8x1xf32>
      %50 = arith.mulf %45, %49 : vector<8x1xf32>
      %cst_26 = arith.constant dense<0.000000e+00> : vector<8xf32>
      %51 = vector.multi_reduction <add>, %48, %cst_26 [1] : vector<8x8xf32> to vector<8xf32>
      %52 = vector.shape_cast %51 : vector<8xf32> to vector<8x1xf32>
      %53 = arith.addf %50, %52 : vector<8x1xf32>
      %c0_27 = arith.constant 0 : index
      %c0_28 = arith.constant 0 : index
      %54 = vector.load %arg9[%c0_27, %c0_28] : memref<8x4xf32, #tpu.memory_space<vmem>>, vector<8x1xf32>
      tpu.vector_store %arg9[%c0_27, %c0_28], %53 {strides = array<i32>} : memref<8x4xf32, #tpu.memory_space<vmem>>, vector<8x1xf32>,
      %c0_29 = arith.constant 0 : index
      %c0_30 = arith.constant 0 : index
      %55 = vector.load %arg10[%c0_29, %c0_30] : memref<8x32xf32, #tpu.memory_space<vmem>>, vector<8x8xf32>
      %56 = vector.broadcast %45 : vector<8x1xf32> to vector<8x8xf32>
      %57 = arith.mulf %56, %55 : vector<8x8xf32>
      %58 = arith.truncf %48 : vector<8x8xf32> to vector<8x8xbf16>
      %59 = vector.extract_strided_slice %17 {offsets = [0, 0], sizes = [8, 8], strides = [1, 1]} : vector<8x32xbf16> to vector<8x8xbf16>
      %cst_31 = arith.constant dense<0.000000e+00> : vector<8x8xf32>
      %60 = tpu.matmul %58, %59, %cst_31 {dimension_numbers = #tpu.dot_dimension_numbers<[1], [0], [0], [1], [0, 0, 1, 1], [], []>} : vector<8x8xbf16>, vector<8x8xbf16>, vector<8x8xf32> -> vector<8x8xf32>
      %61 = arith.addf %57, %60 : vector<8x8xf32>
      %c0_32 = arith.constant 0 : index
      %c0_33 = arith.constant 0 : index
      %62 = vector.load %arg10[%c0_32, %c0_33] : memref<8x32xf32, #tpu.memory_space<vmem>>, vector<8x8xf32>
      tpu.vector_store %arg10[%c0_32, %c0_33], %61 {strides = array<i32>} : memref<8x32xf32, #tpu.memory_space<vmem>>, vector<8x8xf32>,
      %c0_34 = arith.constant 0 : index
      %c0_35 = arith.constant 0 : index
      %63 = vector.load %arg8[%c0_34, %c0_35] : memref<8x4xf32, #tpu.memory_space<vmem>>, vector<8x1xf32>
      tpu.vector_store %arg8[%c0_34, %c0_35], %43 {strides = array<i32>} : memref<8x4xf32, #tpu.memory_space<vmem>>, vector<8x1xf32>,
      %64 = vector.extract_strided_slice %13 {offsets = [0, 8], sizes = [8, 8], strides = [1, 1]} : vector<8x32xbf16> to vector<8x8xbf16>
      %65 = vector.extract_strided_slice %15 {offsets = [0, 8], sizes = [8, 8], strides = [1, 1]} : vector<8x32xbf16> to vector<8x8xbf16>
      %cst_36 = arith.constant dense<0.000000e+00> : vector<8x8xf32>
      %66 = tpu.matmul %64, %65, %cst_36 {dimension_numbers = #tpu.dot_dimension_numbers<[1], [1], [0], [0], [0, 0, 1, 0], [], []>} : vector<8x8xbf16>, vector<8x8xbf16>, vector<8x8xf32> -> vector<8x8xf32>
      %cst_37 = arith.constant 0.353553385 : f32
      %67 = vector.broadcast %cst_37 : f32 to vector<8x8xf32>
      %68 = arith.mulf %66, %67 : vector<8x8xf32>
      %cst_38 = arith.constant -1.000000e+09 : f32
      %69 = vector.broadcast %cst_38 : f32 to vector<8x8xf32>
      %70 = arith.select %32, %69, %68 : vector<8x8xi1>, vector<8x8xf32>
      %c0_39 = arith.constant 0 : index
      %c1 = arith.constant 1 : index
      %71 = vector.load %arg8[%c0_39, %c1] : memref<8x4xf32, #tpu.memory_space<vmem>>, vector<8x1xf32>
      %cst_40 = arith.constant dense<0xFF800000> : vector<8xf32>
      %72 = vector.multi_reduction <maximumf>, %70, %cst_40 [1] : vector<8x8xf32> to vector<8xf32>
      %73 = vector.shape_cast %72 : vector<8xf32> to vector<8x1xf32>
      %74 = arith.maximumf %71, %73 : vector<8x1xf32>
      %75 = arith.subf %71, %74 : vector<8x1xf32>
      %76 = math.exp %75 : vector<8x1xf32>
      %77 = vector.broadcast %74 : vector<8x1xf32> to vector<8x8xf32>
      %78 = arith.subf %70, %77 : vector<8x8xf32>
      %79 = math.exp %78 : vector<8x8xf32>
      %c0_41 = arith.constant 0 : index
      %c1_42 = arith.constant 1 : index
      %80 = vector.load %arg9[%c0_41, %c1_42] : memref<8x4xf32, #tpu.memory_space<vmem>>, vector<8x1xf32>
      %81 = arith.mulf %76, %80 : vector<8x1xf32>
      %cst_43 = arith.constant dense<0.000000e+00> : vector<8xf32>
      %82 = vector.multi_reduction <add>, %79, %cst_43 [1] : vector<8x8xf32> to vector<8xf32>
      %83 = vector.shape_cast %82 : vector<8xf32> to vector<8x1xf32>
      %84 = arith.addf %81, %83 : vector<8x1xf32>
      %c0_44 = arith.constant 0 : index
      %c1_45 = arith.constant 1 : index
      %85 = vector.load %arg9[%c0_44, %c1_45] : memref<8x4xf32, #tpu.memory_space<vmem>>, vector<8x1xf32>
      tpu.vector_store %arg9[%c0_44, %c1_45], %84 {strides = array<i32>} : memref<8x4xf32, #tpu.memory_space<vmem>>, vector<8x1xf32>,
      %c0_46 = arith.constant 0 : index
      %c8 = arith.constant 8 : index
      %86 = vector.load %arg10[%c0_46, %c8] : memref<8x32xf32, #tpu.memory_space<vmem>>, vector<8x8xf32>
      %87 = vector.broadcast %76 : vector<8x1xf32> to vector<8x8xf32>
      %88 = arith.mulf %87, %86 : vector<8x8xf32>
      %89 = arith.truncf %79 : vector<8x8xf32> to vector<8x8xbf16>
      %90 = vector.extract_strided_slice %17 {offsets = [0, 8], sizes = [8, 8], strides = [1, 1]} : vector<8x32xbf16> to vector<8x8xbf16>
      %cst_47 = arith.constant dense<0.000000e+00> : vector<8x8xf32>
      %91 = tpu.matmul %89, %90, %cst_47 {dimension_numbers = #tpu.dot_dimension_numbers<[1], [0], [0], [1], [0, 0, 1, 1], [], []>} : vector<8x8xbf16>, vector<8x8xbf16>, vector<8x8xf32> -> vector<8x8xf32>
      %92 = arith.addf %88, %91 : vector<8x8xf32>
      %c0_48 = arith.constant 0 : index
      %c8_49 = arith.constant 8 : index
      %93 = vector.load %arg10[%c0_48, %c8_49] : memref<8x32xf32, #tpu.memory_space<vmem>>, vector<8x8xf32>
      tpu.vector_store %arg10[%c0_48, %c8_49], %92 {strides = array<i32>} : memref<8x32xf32, #tpu.memory_space<vmem>>, vector<8x8xf32>,
      %c0_50 = arith.constant 0 : index
      %c1_51 = arith.constant 1 : index
      %94 = vector.load %arg8[%c0_50, %c1_51] : memref<8x4xf32, #tpu.memory_space<vmem>>, vector<8x1xf32>
      tpu.vector_store %arg8[%c0_50, %c1_51], %74 {strides = array<i32>} : memref<8x4xf32, #tpu.memory_space<vmem>>, vector<8x1xf32>,
      %95 = vector.extract_strided_slice %13 {offsets = [0, 16], sizes = [8, 8], strides = [1, 1]} : vector<8x32xbf16> to vector<8x8xbf16>
      %96 = vector.extract_strided_slice %15 {offsets = [0, 16], sizes = [8, 8], strides = [1, 1]} : vector<8x32xbf16> to vector<8x8xbf16>
      %cst_52 = arith.constant dense<0.000000e+00> : vector<8x8xf32>
      %97 = tpu.matmul %95, %96, %cst_52 {dimension_numbers = #tpu.dot_dimension_numbers<[1], [1], [0], [0], [0, 0, 1, 0], [], []>} : vector<8x8xbf16>, vector<8x8xbf16>, vector<8x8xf32> -> vector<8x8xf32>
      %cst_53 = arith.constant 0.353553385 : f32
      %98 = vector.broadcast %cst_53 : f32 to vector<8x8xf32>
      %99 = arith.mulf %97, %98 : vector<8x8xf32>
      %cst_54 = arith.constant -1.000000e+09 : f32
      %100 = vector.broadcast %cst_54 : f32 to vector<8x8xf32>
      %101 = arith.select %32, %100, %99 : vector<8x8xi1>, vector<8x8xf32>
      %c0_55 = arith.constant 0 : index
      %c2 = arith.constant 2 : index
      %102 = vector.load %arg8[%c0_55, %c2] : memref<8x4xf32, #tpu.memory_space<vmem>>, vector<8x1xf32>
      %cst_56 = arith.constant dense<0xFF800000> : vector<8xf32>
      %103 = vector.multi_reduction <maximumf>, %101, %cst_56 [1] : vector<8x8xf32> to vector<8xf32>
      %104 = vector.shape_cast %103 : vector<8xf32> to vector<8x1xf32>
      %105 = arith.maximumf %102, %104 : vector<8x1xf32>
      %106 = arith.subf %102, %105 : vector<8x1xf32>
      %107 = math.exp %106 : vector<8x1xf32>
      %108 = vector.broadcast %105 : vector<8x1xf32> to vector<8x8xf32>
      %109 = arith.subf %101, %108 : vector<8x8xf32>
      %110 = math.exp %109 : vector<8x8xf32>
      %c0_57 = arith.constant 0 : index
      %c2_58 = arith.constant 2 : index
      %111 = vector.load %arg9[%c0_57, %c2_58] : memref<8x4xf32, #tpu.memory_space<vmem>>, vector<8x1xf32>
      %112 = arith.mulf %107, %111 : vector<8x1xf32>
      %cst_59 = arith.constant dense<0.000000e+00> : vector<8xf32>
      %113 = vector.multi_reduction <add>, %110, %cst_59 [1] : vector<8x8xf32> to vector<8xf32>
      %114 = vector.shape_cast %113 : vector<8xf32> to vector<8x1xf32>
      %115 = arith.addf %112, %114 : vector<8x1xf32>
      %c0_60 = arith.constant 0 : index
      %c2_61 = arith.constant 2 : index
      %116 = vector.load %arg9[%c0_60, %c2_61] : memref<8x4xf32, #tpu.memory_space<vmem>>, vector<8x1xf32>
      tpu.vector_store %arg9[%c0_60, %c2_61], %115 {strides = array<i32>} : memref<8x4xf32, #tpu.memory_space<vmem>>, vector<8x1xf32>,
      %c0_62 = arith.constant 0 : index
      %c16 = arith.constant 16 : index
      %117 = vector.load %arg10[%c0_62, %c16] : memref<8x32xf32, #tpu.memory_space<vmem>>, vector<8x8xf32>
      %118 = vector.broadcast %107 : vector<8x1xf32> to vector<8x8xf32>
      %119 = arith.mulf %118, %117 : vector<8x8xf32>
      %120 = arith.truncf %110 : vector<8x8xf32> to vector<8x8xbf16>
      %121 = vector.extract_strided_slice %17 {offsets = [0, 16], sizes = [8, 8], strides = [1, 1]} : vector<8x32xbf16> to vector<8x8xbf16>
      %cst_63 = arith.constant dense<0.000000e+00> : vector<8x8xf32>
      %122 = tpu.matmul %120, %121, %cst_63 {dimension_numbers = #tpu.dot_dimension_numbers<[1], [0], [0], [1], [0, 0, 1, 1], [], []>} : vector<8x8xbf16>, vector<8x8xbf16>, vector<8x8xf32> -> vector<8x8xf32>
      %123 = arith.addf %119, %122 : vector<8x8xf32>
      %c0_64 = arith.constant 0 : index
      %c16_65 = arith.constant 16 : index
      %124 = vector.load %arg10[%c0_64, %c16_65] : memref<8x32xf32, #tpu.memory_space<vmem>>, vector<8x8xf32>
      tpu.vector_store %arg10[%c0_64, %c16_65], %123 {strides = array<i32>} : memref<8x32xf32, #tpu.memory_space<vmem>>, vector<8x8xf32>,
      %c0_66 = arith.constant 0 : index
      %c2_67 = arith.constant 2 : index
      %125 = vector.load %arg8[%c0_66, %c2_67] : memref<8x4xf32, #tpu.memory_space<vmem>>, vector<8x1xf32>
      tpu.vector_store %arg8[%c0_66, %c2_67], %105 {strides = array<i32>} : memref<8x4xf32, #tpu.memory_space<vmem>>, vector<8x1xf32>,
      %126 = vector.extract_strided_slice %13 {offsets = [0, 24], sizes = [8, 8], strides = [1, 1]} : vector<8x32xbf16> to vector<8x8xbf16>
      %127 = vector.extract_strided_slice %15 {offsets = [0, 24], sizes = [8, 8], strides = [1, 1]} : vector<8x32xbf16> to vector<8x8xbf16>
      %cst_68 = arith.constant dense<0.000000e+00> : vector<8x8xf32>
      %128 = tpu.matmul %126, %127, %cst_68 {dimension_numbers = #tpu.dot_dimension_numbers<[1], [1], [0], [0], [0, 0, 1, 0], [], []>} : vector<8x8xbf16>, vector<8x8xbf16>, vector<8x8xf32> -> vector<8x8xf32>
      %cst_69 = arith.constant 0.353553385 : f32
      %129 = vector.broadcast %cst_69 : f32 to vector<8x8xf32>
      %130 = arith.mulf %128, %129 : vector<8x8xf32>
      %cst_70 = arith.constant -1.000000e+09 : f32
      %131 = vector.broadcast %cst_70 : f32 to vector<8x8xf32>
      %132 = arith.select %32, %131, %130 : vector<8x8xi1>, vector<8x8xf32>
      %c0_71 = arith.constant 0 : index
      %c3 = arith.constant 3 : index
      %133 = vector.load %arg8[%c0_71, %c3] : memref<8x4xf32, #tpu.memory_space<vmem>>, vector<8x1xf32>
      %cst_72 = arith.constant dense<0xFF800000> : vector<8xf32>
      %134 = vector.multi_reduction <maximumf>, %132, %cst_72 [1] : vector<8x8xf32> to vector<8xf32>
      %135 = vector.shape_cast %134 : vector<8xf32> to vector<8x1xf32>
      %136 = arith.maximumf %133, %135 : vector<8x1xf32>
      %137 = arith.subf %133, %136 : vector<8x1xf32>
      %138 = math.exp %137 : vector<8x1xf32>
      %139 = vector.broadcast %136 : vector<8x1xf32> to vector<8x8xf32>
      %140 = arith.subf %132, %139 : vector<8x8xf32>
      %141 = math.exp %140 : vector<8x8xf32>
      %c0_73 = arith.constant 0 : index
      %c3_74 = arith.constant 3 : index
      %142 = vector.load %arg9[%c0_73, %c3_74] : memref<8x4xf32, #tpu.memory_space<vmem>>, vector<8x1xf32>
      %143 = arith.mulf %138, %142 : vector<8x1xf32>
      %cst_75 = arith.constant dense<0.000000e+00> : vector<8xf32>
      %144 = vector.multi_reduction <add>, %141, %cst_75 [1] : vector<8x8xf32> to vector<8xf32>
      %145 = vector.shape_cast %144 : vector<8xf32> to vector<8x1xf32>
      %146 = arith.addf %143, %145 : vector<8x1xf32>
      %c0_76 = arith.constant 0 : index
      %c3_77 = arith.constant 3 : index
      %147 = vector.load %arg9[%c0_76, %c3_77] : memref<8x4xf32, #tpu.memory_space<vmem>>, vector<8x1xf32>
      tpu.vector_store %arg9[%c0_76, %c3_77], %146 {strides = array<i32>} : memref<8x4xf32, #tpu.memory_space<vmem>>, vector<8x1xf32>,
      %c0_78 = arith.constant 0 : index
      %c24 = arith.constant 24 : index
      %148 = vector.load %arg10[%c0_78, %c24] : memref<8x32xf32, #tpu.memory_space<vmem>>, vector<8x8xf32>
      %149 = vector.broadcast %138 : vector<8x1xf32> to vector<8x8xf32>
      %150 = arith.mulf %149, %148 : vector<8x8xf32>
      %151 = arith.truncf %141 : vector<8x8xf32> to vector<8x8xbf16>
      %152 = vector.extract_strided_slice %17 {offsets = [0, 24], sizes = [8, 8], strides = [1, 1]} : vector<8x32xbf16> to vector<8x8xbf16>
      %cst_79 = arith.constant dense<0.000000e+00> : vector<8x8xf32>
      %153 = tpu.matmul %151, %152, %cst_79 {dimension_numbers = #tpu.dot_dimension_numbers<[1], [0], [0], [1], [0, 0, 1, 1], [], []>} : vector<8x8xbf16>, vector<8x8xbf16>, vector<8x8xf32> -> vector<8x8xf32>
      %154 = arith.addf %150, %153 : vector<8x8xf32>
      %c0_80 = arith.constant 0 : index
      %c24_81 = arith.constant 24 : index
      %155 = vector.load %arg10[%c0_80, %c24_81] : memref<8x32xf32, #tpu.memory_space<vmem>>, vector<8x8xf32>
      tpu.vector_store %arg10[%c0_80, %c24_81], %154 {strides = array<i32>} : memref<8x32xf32, #tpu.memory_space<vmem>>, vector<8x8xf32>,
      %c0_82 = arith.constant 0 : index
      %c3_83 = arith.constant 3 : index
      %156 = vector.load %arg8[%c0_82, %c3_83] : memref<8x4xf32, #tpu.memory_space<vmem>>, vector<8x1xf32>
      tpu.vector_store %arg8[%c0_82, %c3_83], %136 {strides = array<i32>} : memref<8x4xf32, #tpu.memory_space<vmem>>, vector<8x1xf32>,
    } else {
    }
    %c0_i32_3 = arith.constant 0 : i32
    %9 = arith.cmpi eq, %arg2, %c0_i32_3 : i32
    %10 = arith.extui %9 : i1 to i32
    %c0_i32_4 = arith.constant 0 : i32
    %11 = arith.cmpi ne, %10, %c0_i32_4 : i32
    scf.if %11 {
      %c0 = arith.constant 0 : index
      %c0_5 = arith.constant 0 : index
      %12 = vector.load %arg9[%c0, %c0_5] : memref<8x4xf32, #tpu.memory_space<vmem>>, vector<8x4xf32>
      %13 = tpu.reciprocal %12 {approx = true} : vector<8x4xf32> -> vector<8x4xf32>
      %c0_6 = arith.constant 0 : index
      %c0_7 = arith.constant 0 : index
      %14 = vector.load %arg10[%c0_6, %c0_7] : memref<8x32xf32, #tpu.memory_space<vmem>>, vector<8x8xf32>
      %15 = vector.extract_strided_slice %13 {offsets = [0, 0], sizes = [8, 1], strides = [1, 1]} : vector<8x4xf32> to vector<8x1xf32>
      %16 = vector.broadcast %15 : vector<8x1xf32> to vector<8x8xf32>
      %17 = arith.mulf %14, %16 : vector<8x8xf32>
      %18 = arith.truncf %17 : vector<8x8xf32> to vector<8x8xbf16>
      %c0_8 = arith.constant 0 : index
      %c0_9 = arith.constant 0 : index
      %c0_10 = arith.constant 0 : index
      %19 = vector.load %arg7[%c0_8, %c0_9, %c0_10] : memref<1x8x32xbf16, #tpu.memory_space<vmem>>, vector<1x8x8xbf16>
      %20 = vector.shape_cast %19 : vector<1x8x8xbf16> to vector<8x8xbf16>
      %21 = vector.shape_cast %18 : vector<8x8xbf16> to vector<1x8x8xbf16>
      tpu.vector_store %arg7[%c0_8, %c0_9, %c0_10], %21 {strides = array<i32>} : memref<1x8x32xbf16, #tpu.memory_space<vmem>>, vector<1x8x8xbf16>,
      %c0_11 = arith.constant 0 : index
      %c8 = arith.constant 8 : index
      %22 = vector.load %arg10[%c0_11, %c8] : memref<8x32xf32, #tpu.memory_space<vmem>>, vector<8x8xf32>
      %23 = vector.extract_strided_slice %13 {offsets = [0, 1], sizes = [8, 1], strides = [1, 1]} : vector<8x4xf32> to vector<8x1xf32>
      %24 = vector.broadcast %23 : vector<8x1xf32> to vector<8x8xf32>
      %25 = arith.mulf %22, %24 : vector<8x8xf32>
      %26 = arith.truncf %25 : vector<8x8xf32> to vector<8x8xbf16>
      %c0_12 = arith.constant 0 : index
      %c0_13 = arith.constant 0 : index
      %c8_14 = arith.constant 8 : index
      %27 = vector.load %arg7[%c0_12, %c0_13, %c8_14] : memref<1x8x32xbf16, #tpu.memory_space<vmem>>, vector<1x8x8xbf16>
      %28 = vector.shape_cast %27 : vector<1x8x8xbf16> to vector<8x8xbf16>
      %29 = vector.shape_cast %26 : vector<8x8xbf16> to vector<1x8x8xbf16>
      tpu.vector_store %arg7[%c0_12, %c0_13, %c8_14], %29 {strides = array<i32>} : memref<1x8x32xbf16, #tpu.memory_space<vmem>>, vector<1x8x8xbf16>,
      %c0_15 = arith.constant 0 : index
      %c16 = arith.constant 16 : index
      %30 = vector.load %arg10[%c0_15, %c16] : memref<8x32xf32, #tpu.memory_space<vmem>>, vector<8x8xf32>
      %31 = vector.extract_strided_slice %13 {offsets = [0, 2], sizes = [8, 1], strides = [1, 1]} : vector<8x4xf32> to vector<8x1xf32>
      %32 = vector.broadcast %31 : vector<8x1xf32> to vector<8x8xf32>
      %33 = arith.mulf %30, %32 : vector<8x8xf32>
      %34 = arith.truncf %33 : vector<8x8xf32> to vector<8x8xbf16>
      %c0_16 = arith.constant 0 : index
      %c0_17 = arith.constant 0 : index
      %c16_18 = arith.constant 16 : index
      %35 = vector.load %arg7[%c0_16, %c0_17, %c16_18] : memref<1x8x32xbf16, #tpu.memory_space<vmem>>, vector<1x8x8xbf16>
      %36 = vector.shape_cast %35 : vector<1x8x8xbf16> to vector<8x8xbf16>
      %37 = vector.shape_cast %34 : vector<8x8xbf16> to vector<1x8x8xbf16>
      tpu.vector_store %arg7[%c0_16, %c0_17, %c16_18], %37 {strides = array<i32>} : memref<1x8x32xbf16, #tpu.memory_space<vmem>>, vector<1x8x8xbf16>,
      %c0_19 = arith.constant 0 : index
      %c24 = arith.constant 24 : index
      %38 = vector.load %arg10[%c0_19, %c24] : memref<8x32xf32, #tpu.memory_space<vmem>>, vector<8x8xf32>
      %39 = vector.extract_strided_slice %13 {offsets = [0, 3], sizes = [8, 1], strides = [1, 1]} : vector<8x4xf32> to vector<8x1xf32>
      %40 = vector.broadcast %39 : vector<8x1xf32> to vector<8x8xf32>
      %41 = arith.mulf %38, %40 : vector<8x8xf32>
      %42 = arith.truncf %41 : vector<8x8xf32> to vector<8x8xbf16>
      %c0_20 = arith.constant 0 : index
      %c0_21 = arith.constant 0 : index
      %c24_22 = arith.constant 24 : index
      %43 = vector.load %arg7[%c0_20, %c0_21, %c24_22] : memref<1x8x32xbf16, #tpu.memory_space<vmem>>, vector<1x8x8xbf16>
      %44 = vector.shape_cast %43 : vector<1x8x8xbf16> to vector<8x8xbf16>
      %45 = vector.shape_cast %42 : vector<8x8xbf16> to vector<1x8x8xbf16>
      tpu.vector_store %arg7[%c0_20, %c0_21, %c24_22], %45 {strides = array<i32>} : memref<1x8x32xbf16, #tpu.memory_space<vmem>>, vector<1x8x8xbf16>,
    } else {
    }
    return
  }
  func.func @transform_0(%arg0: i32, %arg1: i32, %arg2: i32) -> (i32, i32, i32) {
    %c0_i32 = arith.constant 0 : i32
    %c0_i32_0 = arith.constant 0 : i32
    return %arg0, %arg1, %c0_i32 : i32, i32, i32
  }
  func.func @transform_1(%arg0: i32, %arg1: i32, %arg2: i32) -> (i32, i32, i32) {
    %c0_i32 = arith.constant 0 : i32
    %c0_i32_0 = arith.constant 0 : i32
    return %arg0, %arg2, %c0_i32 : i32, i32, i32
  }
  func.func @transform_2(%arg0: i32, %arg1: i32, %arg2: i32) -> (i32, i32, i32) {
    %c0_i32 = arith.constant 0 : i32
    %c0_i32_0 = arith.constant 0 : i32
    return %arg0, %arg2, %c0_i32 : i32, i32, i32
  }
  func.func @transform_3(%arg0: i32, %arg1: i32, %arg2: i32) -> (i32, i32, i32) {
    %c0_i32 = arith.constant 0 : i32
    %c0_i32_0 = arith.constant 0 : i32
    return %arg0, %c0_i32, %arg2 : i32, i32, i32
  }
  func.func @transform_4(%arg0: i32, %arg1: i32, %arg2: i32) -> (i32, i32, i32) {
    %c0_i32 = arith.constant 0 : i32
    %c0_i32_0 = arith.constant 0 : i32
    return %arg0, %arg1, %c0_i32 : i32, i32, i32
  }
}

module attributes {stable_mosaic.version = 11 : i64} {
  func.func @_linear_ln_kernel(%arg0: i32, %arg1: i32, %arg2: memref<16x32xbf16, #tpu.memory_space<vmem>>, %arg3: memref<32x32xbf16, #tpu.memory_space<vmem>>, %arg4: memref<1x32xf32, #tpu.memory_space<vmem>>, %arg5: memref<16x32xbf16, #tpu.memory_space<vmem>>, %arg6: memref<1x32xf32, #tpu.memory_space<vmem>>, %arg7: memref<1x32xf32, #tpu.memory_space<vmem>>, %arg8: memref<16x32xbf16, #tpu.memory_space<vmem>>, %arg9: memref<16x32xf32, #tpu.memory_space<vmem>>) attributes {dimension_semantics = [#tpu.dimension_semantics<parallel>, #tpu.dimension_semantics<arbitrary>], iteration_bounds = array<i64: 1, 1>, scalar_prefetch = 0 : i64, scratch_operands = 1 : i64, tpu.core_type = #tpu.core_type<tc>, window_params = [{transform_indices = @transform_0, window_bounds = array<i64: 16, 32>}, {transform_indices = @transform_1, window_bounds = array<i64: 32, 32>}, {pipeline_mode = #tpu.pipeline_mode<synchronous>, transform_indices = @transform_2, window_bounds = array<i64: 1, 32>}, {transform_indices = @transform_3, window_bounds = array<i64: 16, 32>}, {pipeline_mode = #tpu.pipeline_mode<synchronous>, transform_indices = @transform_4, window_bounds = array<i64: 1, 32>}, {pipeline_mode = #tpu.pipeline_mode<synchronous>, transform_indices = @transform_5, window_bounds = array<i64: 1, 32>}, {transform_indices = @transform_6, window_bounds = array<i64: 16, 32>}]} {
    %c0_i32 = arith.constant 0 : i32
    %0 = arith.cmpi eq, %arg1, %c0_i32 : i32
    %1 = arith.extui %0 : i1 to i32
    %c0_i32_0 = arith.constant 0 : i32
    %2 = arith.cmpi ne, %1, %c0_i32_0 : i32
    scf.if %2 {
      %cst_10 = arith.constant 0.000000e+00 : f32
      %12 = vector.broadcast %cst_10 : f32 to vector<16x32xf32>
      %c0_11 = arith.constant 0 : index
      %c0_12 = arith.constant 0 : index
      %13 = vector.load %arg9[%c0_11, %c0_12] : memref<16x32xf32, #tpu.memory_space<vmem>>, vector<16x32xf32>
      tpu.vector_store %arg9[%c0_11, %c0_12], %12 {strides = array<i32>} : memref<16x32xf32, #tpu.memory_space<vmem>>, vector<16x32xf32>,
    } else {
    }
    %c0 = arith.constant 0 : index
    %c0_1 = arith.constant 0 : index
    %3 = vector.load %arg9[%c0, %c0_1] : memref<16x32xf32, #tpu.memory_space<vmem>>, vector<16x32xf32>
    %c0_2 = arith.constant 0 : index
    %c0_3 = arith.constant 0 : index
    %4 = vector.load %arg2[%c0_2, %c0_3] : memref<16x32xbf16, #tpu.memory_space<vmem>>, vector<16x32xbf16>
    %c0_4 = arith.constant 0 : index
    %c0_5 = arith.constant 0 : index
    %5 = vector.load %arg3[%c0_4, %c0_5] : memref<32x32xbf16, #tpu.memory_space<vmem>>, vector<32x32xbf16>
    %cst = arith.constant dense<0.000000e+00> : vector<16x32xf32>
    %6 = tpu.matmul %4, %5, %cst {dimension_numbers = #tpu.dot_dimension_numbers<[1], [0], [0], [1], [0, 0, 1, 1], [], []>} : vector<16x32xbf16>, vector<32x32xbf16>, vector<16x32xf32> -> vector<16x32xf32>
    %7 = arith.addf %3, %6 : vector<16x32xf32>
    %c0_6 = arith.constant 0 : index
    %c0_7 = arith.constant 0 : index
    %8 = vector.load %arg9[%c0_6, %c0_7] : memref<16x32xf32, #tpu.memory_space<vmem>>, vector<16x32xf32>
    tpu.vector_store %arg9[%c0_6, %c0_7], %7 {strides = array<i32>} : memref<16x32xf32, #tpu.memory_space<vmem>>, vector<16x32xf32>,
    %c0_i32_8 = arith.constant 0 : i32
    %9 = arith.cmpi eq, %arg1, %c0_i32_8 : i32
    %10 = arith.extui %9 : i1 to i32
    %c0_i32_9 = arith.constant 0 : i32
    %11 = arith.cmpi ne, %10, %c0_i32_9 : i32
    scf.if %11 {
      %c0_10 = arith.constant 0 : index
      %c0_11 = arith.constant 0 : index
      %12 = vector.load %arg9[%c0_10, %c0_11] : memref<16x32xf32, #tpu.memory_space<vmem>>, vector<16x32xf32>
      %c0_12 = arith.constant 0 : index
      %c0_13 = arith.constant 0 : index
      %13 = vector.load %arg4[%c0_12, %c0_13] : memref<1x32xf32, #tpu.memory_space<vmem>>, vector<1x32xf32>
      %14 = vector.broadcast %13 : vector<1x32xf32> to vector<16x32xf32>
      %15 = arith.addf %12, %14 : vector<16x32xf32>
      %c0_14 = arith.constant 0 : index
      %c0_15 = arith.constant 0 : index
      %16 = vector.load %arg5[%c0_14, %c0_15] : memref<16x32xbf16, #tpu.memory_space<vmem>>, vector<16x32xbf16>
      %17 = arith.extf %16 : vector<16x32xbf16> to vector<16x32xf32>
      %18 = arith.addf %15, %17 : vector<16x32xf32>
      %cst_16 = arith.constant dense<0.000000e+00> : vector<16xf32>
      %19 = vector.multi_reduction <add>, %18, %cst_16 [1] : vector<16x32xf32> to vector<16xf32>
      %20 = vector.shape_cast %19 : vector<16xf32> to vector<16x1xf32>
      %cst_17 = arith.constant 3.200000e+01 : f32
      %21 = vector.broadcast %cst_17 : f32 to vector<16x1xf32>
      %22 = arith.divf %20, %21 : vector<16x1xf32>
      %23 = vector.broadcast %22 : vector<16x1xf32> to vector<16x32xf32>
      %24 = arith.subf %18, %23 : vector<16x32xf32>
      %25 = arith.mulf %24, %24 : vector<16x32xf32>
      %cst_18 = arith.constant dense<0.000000e+00> : vector<16xf32>
      %26 = vector.multi_reduction <add>, %25, %cst_18 [1] : vector<16x32xf32> to vector<16xf32>
      %27 = vector.shape_cast %26 : vector<16xf32> to vector<16x1xf32>
      %cst_19 = arith.constant 3.200000e+01 : f32
      %28 = vector.broadcast %cst_19 : f32 to vector<16x1xf32>
      %29 = arith.divf %27, %28 : vector<16x1xf32>
      %30 = vector.broadcast %22 : vector<16x1xf32> to vector<16x32xf32>
      %31 = arith.subf %18, %30 : vector<16x32xf32>
      %cst_20 = arith.constant 9.99999974E-6 : f32
      %32 = vector.broadcast %cst_20 : f32 to vector<16x1xf32>
      %33 = arith.addf %29, %32 : vector<16x1xf32>
      %34 = math.rsqrt %33 : vector<16x1xf32>
      %35 = vector.broadcast %34 : vector<16x1xf32> to vector<16x32xf32>
      %36 = arith.mulf %31, %35 : vector<16x32xf32>
      %c0_21 = arith.constant 0 : index
      %c0_22 = arith.constant 0 : index
      %37 = vector.load %arg6[%c0_21, %c0_22] : memref<1x32xf32, #tpu.memory_space<vmem>>, vector<1x32xf32>
      %38 = vector.broadcast %37 : vector<1x32xf32> to vector<16x32xf32>
      %39 = arith.mulf %36, %38 : vector<16x32xf32>
      %c0_23 = arith.constant 0 : index
      %c0_24 = arith.constant 0 : index
      %40 = vector.load %arg7[%c0_23, %c0_24] : memref<1x32xf32, #tpu.memory_space<vmem>>, vector<1x32xf32>
      %41 = vector.broadcast %40 : vector<1x32xf32> to vector<16x32xf32>
      %42 = arith.addf %39, %41 : vector<16x32xf32>
      %43 = arith.truncf %42 : vector<16x32xf32> to vector<16x32xbf16>
      %c0_25 = arith.constant 0 : index
      %c0_26 = arith.constant 0 : index
      %44 = vector.load %arg8[%c0_25, %c0_26] : memref<16x32xbf16, #tpu.memory_space<vmem>>, vector<16x32xbf16>
      tpu.vector_store %arg8[%c0_25, %c0_26], %43 {strides = array<i32>} : memref<16x32xbf16, #tpu.memory_space<vmem>>, vector<16x32xbf16>,
    } else {
    }
    return
  }
  func.func @transform_0(%arg0: i32, %arg1: i32) -> (i32, i32) {
    %c0_i32 = arith.constant 0 : i32
    return %arg0, %arg1 : i32, i32
  }
  func.func @transform_1(%arg0: i32, %arg1: i32) -> (i32, i32) {
    %c0_i32 = arith.constant 0 : i32
    %c0_i32_0 = arith.constant 0 : i32
    return %arg1, %c0_i32 : i32, i32
  }
  func.func @transform_2(%arg0: i32, %arg1: i32) -> (i32, i32) {
    %c0_i32 = arith.constant 0 : i32
    %c0_i32_0 = arith.constant 0 : i32
    %c0_i32_1 = arith.constant 0 : i32
    return %c0_i32, %c0_i32_0 : i32, i32
  }
  func.func @transform_3(%arg0: i32, %arg1: i32) -> (i32, i32) {
    %c0_i32 = arith.constant 0 : i32
    %c0_i32_0 = arith.constant 0 : i32
    return %arg0, %c0_i32 : i32, i32
  }
  func.func @transform_4(%arg0: i32, %arg1: i32) -> (i32, i32) {
    %c0_i32 = arith.constant 0 : i32
    %c0_i32_0 = arith.constant 0 : i32
    %c0_i32_1 = arith.constant 0 : i32
    return %c0_i32, %c0_i32_0 : i32, i32
  }
  func.func @transform_5(%arg0: i32, %arg1: i32) -> (i32, i32) {
    %c0_i32 = arith.constant 0 : i32
    %c0_i32_0 = arith.constant 0 : i32
    %c0_i32_1 = arith.constant 0 : i32
    return %c0_i32, %c0_i32_0 : i32, i32
  }
  func.func @transform_6(%arg0: i32, %arg1: i32) -> (i32, i32) {
    %c0_i32 = arith.constant 0 : i32
    %c0_i32_0 = arith.constant 0 : i32
    return %arg0, %c0_i32 : i32, i32
  }
}

module attributes {stable_mosaic.version = 11 : i64} {
  func.func @_linear_kernel(%arg0: i32, %arg1: i32, %arg2: i32, %arg3: memref<16x32xbf16, #tpu.memory_space<vmem>>, %arg4: memref<32x32xbf16, #tpu.memory_space<vmem>>, %arg5: memref<1x32xf32, #tpu.memory_space<vmem>>, %arg6: memref<16x32xbf16, #tpu.memory_space<vmem>>, %arg7: memref<16x32xf32, #tpu.memory_space<vmem>>) attributes {dimension_semantics = [#tpu.dimension_semantics<parallel>, #tpu.dimension_semantics<parallel>, #tpu.dimension_semantics<arbitrary>], iteration_bounds = array<i64: 1, 1, 1>, scalar_prefetch = 0 : i64, scratch_operands = 1 : i64, tpu.core_type = #tpu.core_type<tc>, window_params = [{transform_indices = @transform_0, window_bounds = array<i64: 16, 32>}, {transform_indices = @transform_1, window_bounds = array<i64: 32, 32>}, {transform_indices = @transform_2, window_bounds = array<i64: 1, 32>}, {transform_indices = @transform_3, window_bounds = array<i64: 16, 32>}]} {
    %c0_i32 = arith.constant 0 : i32
    %0 = arith.cmpi eq, %arg2, %c0_i32 : i32
    %1 = arith.extui %0 : i1 to i32
    %c0_i32_0 = arith.constant 0 : i32
    %2 = arith.cmpi ne, %1, %c0_i32_0 : i32
    scf.if %2 {
      %cst_10 = arith.constant 0.000000e+00 : f32
      %12 = vector.broadcast %cst_10 : f32 to vector<16x32xf32>
      %c0_11 = arith.constant 0 : index
      %c0_12 = arith.constant 0 : index
      %13 = vector.load %arg7[%c0_11, %c0_12] : memref<16x32xf32, #tpu.memory_space<vmem>>, vector<16x32xf32>
      tpu.vector_store %arg7[%c0_11, %c0_12], %12 {strides = array<i32>} : memref<16x32xf32, #tpu.memory_space<vmem>>, vector<16x32xf32>,
    } else {
    }
    %c0 = arith.constant 0 : index
    %c0_1 = arith.constant 0 : index
    %3 = vector.load %arg7[%c0, %c0_1] : memref<16x32xf32, #tpu.memory_space<vmem>>, vector<16x32xf32>
    %c0_2 = arith.constant 0 : index
    %c0_3 = arith.constant 0 : index
    %4 = vector.load %arg3[%c0_2, %c0_3] : memref<16x32xbf16, #tpu.memory_space<vmem>>, vector<16x32xbf16>
    %c0_4 = arith.constant 0 : index
    %c0_5 = arith.constant 0 : index
    %5 = vector.load %arg4[%c0_4, %c0_5] : memref<32x32xbf16, #tpu.memory_space<vmem>>, vector<32x32xbf16>
    %cst = arith.constant dense<0.000000e+00> : vector<16x32xf32>
    %6 = tpu.matmul %4, %5, %cst {dimension_numbers = #tpu.dot_dimension_numbers<[1], [0], [0], [1], [0, 0, 1, 1], [], []>} : vector<16x32xbf16>, vector<32x32xbf16>, vector<16x32xf32> -> vector<16x32xf32>
    %7 = arith.addf %3, %6 : vector<16x32xf32>
    %c0_6 = arith.constant 0 : index
    %c0_7 = arith.constant 0 : index
    %8 = vector.load %arg7[%c0_6, %c0_7] : memref<16x32xf32, #tpu.memory_space<vmem>>, vector<16x32xf32>
    tpu.vector_store %arg7[%c0_6, %c0_7], %7 {strides = array<i32>} : memref<16x32xf32, #tpu.memory_space<vmem>>, vector<16x32xf32>,
    %c0_i32_8 = arith.constant 0 : i32
    %9 = arith.cmpi eq, %arg2, %c0_i32_8 : i32
    %10 = arith.extui %9 : i1 to i32
    %c0_i32_9 = arith.constant 0 : i32
    %11 = arith.cmpi ne, %10, %c0_i32_9 : i32
    scf.if %11 {
      %c0_10 = arith.constant 0 : index
      %c0_11 = arith.constant 0 : index
      %12 = vector.load %arg7[%c0_10, %c0_11] : memref<16x32xf32, #tpu.memory_space<vmem>>, vector<16x32xf32>
      %c0_12 = arith.constant 0 : index
      %c0_13 = arith.constant 0 : index
      %13 = vector.load %arg5[%c0_12, %c0_13] : memref<1x32xf32, #tpu.memory_space<vmem>>, vector<1x32xf32>
      %14 = vector.broadcast %13 : vector<1x32xf32> to vector<16x32xf32>
      %15 = arith.addf %12, %14 : vector<16x32xf32>
      %16 = arith.truncf %15 : vector<16x32xf32> to vector<16x32xbf16>
      %c0_14 = arith.constant 0 : index
      %c0_15 = arith.constant 0 : index
      %17 = vector.load %arg6[%c0_14, %c0_15] : memref<16x32xbf16, #tpu.memory_space<vmem>>, vector<16x32xbf16>
      tpu.vector_store %arg6[%c0_14, %c0_15], %16 {strides = array<i32>} : memref<16x32xbf16, #tpu.memory_space<vmem>>, vector<16x32xbf16>,
    } else {
    }
    return
  }
  func.func @transform_0(%arg0: i32, %arg1: i32, %arg2: i32) -> (i32, i32) {
    %c0_i32 = arith.constant 0 : i32
    return %arg0, %arg2 : i32, i32
  }
  func.func @transform_1(%arg0: i32, %arg1: i32, %arg2: i32) -> (i32, i32) {
    %c0_i32 = arith.constant 0 : i32
    return %arg2, %arg1 : i32, i32
  }
  func.func @transform_2(%arg0: i32, %arg1: i32, %arg2: i32) -> (i32, i32) {
    %c0_i32 = arith.constant 0 : i32
    %c0_i32_0 = arith.constant 0 : i32
    return %c0_i32, %arg1 : i32, i32
  }
  func.func @transform_3(%arg0: i32, %arg1: i32, %arg2: i32) -> (i32, i32) {
    %c0_i32 = arith.constant 0 : i32
    return %arg0, %arg1 : i32, i32
  }
}

module attributes {stable_mosaic.version = 11 : i64} {
  func.func @_linear_kernel(%arg0: i32, %arg1: i32, %arg2: i32, %arg3: memref<16x32xbf16, #tpu.memory_space<vmem>>, %arg4: memref<32x64xbf16, #tpu.memory_space<vmem>>, %arg5: memref<1x64xf32, #tpu.memory_space<vmem>>, %arg6: memref<16x64xbf16, #tpu.memory_space<vmem>>, %arg7: memref<16x64xf32, #tpu.memory_space<vmem>>) attributes {dimension_semantics = [#tpu.dimension_semantics<parallel>, #tpu.dimension_semantics<parallel>, #tpu.dimension_semantics<arbitrary>], iteration_bounds = array<i64: 1, 1, 1>, scalar_prefetch = 0 : i64, scratch_operands = 1 : i64, tpu.core_type = #tpu.core_type<tc>, window_params = [{transform_indices = @transform_0, window_bounds = array<i64: 16, 32>}, {transform_indices = @transform_1, window_bounds = array<i64: 32, 64>}, {transform_indices = @transform_2, window_bounds = array<i64: 1, 64>}, {transform_indices = @transform_3, window_bounds = array<i64: 16, 64>}]} {
    %c0_i32 = arith.constant 0 : i32
    %0 = arith.cmpi eq, %arg2, %c0_i32 : i32
    %1 = arith.extui %0 : i1 to i32
    %c0_i32_0 = arith.constant 0 : i32
    %2 = arith.cmpi ne, %1, %c0_i32_0 : i32
    scf.if %2 {
      %cst_10 = arith.constant 0.000000e+00 : f32
      %12 = vector.broadcast %cst_10 : f32 to vector<16x64xf32>
      %c0_11 = arith.constant 0 : index
      %c0_12 = arith.constant 0 : index
      %13 = vector.load %arg7[%c0_11, %c0_12] : memref<16x64xf32, #tpu.memory_space<vmem>>, vector<16x64xf32>
      tpu.vector_store %arg7[%c0_11, %c0_12], %12 {strides = array<i32>} : memref<16x64xf32, #tpu.memory_space<vmem>>, vector<16x64xf32>,
    } else {
    }
    %c0 = arith.constant 0 : index
    %c0_1 = arith.constant 0 : index
    %3 = vector.load %arg7[%c0, %c0_1] : memref<16x64xf32, #tpu.memory_space<vmem>>, vector<16x64xf32>
    %c0_2 = arith.constant 0 : index
    %c0_3 = arith.constant 0 : index
    %4 = vector.load %arg3[%c0_2, %c0_3] : memref<16x32xbf16, #tpu.memory_space<vmem>>, vector<16x32xbf16>
    %c0_4 = arith.constant 0 : index
    %c0_5 = arith.constant 0 : index
    %5 = vector.load %arg4[%c0_4, %c0_5] : memref<32x64xbf16, #tpu.memory_space<vmem>>, vector<32x64xbf16>
    %cst = arith.constant dense<0.000000e+00> : vector<16x64xf32>
    %6 = tpu.matmul %4, %5, %cst {dimension_numbers = #tpu.dot_dimension_numbers<[1], [0], [0], [1], [0, 0, 1, 1], [], []>} : vector<16x32xbf16>, vector<32x64xbf16>, vector<16x64xf32> -> vector<16x64xf32>
    %7 = arith.addf %3, %6 : vector<16x64xf32>
    %c0_6 = arith.constant 0 : index
    %c0_7 = arith.constant 0 : index
    %8 = vector.load %arg7[%c0_6, %c0_7] : memref<16x64xf32, #tpu.memory_space<vmem>>, vector<16x64xf32>
    tpu.vector_store %arg7[%c0_6, %c0_7], %7 {strides = array<i32>} : memref<16x64xf32, #tpu.memory_space<vmem>>, vector<16x64xf32>,
    %c0_i32_8 = arith.constant 0 : i32
    %9 = arith.cmpi eq, %arg2, %c0_i32_8 : i32
    %10 = arith.extui %9 : i1 to i32
    %c0_i32_9 = arith.constant 0 : i32
    %11 = arith.cmpi ne, %10, %c0_i32_9 : i32
    scf.if %11 {
      %c0_10 = arith.constant 0 : index
      %c0_11 = arith.constant 0 : index
      %12 = vector.load %arg7[%c0_10, %c0_11] : memref<16x64xf32, #tpu.memory_space<vmem>>, vector<16x64xf32>
      %c0_12 = arith.constant 0 : index
      %c0_13 = arith.constant 0 : index
      %13 = vector.load %arg5[%c0_12, %c0_13] : memref<1x64xf32, #tpu.memory_space<vmem>>, vector<1x64xf32>
      %14 = vector.broadcast %13 : vector<1x64xf32> to vector<16x64xf32>
      %15 = arith.addf %12, %14 : vector<16x64xf32>
      %16 = arith.truncf %15 : vector<16x64xf32> to vector<16x64xbf16>
      %c0_14 = arith.constant 0 : index
      %c0_15 = arith.constant 0 : index
      %17 = vector.load %arg6[%c0_14, %c0_15] : memref<16x64xbf16, #tpu.memory_space<vmem>>, vector<16x64xbf16>
      tpu.vector_store %arg6[%c0_14, %c0_15], %16 {strides = array<i32>} : memref<16x64xbf16, #tpu.memory_space<vmem>>, vector<16x64xbf16>,
    } else {
    }
    return
  }
  func.func @transform_0(%arg0: i32, %arg1: i32, %arg2: i32) -> (i32, i32) {
    %c0_i32 = arith.constant 0 : i32
    return %arg0, %arg2 : i32, i32
  }
  func.func @transform_1(%arg0: i32, %arg1: i32, %arg2: i32) -> (i32, i32) {
    %c0_i32 = arith.constant 0 : i32
    return %arg2, %arg1 : i32, i32
  }
  func.func @transform_2(%arg0: i32, %arg1: i32, %arg2: i32) -> (i32, i32) {
    %c0_i32 = arith.constant 0 : i32
    %c0_i32_0 = arith.constant 0 : i32
    return %c0_i32, %arg1 : i32, i32
  }
  func.func @transform_3(%arg0: i32, %arg1: i32, %arg2: i32) -> (i32, i32) {
    %c0_i32 = arith.constant 0 : i32
    return %arg0, %arg1 : i32, i32
  }
}

module attributes {stable_mosaic.version = 11 : i64} {
  func.func @_attn_kernel(%arg0: i32, %arg1: i32, %arg2: i32, %arg3: memref<1x8x32xbf16, #tpu.memory_space<vmem>>, %arg4: memref<1x8x32xbf16, #tpu.memory_space<vmem>>, %arg5: memref<1x8x32xbf16, #tpu.memory_space<vmem>>, %arg6: memref<1x1x8xf32, #tpu.memory_space<vmem>>, %arg7: memref<1x8x32xbf16, #tpu.memory_space<vmem>>, %arg8: memref<8x4xf32, #tpu.memory_space<vmem>>, %arg9: memref<8x4xf32, #tpu.memory_space<vmem>>, %arg10: memref<8x32xf32, #tpu.memory_space<vmem>>) attributes {dimension_semantics = [#tpu.dimension_semantics<parallel>, #tpu.dimension_semantics<parallel>, #tpu.dimension_semantics<arbitrary>], iteration_bounds = array<i64: 2, 1, 1>, scalar_prefetch = 0 : i64, scratch_operands = 3 : i64, tpu.core_type = #tpu.core_type<tc>, window_params = [{transform_indices = @transform_0, window_bounds = array<i64: 1, 8, 32>}, {transform_indices = @transform_1, window_bounds = array<i64: 1, 8, 32>}, {transform_indices = @transform_2, window_bounds = array<i64: 1, 8, 32>}, {transform_indices = @transform_3, window_bounds = array<i64: 1, 1, 8>}, {transform_indices = @transform_4, window_bounds = array<i64: 1, 8, 32>}]} {
    %c0_i32 = arith.constant 0 : i32
    %0 = arith.cmpi eq, %arg2, %c0_i32 : i32
    %1 = arith.extui %0 : i1 to i32
    %c0_i32_0 = arith.constant 0 : i32
    %2 = arith.cmpi ne, %1, %c0_i32_0 : i32
    scf.if %2 {
      %cst_80 = arith.constant -1.000000e+30 : f32
      %148 = vector.broadcast %cst_80 : f32 to vector<8x4xf32>
      %c0_81 = arith.constant 0 : index
      %c0_82 = arith.constant 0 : index
      %149 = vector.load %arg8[%c0_81, %c0_82] : memref<8x4xf32, #tpu.memory_space<vmem>>, vector<8x4xf32>
      tpu.vector_store %arg8[%c0_81, %c0_82], %148 {strides = array<i32>} : memref<8x4xf32, #tpu.memory_space<vmem>>, vector<8x4xf32>,
      %cst_83 = arith.constant 0.000000e+00 : f32
      %150 = vector.broadcast %cst_83 : f32 to vector<8x4xf32>
      %c0_84 = arith.constant 0 : index
      %c0_85 = arith.constant 0 : index
      %151 = vector.load %arg9[%c0_84, %c0_85] : memref<8x4xf32, #tpu.memory_space<vmem>>, vector<8x4xf32>
      tpu.vector_store %arg9[%c0_84, %c0_85], %150 {strides = array<i32>} : memref<8x4xf32, #tpu.memory_space<vmem>>, vector<8x4xf32>,
      %cst_86 = arith.constant 0.000000e+00 : f32
      %152 = vector.broadcast %cst_86 : f32 to vector<8x32xf32>
      %c0_87 = arith.constant 0 : index
      %c0_88 = arith.constant 0 : index
      %153 = vector.load %arg10[%c0_87, %c0_88] : memref<8x32xf32, #tpu.memory_space<vmem>>, vector<8x32xf32>
      tpu.vector_store %arg10[%c0_87, %c0_88], %152 {strides = array<i32>} : memref<8x32xf32, #tpu.memory_space<vmem>>, vector<8x32xf32>,
    } else {
    }
    %c0 = arith.constant 0 : index
    %c0_1 = arith.constant 0 : index
    %c0_2 = arith.constant 0 : index
    %3 = vector.load %arg3[%c0, %c0_1, %c0_2] : memref<1x8x32xbf16, #tpu.memory_space<vmem>>, vector<1x8x32xbf16>
    %4 = vector.shape_cast %3 : vector<1x8x32xbf16> to vector<8x32xbf16>
    %c0_3 = arith.constant 0 : index
    %c0_4 = arith.constant 0 : index
    %c0_5 = arith.constant 0 : index
    %5 = vector.load %arg4[%c0_3, %c0_4, %c0_5] : memref<1x8x32xbf16, #tpu.memory_space<vmem>>, vector<1x8x32xbf16>
    %6 = vector.shape_cast %5 : vector<1x8x32xbf16> to vector<8x32xbf16>
    %c0_6 = arith.constant 0 : index
    %c0_7 = arith.constant 0 : index
    %c0_8 = arith.constant 0 : index
    %7 = vector.load %arg5[%c0_6, %c0_7, %c0_8] : memref<1x8x32xbf16, #tpu.memory_space<vmem>>, vector<1x8x32xbf16>
    %8 = vector.shape_cast %7 : vector<1x8x32xbf16> to vector<8x32xbf16>
    %c0_9 = arith.constant 0 : index
    %c0_10 = arith.constant 0 : index
    %c0_11 = arith.constant 0 : index
    %9 = vector.load %arg6[%c0_9, %c0_10, %c0_11] : memref<1x1x8xf32, #tpu.memory_space<vmem>>, vector<1x1x8xf32>
    %10 = vector.shape_cast %9 : vector<1x1x8xf32> to vector<1x8xf32>
    %cst = arith.constant 5.000000e-01 : f32
    %11 = vector.broadcast %cst : f32 to vector<1x8xf32>
    %12 = arith.cmpf ogt, %10, %11 : vector<1x8xf32>
    %13 = vector.extract_strided_slice %4 {offsets = [0, 0], sizes = [8, 8], strides = [1, 1]} : vector<8x32xbf16> to vector<8x8xbf16>
    %14 = vector.extract_strided_slice %6 {offsets = [0, 0], sizes = [8, 8], strides = [1, 1]} : vector<8x32xbf16> to vector<8x8xbf16>
    %cst_12 = arith.constant dense<0.000000e+00> : vector<8x8xf32>
    %15 = tpu.matmul %13, %14, %cst_12 {dimension_numbers = #tpu.dot_dimension_numbers<[1], [1], [0], [0], [0, 0, 1, 0], [], []>} : vector<8x8xbf16>, vector<8x8xbf16>, vector<8x8xf32> -> vector<8x8xf32>
    %cst_13 = arith.constant 0.353553385 : f32
    %16 = vector.broadcast %cst_13 : f32 to vector<8x8xf32>
    %17 = arith.mulf %15, %16 : vector<8x8xf32>
    %cst_14 = arith.constant -1.000000e+09 : f32
    %18 = vector.shape_cast %12 : vector<1x8xi1> to vector<1x8xi1>
    %19 = vector.broadcast %18 : vector<1x8xi1> to vector<8x8xi1>
    %20 = vector.broadcast %cst_14 : f32 to vector<8x8xf32>
    %21 = arith.select %19, %20, %17 : vector<8x8xi1>, vector<8x8xf32>
    %c0_15 = arith.constant 0 : index
    %c0_16 = arith.constant 0 : index
    %22 = vector.load %arg8[%c0_15, %c0_16] : memref<8x4xf32, #tpu.memory_space<vmem>>, vector<8x1xf32>
    %cst_17 = arith.constant dense<0xFF800000> : vector<8xf32>
    %23 = vector.multi_reduction <maximumf>, %21, %cst_17 [1] : vector<8x8xf32> to vector<8xf32>
    %24 = vector.shape_cast %23 : vector<8xf32> to vector<8x1xf32>
    %25 = arith.maximumf %22, %24 : vector<8x1xf32>
    %26 = arith.subf %22, %25 : vector<8x1xf32>
    %27 = math.exp %26 : vector<8x1xf32>
    %28 = vector.broadcast %25 : vector<8x1xf32> to vector<8x8xf32>
    %29 = arith.subf %21, %28 : vector<8x8xf32>
    %30 = math.exp %29 : vector<8x8xf32>
    %c0_18 = arith.constant 0 : index
    %c0_19 = arith.constant 0 : index
    %31 = vector.load %arg9[%c0_18, %c0_19] : memref<8x4xf32, #tpu.memory_space<vmem>>, vector<8x1xf32>
    %32 = arith.mulf %27, %31 : vector<8x1xf32>
    %cst_20 = arith.constant dense<0.000000e+00> : vector<8xf32>
    %33 = vector.multi_reduction <add>, %30, %cst_20 [1] : vector<8x8xf32> to vector<8xf32>
    %34 = vector.shape_cast %33 : vector<8xf32> to vector<8x1xf32>
    %35 = arith.addf %32, %34 : vector<8x1xf32>
    %c0_21 = arith.constant 0 : index
    %c0_22 = arith.constant 0 : index
    %36 = vector.load %arg9[%c0_21, %c0_22] : memref<8x4xf32, #tpu.memory_space<vmem>>, vector<8x1xf32>
    tpu.vector_store %arg9[%c0_21, %c0_22], %35 {strides = array<i32>} : memref<8x4xf32, #tpu.memory_space<vmem>>, vector<8x1xf32>,
    %c0_23 = arith.constant 0 : index
    %c0_24 = arith.constant 0 : index
    %37 = vector.load %arg10[%c0_23, %c0_24] : memref<8x32xf32, #tpu.memory_space<vmem>>, vector<8x8xf32>
    %38 = vector.broadcast %27 : vector<8x1xf32> to vector<8x8xf32>
    %39 = arith.mulf %38, %37 : vector<8x8xf32>
    %40 = arith.truncf %30 : vector<8x8xf32> to vector<8x8xbf16>
    %41 = vector.extract_strided_slice %8 {offsets = [0, 0], sizes = [8, 8], strides = [1, 1]} : vector<8x32xbf16> to vector<8x8xbf16>
    %cst_25 = arith.constant dense<0.000000e+00> : vector<8x8xf32>
    %42 = tpu.matmul %40, %41, %cst_25 {dimension_numbers = #tpu.dot_dimension_numbers<[1], [0], [0], [1], [0, 0, 1, 1], [], []>} : vector<8x8xbf16>, vector<8x8xbf16>, vector<8x8xf32> -> vector<8x8xf32>
    %43 = arith.addf %39, %42 : vector<8x8xf32>
    %c0_26 = arith.constant 0 : index
    %c0_27 = arith.constant 0 : index
    %44 = vector.load %arg10[%c0_26, %c0_27] : memref<8x32xf32, #tpu.memory_space<vmem>>, vector<8x8xf32>
    tpu.vector_store %arg10[%c0_26, %c0_27], %43 {strides = array<i32>} : memref<8x32xf32, #tpu.memory_space<vmem>>, vector<8x8xf32>,
    %c0_28 = arith.constant 0 : index
    %c0_29 = arith.constant 0 : index
    %45 = vector.load %arg8[%c0_28, %c0_29] : memref<8x4xf32, #tpu.memory_space<vmem>>, vector<8x1xf32>
    tpu.vector_store %arg8[%c0_28, %c0_29], %25 {strides = array<i32>} : memref<8x4xf32, #tpu.memory_space<vmem>>, vector<8x1xf32>,
    %46 = vector.extract_strided_slice %4 {offsets = [0, 8], sizes = [8, 8], strides = [1, 1]} : vector<8x32xbf16> to vector<8x8xbf16>
    %47 = vector.extract_strided_slice %6 {offsets = [0, 8], sizes = [8, 8], strides = [1, 1]} : vector<8x32xbf16> to vector<8x8xbf16>
    %cst_30 = arith.constant dense<0.000000e+00> : vector<8x8xf32>
    %48 = tpu.matmul %46, %47, %cst_30 {dimension_numbers = #tpu.dot_dimension_numbers<[1], [1], [0], [0], [0, 0, 1, 0], [], []>} : vector<8x8xbf16>, vector<8x8xbf16>, vector<8x8xf32> -> vector<8x8xf32>
    %cst_31 = arith.constant 0.353553385 : f32
    %49 = vector.broadcast %cst_31 : f32 to vector<8x8xf32>
    %50 = arith.mulf %48, %49 : vector<8x8xf32>
    %cst_32 = arith.constant -1.000000e+09 : f32
    %51 = vector.shape_cast %12 : vector<1x8xi1> to vector<1x8xi1>
    %52 = vector.broadcast %51 : vector<1x8xi1> to vector<8x8xi1>
    %53 = vector.broadcast %cst_32 : f32 to vector<8x8xf32>
    %54 = arith.select %52, %53, %50 : vector<8x8xi1>, vector<8x8xf32>
    %c0_33 = arith.constant 0 : index
    %c1 = arith.constant 1 : index
    %55 = vector.load %arg8[%c0_33, %c1] : memref<8x4xf32, #tpu.memory_space<vmem>>, vector<8x1xf32>
    %cst_34 = arith.constant dense<0xFF800000> : vector<8xf32>
    %56 = vector.multi_reduction <maximumf>, %54, %cst_34 [1] : vector<8x8xf32> to vector<8xf32>
    %57 = vector.shape_cast %56 : vector<8xf32> to vector<8x1xf32>
    %58 = arith.maximumf %55, %57 : vector<8x1xf32>
    %59 = arith.subf %55, %58 : vector<8x1xf32>
    %60 = math.exp %59 : vector<8x1xf32>
    %61 = vector.broadcast %58 : vector<8x1xf32> to vector<8x8xf32>
    %62 = arith.subf %54, %61 : vector<8x8xf32>
    %63 = math.exp %62 : vector<8x8xf32>
    %c0_35 = arith.constant 0 : index
    %c1_36 = arith.constant 1 : index
    %64 = vector.load %arg9[%c0_35, %c1_36] : memref<8x4xf32, #tpu.memory_space<vmem>>, vector<8x1xf32>
    %65 = arith.mulf %60, %64 : vector<8x1xf32>
    %cst_37 = arith.constant dense<0.000000e+00> : vector<8xf32>
    %66 = vector.multi_reduction <add>, %63, %cst_37 [1] : vector<8x8xf32> to vector<8xf32>
    %67 = vector.shape_cast %66 : vector<8xf32> to vector<8x1xf32>
    %68 = arith.addf %65, %67 : vector<8x1xf32>
    %c0_38 = arith.constant 0 : index
    %c1_39 = arith.constant 1 : index
    %69 = vector.load %arg9[%c0_38, %c1_39] : memref<8x4xf32, #tpu.memory_space<vmem>>, vector<8x1xf32>
    tpu.vector_store %arg9[%c0_38, %c1_39], %68 {strides = array<i32>} : memref<8x4xf32, #tpu.memory_space<vmem>>, vector<8x1xf32>,
    %c0_40 = arith.constant 0 : index
    %c8 = arith.constant 8 : index
    %70 = vector.load %arg10[%c0_40, %c8] : memref<8x32xf32, #tpu.memory_space<vmem>>, vector<8x8xf32>
    %71 = vector.broadcast %60 : vector<8x1xf32> to vector<8x8xf32>
    %72 = arith.mulf %71, %70 : vector<8x8xf32>
    %73 = arith.truncf %63 : vector<8x8xf32> to vector<8x8xbf16>
    %74 = vector.extract_strided_slice %8 {offsets = [0, 8], sizes = [8, 8], strides = [1, 1]} : vector<8x32xbf16> to vector<8x8xbf16>
    %cst_41 = arith.constant dense<0.000000e+00> : vector<8x8xf32>
    %75 = tpu.matmul %73, %74, %cst_41 {dimension_numbers = #tpu.dot_dimension_numbers<[1], [0], [0], [1], [0, 0, 1, 1], [], []>} : vector<8x8xbf16>, vector<8x8xbf16>, vector<8x8xf32> -> vector<8x8xf32>
    %76 = arith.addf %72, %75 : vector<8x8xf32>
    %c0_42 = arith.constant 0 : index
    %c8_43 = arith.constant 8 : index
    %77 = vector.load %arg10[%c0_42, %c8_43] : memref<8x32xf32, #tpu.memory_space<vmem>>, vector<8x8xf32>
    tpu.vector_store %arg10[%c0_42, %c8_43], %76 {strides = array<i32>} : memref<8x32xf32, #tpu.memory_space<vmem>>, vector<8x8xf32>,
    %c0_44 = arith.constant 0 : index
    %c1_45 = arith.constant 1 : index
    %78 = vector.load %arg8[%c0_44, %c1_45] : memref<8x4xf32, #tpu.memory_space<vmem>>, vector<8x1xf32>
    tpu.vector_store %arg8[%c0_44, %c1_45], %58 {strides = array<i32>} : memref<8x4xf32, #tpu.memory_space<vmem>>, vector<8x1xf32>,
    %79 = vector.extract_strided_slice %4 {offsets = [0, 16], sizes = [8, 8], strides = [1, 1]} : vector<8x32xbf16> to vector<8x8xbf16>
    %80 = vector.extract_strided_slice %6 {offsets = [0, 16], sizes = [8, 8], strides = [1, 1]} : vector<8x32xbf16> to vector<8x8xbf16>
    %cst_46 = arith.constant dense<0.000000e+00> : vector<8x8xf32>
    %81 = tpu.matmul %79, %80, %cst_46 {dimension_numbers = #tpu.dot_dimension_numbers<[1], [1], [0], [0], [0, 0, 1, 0], [], []>} : vector<8x8xbf16>, vector<8x8xbf16>, vector<8x8xf32> -> vector<8x8xf32>
    %cst_47 = arith.constant 0.353553385 : f32
    %82 = vector.broadcast %cst_47 : f32 to vector<8x8xf32>
    %83 = arith.mulf %81, %82 : vector<8x8xf32>
    %cst_48 = arith.constant -1.000000e+09 : f32
    %84 = vector.shape_cast %12 : vector<1x8xi1> to vector<1x8xi1>
    %85 = vector.broadcast %84 : vector<1x8xi1> to vector<8x8xi1>
    %86 = vector.broadcast %cst_48 : f32 to vector<8x8xf32>
    %87 = arith.select %85, %86, %83 : vector<8x8xi1>, vector<8x8xf32>
    %c0_49 = arith.constant 0 : index
    %c2 = arith.constant 2 : index
    %88 = vector.load %arg8[%c0_49, %c2] : memref<8x4xf32, #tpu.memory_space<vmem>>, vector<8x1xf32>
    %cst_50 = arith.constant dense<0xFF800000> : vector<8xf32>
    %89 = vector.multi_reduction <maximumf>, %87, %cst_50 [1] : vector<8x8xf32> to vector<8xf32>
    %90 = vector.shape_cast %89 : vector<8xf32> to vector<8x1xf32>
    %91 = arith.maximumf %88, %90 : vector<8x1xf32>
    %92 = arith.subf %88, %91 : vector<8x1xf32>
    %93 = math.exp %92 : vector<8x1xf32>
    %94 = vector.broadcast %91 : vector<8x1xf32> to vector<8x8xf32>
    %95 = arith.subf %87, %94 : vector<8x8xf32>
    %96 = math.exp %95 : vector<8x8xf32>
    %c0_51 = arith.constant 0 : index
    %c2_52 = arith.constant 2 : index
    %97 = vector.load %arg9[%c0_51, %c2_52] : memref<8x4xf32, #tpu.memory_space<vmem>>, vector<8x1xf32>
    %98 = arith.mulf %93, %97 : vector<8x1xf32>
    %cst_53 = arith.constant dense<0.000000e+00> : vector<8xf32>
    %99 = vector.multi_reduction <add>, %96, %cst_53 [1] : vector<8x8xf32> to vector<8xf32>
    %100 = vector.shape_cast %99 : vector<8xf32> to vector<8x1xf32>
    %101 = arith.addf %98, %100 : vector<8x1xf32>
    %c0_54 = arith.constant 0 : index
    %c2_55 = arith.constant 2 : index
    %102 = vector.load %arg9[%c0_54, %c2_55] : memref<8x4xf32, #tpu.memory_space<vmem>>, vector<8x1xf32>
    tpu.vector_store %arg9[%c0_54, %c2_55], %101 {strides = array<i32>} : memref<8x4xf32, #tpu.memory_space<vmem>>, vector<8x1xf32>,
    %c0_56 = arith.constant 0 : index
    %c16 = arith.constant 16 : index
    %103 = vector.load %arg10[%c0_56, %c16] : memref<8x32xf32, #tpu.memory_space<vmem>>, vector<8x8xf32>
    %104 = vector.broadcast %93 : vector<8x1xf32> to vector<8x8xf32>
    %105 = arith.mulf %104, %103 : vector<8x8xf32>
    %106 = arith.truncf %96 : vector<8x8xf32> to vector<8x8xbf16>
    %107 = vector.extract_strided_slice %8 {offsets = [0, 16], sizes = [8, 8], strides = [1, 1]} : vector<8x32xbf16> to vector<8x8xbf16>
    %cst_57 = arith.constant dense<0.000000e+00> : vector<8x8xf32>
    %108 = tpu.matmul %106, %107, %cst_57 {dimension_numbers = #tpu.dot_dimension_numbers<[1], [0], [0], [1], [0, 0, 1, 1], [], []>} : vector<8x8xbf16>, vector<8x8xbf16>, vector<8x8xf32> -> vector<8x8xf32>
    %109 = arith.addf %105, %108 : vector<8x8xf32>
    %c0_58 = arith.constant 0 : index
    %c16_59 = arith.constant 16 : index
    %110 = vector.load %arg10[%c0_58, %c16_59] : memref<8x32xf32, #tpu.memory_space<vmem>>, vector<8x8xf32>
    tpu.vector_store %arg10[%c0_58, %c16_59], %109 {strides = array<i32>} : memref<8x32xf32, #tpu.memory_space<vmem>>, vector<8x8xf32>,
    %c0_60 = arith.constant 0 : index
    %c2_61 = arith.constant 2 : index
    %111 = vector.load %arg8[%c0_60, %c2_61] : memref<8x4xf32, #tpu.memory_space<vmem>>, vector<8x1xf32>
    tpu.vector_store %arg8[%c0_60, %c2_61], %91 {strides = array<i32>} : memref<8x4xf32, #tpu.memory_space<vmem>>, vector<8x1xf32>,
    %112 = vector.extract_strided_slice %4 {offsets = [0, 24], sizes = [8, 8], strides = [1, 1]} : vector<8x32xbf16> to vector<8x8xbf16>
    %113 = vector.extract_strided_slice %6 {offsets = [0, 24], sizes = [8, 8], strides = [1, 1]} : vector<8x32xbf16> to vector<8x8xbf16>
    %cst_62 = arith.constant dense<0.000000e+00> : vector<8x8xf32>
    %114 = tpu.matmul %112, %113, %cst_62 {dimension_numbers = #tpu.dot_dimension_numbers<[1], [1], [0], [0], [0, 0, 1, 0], [], []>} : vector<8x8xbf16>, vector<8x8xbf16>, vector<8x8xf32> -> vector<8x8xf32>
    %cst_63 = arith.constant 0.353553385 : f32
    %115 = vector.broadcast %cst_63 : f32 to vector<8x8xf32>
    %116 = arith.mulf %114, %115 : vector<8x8xf32>
    %cst_64 = arith.constant -1.000000e+09 : f32
    %117 = vector.shape_cast %12 : vector<1x8xi1> to vector<1x8xi1>
    %118 = vector.broadcast %117 : vector<1x8xi1> to vector<8x8xi1>
    %119 = vector.broadcast %cst_64 : f32 to vector<8x8xf32>
    %120 = arith.select %118, %119, %116 : vector<8x8xi1>, vector<8x8xf32>
    %c0_65 = arith.constant 0 : index
    %c3 = arith.constant 3 : index
    %121 = vector.load %arg8[%c0_65, %c3] : memref<8x4xf32, #tpu.memory_space<vmem>>, vector<8x1xf32>
    %cst_66 = arith.constant dense<0xFF800000> : vector<8xf32>
    %122 = vector.multi_reduction <maximumf>, %120, %cst_66 [1] : vector<8x8xf32> to vector<8xf32>
    %123 = vector.shape_cast %122 : vector<8xf32> to vector<8x1xf32>
    %124 = arith.maximumf %121, %123 : vector<8x1xf32>
    %125 = arith.subf %121, %124 : vector<8x1xf32>
    %126 = math.exp %125 : vector<8x1xf32>
    %127 = vector.broadcast %124 : vector<8x1xf32> to vector<8x8xf32>
    %128 = arith.subf %120, %127 : vector<8x8xf32>
    %129 = math.exp %128 : vector<8x8xf32>
    %c0_67 = arith.constant 0 : index
    %c3_68 = arith.constant 3 : index
    %130 = vector.load %arg9[%c0_67, %c3_68] : memref<8x4xf32, #tpu.memory_space<vmem>>, vector<8x1xf32>
    %131 = arith.mulf %126, %130 : vector<8x1xf32>
    %cst_69 = arith.constant dense<0.000000e+00> : vector<8xf32>
    %132 = vector.multi_reduction <add>, %129, %cst_69 [1] : vector<8x8xf32> to vector<8xf32>
    %133 = vector.shape_cast %132 : vector<8xf32> to vector<8x1xf32>
    %134 = arith.addf %131, %133 : vector<8x1xf32>
    %c0_70 = arith.constant 0 : index
    %c3_71 = arith.constant 3 : index
    %135 = vector.load %arg9[%c0_70, %c3_71] : memref<8x4xf32, #tpu.memory_space<vmem>>, vector<8x1xf32>
    tpu.vector_store %arg9[%c0_70, %c3_71], %134 {strides = array<i32>} : memref<8x4xf32, #tpu.memory_space<vmem>>, vector<8x1xf32>,
    %c0_72 = arith.constant 0 : index
    %c24 = arith.constant 24 : index
    %136 = vector.load %arg10[%c0_72, %c24] : memref<8x32xf32, #tpu.memory_space<vmem>>, vector<8x8xf32>
    %137 = vector.broadcast %126 : vector<8x1xf32> to vector<8x8xf32>
    %138 = arith.mulf %137, %136 : vector<8x8xf32>
    %139 = arith.truncf %129 : vector<8x8xf32> to vector<8x8xbf16>
    %140 = vector.extract_strided_slice %8 {offsets = [0, 24], sizes = [8, 8], strides = [1, 1]} : vector<8x32xbf16> to vector<8x8xbf16>
    %cst_73 = arith.constant dense<0.000000e+00> : vector<8x8xf32>
    %141 = tpu.matmul %139, %140, %cst_73 {dimension_numbers = #tpu.dot_dimension_numbers<[1], [0], [0], [1], [0, 0, 1, 1], [], []>} : vector<8x8xbf16>, vector<8x8xbf16>, vector<8x8xf32> -> vector<8x8xf32>
    %142 = arith.addf %138, %141 : vector<8x8xf32>
    %c0_74 = arith.constant 0 : index
    %c24_75 = arith.constant 24 : index
    %143 = vector.load %arg10[%c0_74, %c24_75] : memref<8x32xf32, #tpu.memory_space<vmem>>, vector<8x8xf32>
    tpu.vector_store %arg10[%c0_74, %c24_75], %142 {strides = array<i32>} : memref<8x32xf32, #tpu.memory_space<vmem>>, vector<8x8xf32>,
    %c0_76 = arith.constant 0 : index
    %c3_77 = arith.constant 3 : index
    %144 = vector.load %arg8[%c0_76, %c3_77] : memref<8x4xf32, #tpu.memory_space<vmem>>, vector<8x1xf32>
    tpu.vector_store %arg8[%c0_76, %c3_77], %124 {strides = array<i32>} : memref<8x4xf32, #tpu.memory_space<vmem>>, vector<8x1xf32>,
    %c0_i32_78 = arith.constant 0 : i32
    %145 = arith.cmpi eq, %arg2, %c0_i32_78 : i32
    %146 = arith.extui %145 : i1 to i32
    %c0_i32_79 = arith.constant 0 : i32
    %147 = arith.cmpi ne, %146, %c0_i32_79 : i32
    scf.if %147 {
      %c0_80 = arith.constant 0 : index
      %c0_81 = arith.constant 0 : index
      %148 = vector.load %arg9[%c0_80, %c0_81] : memref<8x4xf32, #tpu.memory_space<vmem>>, vector<8x4xf32>
      %149 = tpu.reciprocal %148 {approx = true} : vector<8x4xf32> -> vector<8x4xf32>
      %c0_82 = arith.constant 0 : index
      %c0_83 = arith.constant 0 : index
      %150 = vector.load %arg10[%c0_82, %c0_83] : memref<8x32xf32, #tpu.memory_space<vmem>>, vector<8x8xf32>
      %151 = vector.extract_strided_slice %149 {offsets = [0, 0], sizes = [8, 1], strides = [1, 1]} : vector<8x4xf32> to vector<8x1xf32>
      %152 = vector.broadcast %151 : vector<8x1xf32> to vector<8x8xf32>
      %153 = arith.mulf %150, %152 : vector<8x8xf32>
      %154 = arith.truncf %153 : vector<8x8xf32> to vector<8x8xbf16>
      %c0_84 = arith.constant 0 : index
      %c0_85 = arith.constant 0 : index
      %c0_86 = arith.constant 0 : index
      %155 = vector.load %arg7[%c0_84, %c0_85, %c0_86] : memref<1x8x32xbf16, #tpu.memory_space<vmem>>, vector<1x8x8xbf16>
      %156 = vector.shape_cast %155 : vector<1x8x8xbf16> to vector<8x8xbf16>
      %157 = vector.shape_cast %154 : vector<8x8xbf16> to vector<1x8x8xbf16>
      tpu.vector_store %arg7[%c0_84, %c0_85, %c0_86], %157 {strides = array<i32>} : memref<1x8x32xbf16, #tpu.memory_space<vmem>>, vector<1x8x8xbf16>,
      %c0_87 = arith.constant 0 : index
      %c8_88 = arith.constant 8 : index
      %158 = vector.load %arg10[%c0_87, %c8_88] : memref<8x32xf32, #tpu.memory_space<vmem>>, vector<8x8xf32>
      %159 = vector.extract_strided_slice %149 {offsets = [0, 1], sizes = [8, 1], strides = [1, 1]} : vector<8x4xf32> to vector<8x1xf32>
      %160 = vector.broadcast %159 : vector<8x1xf32> to vector<8x8xf32>
      %161 = arith.mulf %158, %160 : vector<8x8xf32>
      %162 = arith.truncf %161 : vector<8x8xf32> to vector<8x8xbf16>
      %c0_89 = arith.constant 0 : index
      %c0_90 = arith.constant 0 : index
      %c8_91 = arith.constant 8 : index
      %163 = vector.load %arg7[%c0_89, %c0_90, %c8_91] : memref<1x8x32xbf16, #tpu.memory_space<vmem>>, vector<1x8x8xbf16>
      %164 = vector.shape_cast %163 : vector<1x8x8xbf16> to vector<8x8xbf16>
      %165 = vector.shape_cast %162 : vector<8x8xbf16> to vector<1x8x8xbf16>
      tpu.vector_store %arg7[%c0_89, %c0_90, %c8_91], %165 {strides = array<i32>} : memref<1x8x32xbf16, #tpu.memory_space<vmem>>, vector<1x8x8xbf16>,
      %c0_92 = arith.constant 0 : index
      %c16_93 = arith.constant 16 : index
      %166 = vector.load %arg10[%c0_92, %c16_93] : memref<8x32xf32, #tpu.memory_space<vmem>>, vector<8x8xf32>
      %167 = vector.extract_strided_slice %149 {offsets = [0, 2], sizes = [8, 1], strides = [1, 1]} : vector<8x4xf32> to vector<8x1xf32>
      %168 = vector.broadcast %167 : vector<8x1xf32> to vector<8x8xf32>
      %169 = arith.mulf %166, %168 : vector<8x8xf32>
      %170 = arith.truncf %169 : vector<8x8xf32> to vector<8x8xbf16>
      %c0_94 = arith.constant 0 : index
      %c0_95 = arith.constant 0 : index
      %c16_96 = arith.constant 16 : index
      %171 = vector.load %arg7[%c0_94, %c0_95, %c16_96] : memref<1x8x32xbf16, #tpu.memory_space<vmem>>, vector<1x8x8xbf16>
      %172 = vector.shape_cast %171 : vector<1x8x8xbf16> to vector<8x8xbf16>
      %173 = vector.shape_cast %170 : vector<8x8xbf16> to vector<1x8x8xbf16>
      tpu.vector_store %arg7[%c0_94, %c0_95, %c16_96], %173 {strides = array<i32>} : memref<1x8x32xbf16, #tpu.memory_space<vmem>>, vector<1x8x8xbf16>,
      %c0_97 = arith.constant 0 : index
      %c24_98 = arith.constant 24 : index
      %174 = vector.load %arg10[%c0_97, %c24_98] : memref<8x32xf32, #tpu.memory_space<vmem>>, vector<8x8xf32>
      %175 = vector.extract_strided_slice %149 {offsets = [0, 3], sizes = [8, 1], strides = [1, 1]} : vector<8x4xf32> to vector<8x1xf32>
      %176 = vector.broadcast %175 : vector<8x1xf32> to vector<8x8xf32>
      %177 = arith.mulf %174, %176 : vector<8x8xf32>
      %178 = arith.truncf %177 : vector<8x8xf32> to vector<8x8xbf16>
      %c0_99 = arith.constant 0 : index
      %c0_100 = arith.constant 0 : index
      %c24_101 = arith.constant 24 : index
      %179 = vector.load %arg7[%c0_99, %c0_100, %c24_101] : memref<1x8x32xbf16, #tpu.memory_space<vmem>>, vector<1x8x8xbf16>
      %180 = vector.shape_cast %179 : vector<1x8x8xbf16> to vector<8x8xbf16>
      %181 = vector.shape_cast %178 : vector<8x8xbf16> to vector<1x8x8xbf16>
      tpu.vector_store %arg7[%c0_99, %c0_100, %c24_101], %181 {strides = array<i32>} : memref<1x8x32xbf16, #tpu.memory_space<vmem>>, vector<1x8x8xbf16>,
    } else {
    }
    return
  }
  func.func @transform_0(%arg0: i32, %arg1: i32, %arg2: i32) -> (i32, i32, i32) {
    %c0_i32 = arith.constant 0 : i32
    %c0_i32_0 = arith.constant 0 : i32
    return %arg0, %arg1, %c0_i32 : i32, i32, i32
  }
  func.func @transform_1(%arg0: i32, %arg1: i32, %arg2: i32) -> (i32, i32, i32) {
    %c0_i32 = arith.constant 0 : i32
    %c0_i32_0 = arith.constant 0 : i32
    return %arg0, %arg2, %c0_i32 : i32, i32, i32
  }
  func.func @transform_2(%arg0: i32, %arg1: i32, %arg2: i32) -> (i32, i32, i32) {
    %c0_i32 = arith.constant 0 : i32
    %c0_i32_0 = arith.constant 0 : i32
    return %arg0, %arg2, %c0_i32 : i32, i32, i32
  }
  func.func @transform_3(%arg0: i32, %arg1: i32, %arg2: i32) -> (i32, i32, i32) {
    %c0_i32 = arith.constant 0 : i32
    %c0_i32_0 = arith.constant 0 : i32
    return %arg0, %c0_i32, %arg2 : i32, i32, i32
  }
  func.func @transform_4(%arg0: i32, %arg1: i32, %arg2: i32) -> (i32, i32, i32) {
    %c0_i32 = arith.constant 0 : i32
    %c0_i32_0 = arith.constant 0 : i32
    return %arg0, %arg1, %c0_i32 : i32, i32, i32
  }
}

module attributes {stable_mosaic.version = 11 : i64} {
  func.func @_linear_kernel(%arg0: i32, %arg1: i32, %arg2: i32, %arg3: memref<16x32xbf16, #tpu.memory_space<vmem>>, %arg4: memref<32x16xbf16, #tpu.memory_space<vmem>>, %arg5: memref<1x16xf32, #tpu.memory_space<vmem>>, %arg6: memref<16x16xf32, #tpu.memory_space<vmem>>, %arg7: memref<16x16xf32, #tpu.memory_space<vmem>>) attributes {dimension_semantics = [#tpu.dimension_semantics<parallel>, #tpu.dimension_semantics<parallel>, #tpu.dimension_semantics<arbitrary>], iteration_bounds = array<i64: 1, 1, 1>, scalar_prefetch = 0 : i64, scratch_operands = 1 : i64, tpu.core_type = #tpu.core_type<tc>, window_params = [{transform_indices = @transform_0, window_bounds = array<i64: 16, 32>}, {transform_indices = @transform_1, window_bounds = array<i64: 32, 16>}, {transform_indices = @transform_2, window_bounds = array<i64: 1, 16>}, {transform_indices = @transform_3, window_bounds = array<i64: 16, 16>}]} {
    %c0_i32 = arith.constant 0 : i32
    %0 = arith.cmpi eq, %arg2, %c0_i32 : i32
    %1 = arith.extui %0 : i1 to i32
    %c0_i32_0 = arith.constant 0 : i32
    %2 = arith.cmpi ne, %1, %c0_i32_0 : i32
    scf.if %2 {
      %cst_10 = arith.constant 0.000000e+00 : f32
      %12 = vector.broadcast %cst_10 : f32 to vector<16x16xf32>
      %c0_11 = arith.constant 0 : index
      %c0_12 = arith.constant 0 : index
      %13 = vector.load %arg7[%c0_11, %c0_12] : memref<16x16xf32, #tpu.memory_space<vmem>>, vector<16x16xf32>
      tpu.vector_store %arg7[%c0_11, %c0_12], %12 {strides = array<i32>} : memref<16x16xf32, #tpu.memory_space<vmem>>, vector<16x16xf32>,
    } else {
    }
    %c0 = arith.constant 0 : index
    %c0_1 = arith.constant 0 : index
    %3 = vector.load %arg7[%c0, %c0_1] : memref<16x16xf32, #tpu.memory_space<vmem>>, vector<16x16xf32>
    %c0_2 = arith.constant 0 : index
    %c0_3 = arith.constant 0 : index
    %4 = vector.load %arg3[%c0_2, %c0_3] : memref<16x32xbf16, #tpu.memory_space<vmem>>, vector<16x32xbf16>
    %c0_4 = arith.constant 0 : index
    %c0_5 = arith.constant 0 : index
    %5 = vector.load %arg4[%c0_4, %c0_5] : memref<32x16xbf16, #tpu.memory_space<vmem>>, vector<32x16xbf16>
    %cst = arith.constant dense<0.000000e+00> : vector<16x16xf32>
    %6 = tpu.matmul %4, %5, %cst {dimension_numbers = #tpu.dot_dimension_numbers<[1], [0], [0], [1], [0, 0, 1, 1], [], []>} : vector<16x32xbf16>, vector<32x16xbf16>, vector<16x16xf32> -> vector<16x16xf32>
    %7 = arith.addf %3, %6 : vector<16x16xf32>
    %c0_6 = arith.constant 0 : index
    %c0_7 = arith.constant 0 : index
    %8 = vector.load %arg7[%c0_6, %c0_7] : memref<16x16xf32, #tpu.memory_space<vmem>>, vector<16x16xf32>
    tpu.vector_store %arg7[%c0_6, %c0_7], %7 {strides = array<i32>} : memref<16x16xf32, #tpu.memory_space<vmem>>, vector<16x16xf32>,
    %c0_i32_8 = arith.constant 0 : i32
    %9 = arith.cmpi eq, %arg2, %c0_i32_8 : i32
    %10 = arith.extui %9 : i1 to i32
    %c0_i32_9 = arith.constant 0 : i32
    %11 = arith.cmpi ne, %10, %c0_i32_9 : i32
    scf.if %11 {
      %c0_10 = arith.constant 0 : index
      %c0_11 = arith.constant 0 : index
      %12 = vector.load %arg7[%c0_10, %c0_11] : memref<16x16xf32, #tpu.memory_space<vmem>>, vector<16x16xf32>
      %c0_12 = arith.constant 0 : index
      %c0_13 = arith.constant 0 : index
      %13 = vector.load %arg5[%c0_12, %c0_13] : memref<1x16xf32, #tpu.memory_space<vmem>>, vector<1x16xf32>
      %14 = vector.broadcast %13 : vector<1x16xf32> to vector<16x16xf32>
      %15 = arith.addf %12, %14 : vector<16x16xf32>
      %c0_14 = arith.constant 0 : index
      %c0_15 = arith.constant 0 : index
      %16 = vector.load %arg6[%c0_14, %c0_15] : memref<16x16xf32, #tpu.memory_space<vmem>>, vector<16x16xf32>
      tpu.vector_store %arg6[%c0_14, %c0_15], %15 {strides = array<i32>} : memref<16x16xf32, #tpu.memory_space<vmem>>, vector<16x16xf32>,
    } else {
    }
    return
  }
  func.func @transform_0(%arg0: i32, %arg1: i32, %arg2: i32) -> (i32, i32) {
    %c0_i32 = arith.constant 0 : i32
    return %arg0, %arg2 : i32, i32
  }
  func.func @transform_1(%arg0: i32, %arg1: i32, %arg2: i32) -> (i32, i32) {
    %c0_i32 = arith.constant 0 : i32
    return %arg2, %arg1 : i32, i32
  }
  func.func @transform_2(%arg0: i32, %arg1: i32, %arg2: i32) -> (i32, i32) {
    %c0_i32 = arith.constant 0 : i32
    %c0_i32_0 = arith.constant 0 : i32
    return %c0_i32, %arg1 : i32, i32
  }
  func.func @transform_3(%arg0: i32, %arg1: i32, %arg2: i32) -> (i32, i32) {
    %c0_i32 = arith.constant 0 : i32
    return %arg0, %arg1 : i32, i32
  }
}

</mosaic_0001>

<llo_original>
// kernel: transformer_forward.36
$region0: #{transformer_forward.36}
  #allocation0 [shape = 'u32[]', space=smem, size = 0x4, offset = 0x4, fixed_abs, tag = 'smem constant byte address 0x4 - core index']
  #allocation1 [shape = 'u32[144,128]{1,0:T(1,128)}', space=vmem, size = 0x12000, scoped, tag = 'internal scratch']
  #allocation2 [shape = 'f32[16,32]{1,0:T(8,128)}', space=vmem, size = 0x2000, scoped, tag = 'scratch operand']
  %s0 = inlined_call_operand.hbm [shape: bf16[16,32], index: 0, kind: input, shape index: {}]
  %s1 = inlined_call_operand.hbm [shape: bf16[32,32], index: 1, kind: input, shape index: {}]
  %s2 = inlined_call_operand.hbm [shape: f32[1,32], index: 2, kind: input, shape index: {}]
  %s3 = inlined_call_operand.hbm [shape: bf16[16,32], index: 3, kind: output, shape index: {}]
  %s4 = sld [smem:[#allocation0]]
  $region42: #{transformer_forward.36} parent=0
    _
  %s6 = ssub.s32 1, %s4
  %s7 = scalar_select 0, %s6, %s4
  $region1: #{transformer_forward.36} parent=0
    #allocation3 [shape = 'u8[4096]{0}', space=vmem, size = 0x1000, scoped, tag = 'input window, operand 0, single buffered']
    #allocation4 [shape = 's32[1]{0}', space=sflag, size = 0x4, scoped, tag = 'scoped memory for transformer_forward.36']
    #allocation5 [shape = 's32[1]{0}', space=sflag, size = 0x4, scoped, tag = 'scoped memory for transformer_forward.36']
    #allocation6 [shape = 'u8[8192]{0}', space=vmem, size = 0x2000, scoped, tag = 'input window, operand 1, single buffered']
    #allocation7 [shape = 's32[1]{0}', space=sflag, size = 0x4, scoped, tag = 'scoped memory for transformer_forward.36']
    #allocation8 [shape = 'u8[512]{0}', space=vmem, size = 0x400, scoped, tag = 'input window, operand 2, single buffered']
    #allocation9 [shape = 'u8[4096]{0}', space=vmem, size = 0x1000, scoped, tag = 'output window, operand 0, single buffered']
    %8 = vsyncpa [#allocation4], 0
    %9 = vsyncpa [#allocation7], 0
    %10 = vsyncpa [#allocation5], 0
    // Predicated region
    $region2: #{transformer_forward.36} parent=1 // pred_check
      _
    $region3: #{transformer_forward.36} parent=1 // pred_check_branch
      %12 = sbr.rel (0) target = $region5
    $region4: #{transformer_forward.36} parent=1 // pred_region
      %s14 = ssub.s32 128, 128
      %15 = vsyncadd [#allocation4], %s14
      %s16 = sshll.u32 [#allocation3], 4
      %s17 = int_to_ptr.vmem [resolvable:$true] %s16
      %22 = dma.hbm_to_vmem [thread:$0]  %s0, 128, %s17, [#allocation4], 64, 64, 4
    $region5: #{transformer_forward.36} parent=1 // pred_fallthru
      _
    // Predicated region
    $region6: #{transformer_forward.36} parent=1 // pred_check
      _
    $region7: #{transformer_forward.36} parent=1 // pred_check_branch
      %24 = sbr.rel (0) target = $region9
    $region8: #{transformer_forward.36} parent=1 // pred_region
      %s26 = ssub.s32 256, 256
      %27 = vsyncadd [#allocation7], %s26
      %s28 = sshll.u32 [#allocation6], 4
      %s29 = int_to_ptr.vmem [resolvable:$true] %s28
      %34 = dma.hbm_to_vmem [thread:$0]  %s1, 256, %s29, [#allocation7], 64, 64, 4
    $region9: #{transformer_forward.36} parent=1 // pred_fallthru
      _
    // Predicated region
    $region10: #{transformer_forward.36} parent=1 // pred_check
      _
    $region11: #{transformer_forward.36} parent=1 // pred_check_branch
      %36 = sbr.rel (0) target = $region13
    $region12: #{transformer_forward.36} parent=1 // pred_region
      %s38 = ssub.s32 16, 16
      %39 = vsyncadd [#allocation7], %s38
      %s41 = sshll.u32 [#allocation8], 4
      %s42 = int_to_ptr.vmem [resolvable:$true] %s41
      %44 = dma.hbm_to_vmem [thread:$0]  %s2, 16, %s42, [#allocation7]
    $region13: #{transformer_forward.36} parent=1 // pred_fallthru
      _
    // Predicated region
    $region14: #{transformer_forward.36} parent=1 // pred_check
      _
    $region15: #{transformer_forward.36} parent=1 // pred_check_branch
      %46 = sbr.rel (0) target = $region17
    $region16: #{transformer_forward.36} parent=1 // pred_region
      %47 = dma.done [#allocation4], 128
    $region17: #{transformer_forward.36} parent=1 // pred_fallthru
      _
    // Predicated region
    $region18: #{transformer_forward.36} parent=1 // pred_check
      _
    $region19: #{transformer_forward.36} parent=1 // pred_check_branch
      %49 = sbr.rel (0) target = $region21
    $region20: #{transformer_forward.36} parent=1 // pred_region
      %50 = dma.done [#allocation7], 256
    $region21: #{transformer_forward.36} parent=1 // pred_fallthru
      _
    // Predicated region
    $region22: #{transformer_forward.36} parent=1 // pred_check
      _
    $region23: #{transformer_forward.36} parent=1 // pred_check_branch
      %52 = sbr.rel (0) target = $region25
    $region24: #{transformer_forward.36} parent=1 // pred_region
      %53 = dma.done [#allocation7], 16
    $region25: #{transformer_forward.36} parent=1 // pred_fallthru
      _
    %p55 = scmp.eq.s32.totalorder 0, 0
    // Predicated region
    $region26: #{transformer_forward.36} parent=1 // pred_check
      %p56 = pneg %p55
    $region27: #{transformer_forward.36} parent=1 // pred_check_branch
      %58 = sbr.rel (%p56) target = $region29
    $region28: #{transformer_forward.36} parent=1 // pred_region
      %vm59 = vcmask 261120
      %60 = vst.msk [vmem:[#allocation2] sm:$0xff] %vm59, 0.0
      %61 = vst.msk [vmem:[#allocation2 + $0x8] sm:$0xff] %vm59, 0.0
    $region29: #{transformer_forward.36} parent=1 // pred_fallthru
      _
    %v62 = vld [vmem:[#allocation2] sm:$0xff]
    %v63 = vld [vmem:[#allocation2 + $0x8] sm:$0xff]
    %v64 = vld [vmem:[#allocation3] sm:$0xf]
    %v65 = vld [vmem:[#allocation3 + $0x4] sm:$0xf]
    %v66 = vld [vmem:[#allocation6] sm:$0xf]
    %v67 = vld [vmem:[#allocation6 + $0x4] sm:$0xf]
    %v68 = vld [vmem:[#allocation6 + $0x8] sm:$0xf]
    %v69 = vld [vmem:[#allocation6 + $0xc] sm:$0xf]
    %v72 = vunpack.c.l.b16 %v64
    %v73 = vunpack.c.l.b16 %v65
    %v74 = vpack.c.b16 %v73, %v72
    %v79 = vunpack.c.l.b16 %v66
    %v80 = vunpack.c.l.b16 %v67
    %v81 = vunpack.c.l.b16 %v68
    %v82 = vunpack.c.l.b16 %v69
    %v83 = vpack.c.b16 %v80, %v79
    %v84 = vpack.c.b16 %v82, %v81
    %vm87 = vcmask 261120
    %v89 = vsel %vm87, %v74, 0
    %91 = vmatprep.subr.bf16.mxu0 0
    %92 = vmatpush1.bf16.msra.mxu0 %v83
    %93 = vmatprep.subr.bf16.mxu0 0
    %94 = vmatpush1.bf16.msra.mxu0 %v84
    %95 = vmatprep.subr.bf16.mxu0 0
    %96 = vmatpush1.bf16.msra.mxu0 0
    %97 = vmatprep.subr.bf16.mxu0 0
    %98 = vmatpush1.bf16.msra.mxu0 0
    %99 = vmatprep.subr.bf16.mxu0 0
    %100 = vmatpush1.bf16.msra.mxu0 0
    %101 = vmatprep.subr.bf16.mxu0 0
    %102 = vmatpush1.bf16.msra.mxu0 0
    %103 = vmatprep.subr.bf16.mxu0 0
    %104 = vmatpush1.bf16.msra.mxu0 0
    %105 = vmatprep.subr.bf16.mxu0 0
    %106 = vmatpush1.bf16.msra.mxu0 0
    %107 = vmatprep.subr.bf16.mxu0 0
    %108 = vmatpush1.bf16.msra.mxu0 0
    %109 = vmatprep.subr.bf16.mxu0 0
    %110 = vmatpush1.bf16.msra.mxu0 0
    %111 = vmatprep.subr.bf16.mxu0 0
    %112 = vmatpush1.bf16.msra.mxu0 0
    %113 = vmatprep.subr.bf16.mxu0 0
    %114 = vmatpush1.bf16.msra.mxu0 0
    %115 = vmatprep.subr.bf16.mxu0 0
    %116 = vmatpush1.bf16.msra.mxu0 0
    %117 = vmatprep.subr.bf16.mxu0 0
    %118 = vmatpush1.bf16.msra.mxu0 0
    %119 = vmatprep.subr.bf16.mxu0 0
    %120 = vmatpush1.bf16.msra.mxu0 0
    %121 = vmatprep.subr.bf16.mxu0 0
    %122 = vmatpush1.bf16.msra.mxu0 0
    %123 = vmatprep.mubr.bf16.mxu0 0
    %124 = vmatmul.mubr.bf16.gmra.mrb[0].mxu0 %v89
    %v125 = vpop.f32.mrb[0].mxu0
    %v126 = vadd.f32 0.0, %v125
    %v127 = vpop.f32.mrb[0].mxu0
    %v128 = vpop.f32.mrb[0].mxu0
    %v129 = vadd.f32 0.0, %v128
    %v130 = vpop.f32.mrb[0].mxu0
    %131 = vdwg.mxu0
    %v132 = vadd.f32 %v62, %v126
    %v133 = vadd.f32 %v63, %v129
    %134 = vst.msk [vmem:[#allocation2] sm:$0xff] %vm87, %v132
    %135 = vst.msk [vmem:[#allocation2 + $0x8] sm:$0xff] %vm87, %v133
    // Predicated region
    $region30: #{transformer_forward.36} parent=1 // pred_check
      %p136 = pneg %p55
    $region31: #{transformer_forward.36} parent=1 // pred_check_branch
      %138 = sbr.rel (%p136) target = $region33
    $region32: #{transformer_forward.36} parent=1 // pred_region
      %v139 = vld [vmem:[#allocation2] sm:$0xff]
      %v140 = vld [vmem:[#allocation2 + $0x8] sm:$0xff]
      %v141 = vld [vmem:[#allocation8] sm:$0x1]
      %v143 = vlaneseq
      %v144 = vshrl.u32 %v143, 7
      %v145 = vsub.s32 0, %v144
      %v146 = vrot.slane %v141, %v145
      %v148 = vadd.f32 %v139, %v146
      %v149 = vadd.f32 %v140, %v146
      %v150 = vpack.c.bf16 %v149, %v148
      %v152 = vunpack.c.l.b16 %v150
      %v153 = vunpack.c.h.b16 %v150
      %v154 = vpack.c.b16 %v152, %v152
      %v155 = vpack.c.b16 %v153, %v153
      %vm158 = vcmask 257024
      %159 = vst.msk [vmem:[#allocation9] sm:$0xf] %vm158, %v154
      %160 = vst.msk [vmem:[#allocation9 + $0x4] sm:$0xf] %vm158, %v155
    $region33: #{transformer_forward.36} parent=1 // pred_fallthru
      _
    // Predicated region
    $region34: #{transformer_forward.36} parent=1 // pred_check
      _
    $region35: #{transformer_forward.36} parent=1 // pred_check_branch
      %162 = sbr.rel (0) target = $region37
    $region36: #{transformer_forward.36} parent=1 // pred_region
      %s164 = ssub.s32 128, 128
      %165 = vsyncadd [#allocation5], %s164
      %s166 = sshll.u32 [#allocation9], 4
      %s167 = int_to_ptr.vmem [resolvable:$true] %s166
      %172 = dma.vmem_to_hbm [thread:$0]  %s167, 128, %s3, [#allocation5], 64, 64, 4
    $region37: #{transformer_forward.36} parent=1 // pred_fallthru
      _
    // Predicated region
    $region38: #{transformer_forward.36} parent=1 // pred_check
      _
    $region39: #{transformer_forward.36} parent=1 // pred_check_branch
      %174 = sbr.rel (0) target = $region41
    $region40: #{transformer_forward.36} parent=1 // pred_region
      %175 = dma.done [#allocation5], 128
    $region41: #{transformer_forward.36} parent=1 // pred_fallthru
      _
    %176 = vsyncpa [#allocation4], 1
    %177 = vsyncpa [#allocation7], 1
    %178 = vsyncpa [#allocation5], 1

// kernel: transformer_forward.33
$region0: #{transformer_forward.33}
  #allocation0 [shape = 'u32[]', space=smem, size = 0x4, offset = 0x4, fixed_abs, tag = 'smem constant byte address 0x4 - core index']
  #allocation1 [shape = 'u32[144,128]{1,0:T(1,128)}', space=vmem, size = 0x12000, scoped, tag = 'internal scratch']
  #allocation2 [shape = 'f32[16,96]{1,0:T(8,128)}', space=vmem, size = 0x2000, scoped, tag = 'scratch operand']
  %s0 = inlined_call_operand.hbm [shape: bf16[16,32], index: 0, kind: input, shape index: {}]
  %s1 = inlined_call_operand.hbm [shape: bf16[32,96], index: 1, kind: input, shape index: {}]
  %s2 = inlined_call_operand.hbm [shape: f32[1,96], index: 2, kind: input, shape index: {}]
  %s3 = inlined_call_operand.hbm [shape: bf16[16,96], index: 3, kind: output, shape index: {}]
  %s4 = sld [smem:[#allocation0]]
  $region42: #{transformer_forward.33} parent=0
    _
  %s6 = ssub.s32 1, %s4
  %s7 = scalar_select 0, %s6, %s4
  $region1: #{transformer_forward.33} parent=0
    #allocation3 [shape = 'u8[4096]{0}', space=vmem, size = 0x1000, scoped, tag = 'input window, operand 0, single buffered']
    #allocation4 [shape = 's32[1]{0}', space=sflag, size = 0x4, scoped, tag = 'scoped memory for transformer_forward.33']
    #allocation5 [shape = 's32[1]{0}', space=sflag, size = 0x4, scoped, tag = 'scoped memory for transformer_forward.33']
    #allocation6 [shape = 'u8[8192]{0}', space=vmem, size = 0x2000, scoped, tag = 'input window, operand 1, single buffered']
    #allocation7 [shape = 's32[1]{0}', space=sflag, size = 0x4, scoped, tag = 'scoped memory for transformer_forward.33']
    #allocation8 [shape = 'u8[512]{0}', space=vmem, size = 0x400, scoped, tag = 'input window, operand 2, single buffered']
    #allocation9 [shape = 'u8[4096]{0}', space=vmem, size = 0x1000, scoped, tag = 'output window, operand 0, single buffered']
    %8 = vsyncpa [#allocation4], 0
    %9 = vsyncpa [#allocation7], 0
    %10 = vsyncpa [#allocation5], 0
    // Predicated region
    $region2: #{transformer_forward.33} parent=1 // pred_check
      _
    $region3: #{transformer_forward.33} parent=1 // pred_check_branch
      %12 = sbr.rel (0) target = $region5
    $region4: #{transformer_forward.33} parent=1 // pred_region
      %s14 = ssub.s32 128, 128
      %15 = vsyncadd [#allocation4], %s14
      %s16 = sshll.u32 [#allocation3], 4
      %s17 = int_to_ptr.vmem [resolvable:$true] %s16
      %22 = dma.hbm_to_vmem [thread:$0]  %s0, 128, %s17, [#allocation4], 64, 64, 4
    $region5: #{transformer_forward.33} parent=1 // pred_fallthru
      _
    // Predicated region
    $region6: #{transformer_forward.33} parent=1 // pred_check
      _
    $region7: #{transformer_forward.33} parent=1 // pred_check_branch
      %24 = sbr.rel (0) target = $region9
    $region8: #{transformer_forward.33} parent=1 // pred_region
      %s26 = ssub.s32 256, 256
      %27 = vsyncadd [#allocation7], %s26
      %s28 = sshll.u32 [#allocation6], 4
      %s29 = int_to_ptr.vmem [resolvable:$true] %s28
      %34 = dma.hbm_to_vmem [thread:$0]  %s1, 256, %s29, [#allocation7], 64, 64, 4
    $region9: #{transformer_forward.33} parent=1 // pred_fallthru
      _
    // Predicated region
    $region10: #{transformer_forward.33} parent=1 // pred_check
      _
    $region11: #{transformer_forward.33} parent=1 // pred_check_branch
      %36 = sbr.rel (0) target = $region13
    $region12: #{transformer_forward.33} parent=1 // pred_region
      %s38 = ssub.s32 16, 16
      %39 = vsyncadd [#allocation7], %s38
      %s41 = sshll.u32 [#allocation8], 4
      %s42 = int_to_ptr.vmem [resolvable:$true] %s41
      %44 = dma.hbm_to_vmem [thread:$0]  %s2, 16, %s42, [#allocation7]
    $region13: #{transformer_forward.33} parent=1 // pred_fallthru
      _
    // Predicated region
    $region14: #{transformer_forward.33} parent=1 // pred_check
      _
    $region15: #{transformer_forward.33} parent=1 // pred_check_branch
      %46 = sbr.rel (0) target = $region17
    $region16: #{transformer_forward.33} parent=1 // pred_region
      %47 = dma.done [#allocation4], 128
    $region17: #{transformer_forward.33} parent=1 // pred_fallthru
      _
    // Predicated region
    $region18: #{transformer_forward.33} parent=1 // pred_check
      _
    $region19: #{transformer_forward.33} parent=1 // pred_check_branch
      %49 = sbr.rel (0) target = $region21
    $region20: #{transformer_forward.33} parent=1 // pred_region
      %50 = dma.done [#allocation7], 256
    $region21: #{transformer_forward.33} parent=1 // pred_fallthru
      _
    // Predicated region
    $region22: #{transformer_forward.33} parent=1 // pred_check
      _
    $region23: #{transformer_forward.33} parent=1 // pred_check_branch
      %52 = sbr.rel (0) target = $region25
    $region24: #{transformer_forward.33} parent=1 // pred_region
      %53 = dma.done [#allocation7], 16
    $region25: #{transformer_forward.33} parent=1 // pred_fallthru
      _
    %p55 = scmp.eq.s32.totalorder 0, 0
    // Predicated region
    $region26: #{transformer_forward.33} parent=1 // pred_check
      %p56 = pneg %p55
    $region27: #{transformer_forward.33} parent=1 // pred_check_branch
      %58 = sbr.rel (%p56) target = $region29
    $region28: #{transformer_forward.33} parent=1 // pred_region
      %vm59 = vcmask 785408
      %60 = vst.msk [vmem:[#allocation2] sm:$0xff] %vm59, 0.0
      %61 = vst.msk [vmem:[#allocation2 + $0x8] sm:$0xff] %vm59, 0.0
    $region29: #{transformer_forward.33} parent=1 // pred_fallthru
      _
    %v62 = vld [vmem:[#allocation2] sm:$0xff]
    %v63 = vld [vmem:[#allocation2 + $0x8] sm:$0xff]
    %v64 = vld [vmem:[#allocation3] sm:$0xf]
    %v65 = vld [vmem:[#allocation3 + $0x4] sm:$0xf]
    %v66 = vld [vmem:[#allocation6] sm:$0xf]
    %v67 = vld [vmem:[#allocation6 + $0x4] sm:$0xf]
    %v68 = vld [vmem:[#allocation6 + $0x8] sm:$0xf]
    %v69 = vld [vmem:[#allocation6 + $0xc] sm:$0xf]
    %v72 = vunpack.c.l.b16 %v64
    %v73 = vunpack.c.l.b16 %v65
    %v74 = vpack.c.b16 %v73, %v72
    %v79 = vunpack.c.l.b16 %v66
    %v80 = vunpack.c.l.b16 %v67
    %v81 = vunpack.c.l.b16 %v68
    %v82 = vunpack.c.l.b16 %v69
    %v83 = vpack.c.b16 %v80, %v79
    %v84 = vpack.c.b16 %v82, %v81
    %vm87 = vcmask 261120
    %v89 = vsel %vm87, %v74, 0
    %91 = vmatprep.subr.bf16.mxu0 0
    %92 = vmatpush1.bf16.msra.mxu0 %v83
    %93 = vmatprep.subr.bf16.mxu0 0
    %94 = vmatpush1.bf16.msra.mxu0 %v84
    %95 = vmatprep.subr.bf16.mxu0 0
    %96 = vmatpush1.bf16.msra.mxu0 0
    %97 = vmatprep.subr.bf16.mxu0 0
    %98 = vmatpush1.bf16.msra.mxu0 0
    %99 = vmatprep.subr.bf16.mxu0 0
    %100 = vmatpush1.bf16.msra.mxu0 0
    %101 = vmatprep.subr.bf16.mxu0 0
    %102 = vmatpush1.bf16.msra.mxu0 0
    %103 = vmatprep.subr.bf16.mxu0 0
    %104 = vmatpush1.bf16.msra.mxu0 0
    %105 = vmatprep.subr.bf16.mxu0 0
    %106 = vmatpush1.bf16.msra.mxu0 0
    %107 = vmatprep.subr.bf16.mxu0 0
    %108 = vmatpush1.bf16.msra.mxu0 0
    %109 = vmatprep.subr.bf16.mxu0 0
    %110 = vmatpush1.bf16.msra.mxu0 0
    %111 = vmatprep.subr.bf16.mxu0 0
    %112 = vmatpush1.bf16.msra.mxu0 0
    %113 = vmatprep.subr.bf16.mxu0 0
    %114 = vmatpush1.bf16.msra.mxu0 0
    %115 = vmatprep.subr.bf16.mxu0 0
    %116 = vmatpush1.bf16.msra.mxu0 0
    %117 = vmatprep.subr.bf16.mxu0 0
    %118 = vmatpush1.bf16.msra.mxu0 0
    %119 = vmatprep.subr.bf16.mxu0 0
    %120 = vmatpush1.bf16.msra.mxu0 0
    %121 = vmatprep.subr.bf16.mxu0 0
    %122 = vmatpush1.bf16.msra.mxu0 0
    %123 = vmatprep.mubr.bf16.mxu0 0
    %124 = vmatmul.mubr.bf16.gmra.mrb[0].mxu0 %v89
    %v125 = vpop.f32.mrb[0].mxu0
    %v126 = vadd.f32 0.0, %v125
    %v127 = vpop.f32.mrb[0].mxu0
    %v128 = vpop.f32.mrb[0].mxu0
    %v129 = vadd.f32 0.0, %v128
    %v130 = vpop.f32.mrb[0].mxu0
    %131 = vdwg.mxu0
    %v132 = vadd.f32 %v62, %v126
    %v133 = vadd.f32 %v63, %v129
    %vm134 = vcmask 785408
    %135 = vst.msk [vmem:[#allocation2] sm:$0xff] %vm134, %v132
    %136 = vst.msk [vmem:[#allocation2 + $0x8] sm:$0xff] %vm134, %v133
    // Predicated region
    $region30: #{transformer_forward.33} parent=1 // pred_check
      %p137 = pneg %p55
    $region31: #{transformer_forward.33} parent=1 // pred_check_branch
      %139 = sbr.rel (%p137) target = $region33
    $region32: #{transformer_forward.33} parent=1 // pred_region
      %v140 = vld [vmem:[#allocation2] sm:$0xff]
      %v141 = vld [vmem:[#allocation2 + $0x8] sm:$0xff]
      %v142 = vld [vmem:[#allocation8] sm:$0x1]
      %v144 = vlaneseq
      %v145 = vshrl.u32 %v144, 7
      %v146 = vsub.s32 0, %v145
      %v147 = vrot.slane %v142, %v146
      %v149 = vadd.f32 %v140, %v147
      %v150 = vadd.f32 %v141, %v147
      %v151 = vpack.c.bf16 %v150, %v149
      %v153 = vunpack.c.l.b16 %v151
      %v154 = vunpack.c.h.b16 %v151
      %v155 = vpack.c.b16 %v153, %v153
      %v156 = vpack.c.b16 %v154, %v154
      %vm159 = vcmask 781312
      %160 = vst.msk [vmem:[#allocation9] sm:$0xf] %vm159, %v155
      %161 = vst.msk [vmem:[#allocation9 + $0x4] sm:$0xf] %vm159, %v156
    $region33: #{transformer_forward.33} parent=1 // pred_fallthru
      _
    // Predicated region
    $region34: #{transformer_forward.33} parent=1 // pred_check
      _
    $region35: #{transformer_forward.33} parent=1 // pred_check_branch
      %163 = sbr.rel (0) target = $region37
    $region36: #{transformer_forward.33} parent=1 // pred_region
      %s165 = ssub.s32 128, 128
      %166 = vsyncadd [#allocation5], %s165
      %s167 = sshll.u32 [#allocation9], 4
      %s168 = int_to_ptr.vmem [resolvable:$true] %s167
      %173 = dma.vmem_to_hbm [thread:$0]  %s168, 128, %s3, [#allocation5], 64, 64, 4
    $region37: #{transformer_forward.33} parent=1 // pred_fallthru
      _
    // Predicated region
    $region38: #{transformer_forward.33} parent=1 // pred_check
      _
    $region39: #{transformer_forward.33} parent=1 // pred_check_branch
      %175 = sbr.rel (0) target = $region41
    $region40: #{transformer_forward.33} parent=1 // pred_region
      %176 = dma.done [#allocation5], 128
    $region41: #{transformer_forward.33} parent=1 // pred_fallthru
      _
    %177 = vsyncpa [#allocation4], 1
    %178 = vsyncpa [#allocation7], 1
    %179 = vsyncpa [#allocation5], 1

// kernel: transformer_forward.35
$region0: #{transformer_forward.35}
  #allocation0 [shape = 'u32[]', space=smem, size = 0x4, offset = 0x4, fixed_abs, tag = 'smem constant byte address 0x4 - core index']
  #allocation1 [shape = 'u32[144,128]{1,0:T(1,128)}', space=vmem, size = 0x12000, scoped, tag = 'internal scratch']
  #allocation2 [shape = 'f32[16,32]{1,0:T(8,128)}', space=vmem, size = 0x2000, scoped, tag = 'scratch operand']
  %s0 = inlined_call_operand.hbm [shape: bf16[16,32], index: 0, kind: input, shape index: {}, may-alias: {0,3}]
  %s1 = inlined_call_operand.hbm [shape: bf16[32,32], index: 1, kind: input, shape index: {}]
  %s2 = inlined_call_operand.hbm [shape: f32[1,32], index: 2, kind: input, shape index: {}]
  %s3 = inlined_call_operand.hbm [shape: bf16[16,32], index: 3, kind: input, shape index: {}, may-alias: {0,3}]
  %s4 = inlined_call_operand.hbm [shape: f32[1,32], index: 4, kind: input, shape index: {}]
  %s5 = inlined_call_operand.hbm [shape: f32[1,32], index: 5, kind: input, shape index: {}]
  %s6 = inlined_call_operand.hbm [shape: bf16[16,32], index: 6, kind: output, shape index: {}]
  %s7 = sld [smem:[#allocation0]]
  $region66: #{transformer_forward.35} parent=0
    _
  %s9 = ssub.s32 1, %s7
  %s10 = scalar_select 0, %s9, %s7
  $region1: #{transformer_forward.35} parent=0
    #allocation3 [shape = 'u8[4096]{0}', space=vmem, size = 0x1000, scoped, tag = 'input window, operand 0, single buffered']
    #allocation4 [shape = 's32[1]{0}', space=sflag, size = 0x4, scoped, tag = 'scoped memory for transformer_forward.35']
    #allocation5 [shape = 's32[1]{0}', space=sflag, size = 0x4, scoped, tag = 'scoped memory for transformer_forward.35']
    #allocation6 [shape = 'u8[8192]{0}', space=vmem, size = 0x2000, scoped, tag = 'input window, operand 1, single buffered']
    #allocation7 [shape = 's32[1]{0}', space=sflag, size = 0x4, scoped, tag = 'scoped memory for transformer_forward.35']
    #allocation8 [shape = 'u8[512]{0}', space=vmem, size = 0x400, scoped, tag = 'input window, operand 2, single buffered']
    #allocation9 [shape = 'u8[4096]{0}', space=vmem, size = 0x1000, scoped, tag = 'input window, operand 3, single buffered']
    #allocation10 [shape = 's32[1]{0}', space=sflag, size = 0x4, scoped, tag = 'scoped memory for transformer_forward.35']
    #allocation11 [shape = 'u8[512]{0}', space=vmem, size = 0x400, scoped, tag = 'input window, operand 4, single buffered']
    #allocation12 [shape = 'u8[512]{0}', space=vmem, size = 0x400, scoped, tag = 'input window, operand 5, single buffered']
    #allocation13 [shape = 's32[1]{0}', space=sflag, size = 0x4, scoped, tag = 'scoped memory for transformer_forward.35']
    #allocation14 [shape = 'u8[4096]{0}', space=vmem, size = 0x1000, scoped, tag = 'output window, operand 0, single buffered']
    %11 = vsyncpa [#allocation4], 0
    %12 = vsyncpa [#allocation7], 0
    %13 = vsyncpa [#allocation10], 0
    %14 = vsyncpa [#allocation13], 0
    %15 = vsyncpa [#allocation5], 0
    // Predicated region
    $region2: #{transformer_forward.35} parent=1 // pred_check
      _
    $region3: #{transformer_forward.35} parent=1 // pred_check_branch
      %17 = sbr.rel (0) target = $region5
    $region4: #{transformer_forward.35} parent=1 // pred_region
      %s19 = ssub.s32 128, 128
      %20 = vsyncadd [#allocation4], %s19
      %s21 = sshll.u32 [#allocation3], 4
      %s22 = int_to_ptr.vmem [resolvable:$true] %s21
      %27 = dma.hbm_to_vmem [thread:$0]  %s0, 128, %s22, [#allocation4], 64, 64, 4
    $region5: #{transformer_forward.35} parent=1 // pred_fallthru
      _
    // Predicated region
    $region6: #{transformer_forward.35} parent=1 // pred_check
      _
    $region7: #{transformer_forward.35} parent=1 // pred_check_branch
      %29 = sbr.rel (0) target = $region9
    $region8: #{transformer_forward.35} parent=1 // pred_region
      %s31 = ssub.s32 256, 256
      %32 = vsyncadd [#allocation7], %s31
      %s33 = sshll.u32 [#allocation6], 4
      %s34 = int_to_ptr.vmem [resolvable:$true] %s33
      %39 = dma.hbm_to_vmem [thread:$0]  %s1, 256, %s34, [#allocation7], 64, 64, 4
    $region9: #{transformer_forward.35} parent=1 // pred_fallthru
      _
    // Predicated region
    $region10: #{transformer_forward.35} parent=1 // pred_check
      _
    $region11: #{transformer_forward.35} parent=1 // pred_check_branch
      %41 = sbr.rel (0) target = $region13
    $region12: #{transformer_forward.35} parent=1 // pred_region
      %s43 = ssub.s32 16, 16
      %44 = vsyncadd [#allocation7], %s43
      %s46 = sshll.u32 [#allocation8], 4
      %s47 = int_to_ptr.vmem [resolvable:$true] %s46
      %49 = dma.hbm_to_vmem [thread:$0]  %s2, 16, %s47, [#allocation7]
    $region13: #{transformer_forward.35} parent=1 // pred_fallthru
      _
    // Predicated region
    $region14: #{transformer_forward.35} parent=1 // pred_check
      _
    $region15: #{transformer_forward.35} parent=1 // pred_check_branch
      %51 = sbr.rel (0) target = $region17
    $region16: #{transformer_forward.35} parent=1 // pred_region
      %s53 = ssub.s32 128, 128
      %54 = vsyncadd [#allocation10], %s53
      %s55 = sshll.u32 [#allocation9], 4
      %s56 = int_to_ptr.vmem [resolvable:$true] %s55
      %61 = dma.hbm_to_vmem [thread:$0]  %s3, 128, %s56, [#allocation10], 64, 64, 4
    $region17: #{transformer_forward.35} parent=1 // pred_fallthru
      _
    // Predicated region
    $region18: #{transformer_forward.35} parent=1 // pred_check
      _
    $region19: #{transformer_forward.35} parent=1 // pred_check_branch
      %63 = sbr.rel (0) target = $region21
    $region20: #{transformer_forward.35} parent=1 // pred_region
      %s65 = ssub.s32 16, 16
      %66 = vsyncadd [#allocation10], %s65
      %s68 = sshll.u32 [#allocation11], 4
      %s69 = int_to_ptr.vmem [resolvable:$true] %s68
      %71 = dma.hbm_to_vmem [thread:$0]  %s4, 16, %s69, [#allocation10]
    $region21: #{transformer_forward.35} parent=1 // pred_fallthru
      _
    // Predicated region
    $region22: #{transformer_forward.35} parent=1 // pred_check
      _
    $region23: #{transformer_forward.35} parent=1 // pred_check_branch
      %73 = sbr.rel (0) target = $region25
    $region24: #{transformer_forward.35} parent=1 // pred_region
      %s75 = ssub.s32 16, 16
      %76 = vsyncadd [#allocation13], %s75
      %s78 = sshll.u32 [#allocation12], 4
      %s79 = int_to_ptr.vmem [resolvable:$true] %s78
      %81 = dma.hbm_to_vmem [thread:$0]  %s5, 16, %s79, [#allocation13]
    $region25: #{transformer_forward.35} parent=1 // pred_fallthru
      _
    // Predicated region
    $region26: #{transformer_forward.35} parent=1 // pred_check
      _
    $region27: #{transformer_forward.35} parent=1 // pred_check_branch
      %83 = sbr.rel (0) target = $region29
    $region28: #{transformer_forward.35} parent=1 // pred_region
      %84 = dma.done [#allocation4], 128
    $region29: #{transformer_forward.35} parent=1 // pred_fallthru
      _
    // Predicated region
    $region30: #{transformer_forward.35} parent=1 // pred_check
      _
    $region31: #{transformer_forward.35} parent=1 // pred_check_branch
      %86 = sbr.rel (0) target = $region33
    $region32: #{transformer_forward.35} parent=1 // pred_region
      %87 = dma.done [#allocation7], 256
    $region33: #{transformer_forward.35} parent=1 // pred_fallthru
      _
    // Predicated region
    $region34: #{transformer_forward.35} parent=1 // pred_check
      _
    $region35: #{transformer_forward.35} parent=1 // pred_check_branch
      %89 = sbr.rel (0) target = $region37
    $region36: #{transformer_forward.35} parent=1 // pred_region
      %90 = dma.done [#allocation7], 16
    $region37: #{transformer_forward.35} parent=1 // pred_fallthru
      _
    // Predicated region
    $region38: #{transformer_forward.35} parent=1 // pred_check
      _
    $region39: #{transformer_forward.35} parent=1 // pred_check_branch
      %92 = sbr.rel (0) target = $region41
    $region40: #{transformer_forward.35} parent=1 // pred_region
      %93 = dma.done [#allocation10], 128
    $region41: #{transformer_forward.35} parent=1 // pred_fallthru
      _
    // Predicated region
    $region42: #{transformer_forward.35} parent=1 // pred_check
      _
    $region43: #{transformer_forward.35} parent=1 // pred_check_branch
      %95 = sbr.rel (0) target = $region45
    $region44: #{transformer_forward.35} parent=1 // pred_region
      %96 = dma.done [#allocation10], 16
    $region45: #{transformer_forward.35} parent=1 // pred_fallthru
      _
    // Predicated region
    $region46: #{transformer_forward.35} parent=1 // pred_check
      _
    $region47: #{transformer_forward.35} parent=1 // pred_check_branch
      %98 = sbr.rel (0) target = $region49
    $region48: #{transformer_forward.35} parent=1 // pred_region
      %99 = dma.done [#allocation13], 16
    $region49: #{transformer_forward.35} parent=1 // pred_fallthru
      _
    %p101 = scmp.eq.s32.totalorder 0, 0
    // Predicated region
    $region50: #{transformer_forward.35} parent=1 // pred_check
      %p102 = pneg %p101
    $region51: #{transformer_forward.35} parent=1 // pred_check_branch
      %104 = sbr.rel (%p102) target = $region53
    $region52: #{transformer_forward.35} parent=1 // pred_region
      %vm105 = vcmask 261120
      %106 = vst.msk [vmem:[#allocation2] sm:$0xff] %vm105, 0.0
      %107 = vst.msk [vmem:[#allocation2 + $0x8] sm:$0xff] %vm105, 0.0
    $region53: #{transformer_forward.35} parent=1 // pred_fallthru
      _
    %v108 = vld [vmem:[#allocation2] sm:$0xff]
    %v109 = vld [vmem:[#allocation2 + $0x8] sm:$0xff]
    %v110 = vld [vmem:[#allocation3] sm:$0xf]
    %v111 = vld [vmem:[#allocation3 + $0x4] sm:$0xf]
    %v112 = vld [vmem:[#allocation6] sm:$0xf]
    %v113 = vld [vmem:[#allocation6 + $0x4] sm:$0xf]
    %v114 = vld [vmem:[#allocation6 + $0x8] sm:$0xf]
    %v115 = vld [vmem:[#allocation6 + $0xc] sm:$0xf]
    %v118 = vunpack.c.l.b16 %v110
    %v119 = vunpack.c.l.b16 %v111
    %v120 = vpack.c.b16 %v119, %v118
    %v125 = vunpack.c.l.b16 %v112
    %v126 = vunpack.c.l.b16 %v113
    %v127 = vunpack.c.l.b16 %v114
    %v128 = vunpack.c.l.b16 %v115
    %v129 = vpack.c.b16 %v126, %v125
    %v130 = vpack.c.b16 %v128, %v127
    %vm133 = vcmask 261120
    %v135 = vsel %vm133, %v120, 0
    %137 = vmatprep.subr.bf16.mxu0 0
    %138 = vmatpush1.bf16.msra.mxu0 %v129
    %139 = vmatprep.subr.bf16.mxu0 0
    %140 = vmatpush1.bf16.msra.mxu0 %v130
    %141 = vmatprep.subr.bf16.mxu0 0
    %142 = vmatpush1.bf16.msra.mxu0 0
    %143 = vmatprep.subr.bf16.mxu0 0
    %144 = vmatpush1.bf16.msra.mxu0 0
    %145 = vmatprep.subr.bf16.mxu0 0
    %146 = vmatpush1.bf16.msra.mxu0 0
    %147 = vmatprep.subr.bf16.mxu0 0
    %148 = vmatpush1.bf16.msra.mxu0 0
    %149 = vmatprep.subr.bf16.mxu0 0
    %150 = vmatpush1.bf16.msra.mxu0 0
    %151 = vmatprep.subr.bf16.mxu0 0
    %152 = vmatpush1.bf16.msra.mxu0 0
    %153 = vmatprep.subr.bf16.mxu0 0
    %154 = vmatpush1.bf16.msra.mxu0 0
    %155 = vmatprep.subr.bf16.mxu0 0
    %156 = vmatpush1.bf16.msra.mxu0 0
    %157 = vmatprep.subr.bf16.mxu0 0
    %158 = vmatpush1.bf16.msra.mxu0 0
    %159 = vmatprep.subr.bf16.mxu0 0
    %160 = vmatpush1.bf16.msra.mxu0 0
    %161 = vmatprep.subr.bf16.mxu0 0
    %162 = vmatpush1.bf16.msra.mxu0 0
    %163 = vmatprep.subr.bf16.mxu0 0
    %164 = vmatpush1.bf16.msra.mxu0 0
    %165 = vmatprep.subr.bf16.mxu0 0
    %166 = vmatpush1.bf16.msra.mxu0 0
    %167 = vmatprep.subr.bf16.mxu0 0
    %168 = vmatpush1.bf16.msra.mxu0 0
    %169 = vmatprep.mubr.bf16.mxu0 0
    %170 = vmatmul.mubr.bf16.gmra.mrb[0].mxu0 %v135
    %v171 = vpop.f32.mrb[0].mxu0
    %v172 = vadd.f32 0.0, %v171
    %v173 = vpop.f32.mrb[0].mxu0
    %v174 = vpop.f32.mrb[0].mxu0
    %v175 = vadd.f32 0.0, %v174
    %v176 = vpop.f32.mrb[0].mxu0
    %177 = vdwg.mxu0
    %v178 = vadd.f32 %v108, %v172
    %v179 = vadd.f32 %v109, %v175
    %180 = vst.msk [vmem:[#allocation2] sm:$0xff] %vm133, %v178
    %181 = vst.msk [vmem:[#allocation2 + $0x8] sm:$0xff] %vm133, %v179
    // Predicated region
    $region54: #{transformer_forward.35} parent=1 // pred_check
      %p182 = pneg %p101
    $region55: #{transformer_forward.35} parent=1 // pred_check_branch
      %184 = sbr.rel (%p182) target = $region57
    $region56: #{transformer_forward.35} parent=1 // pred_region
      %v185 = vld [vmem:[#allocation2] sm:$0xff]
      %v186 = vld [vmem:[#allocation2 + $0x8] sm:$0xff]
      %v187 = vld [vmem:[#allocation8] sm:$0x1]
      %v189 = vlaneseq
      %v190 = vshrl.u32 %v189, 7
      %v191 = vsub.s32 0, %v190
      %v192 = vrot.slane %v187, %v191
      %v194 = vadd.f32 %v185, %v192
      %v195 = vadd.f32 %v186, %v192
      %v196 = vld [vmem:[#allocation9] sm:$0xf]
      %v197 = vld [vmem:[#allocation9 + $0x4] sm:$0xf]
      %v198 = vunpack.c.l.bf16 %v196
      %v199 = vunpack.c.l.bf16 %v197
      %v200 = vadd.f32 %v194, %v198
      %v201 = vadd.f32 %v195, %v199
      %v202 = vsel %vm133, %v200, 0.0
      %203 = vadd.xlane.f32.xlu0 %v202
      %v204 = vpop.xlane.xlu0 %203
      %v205 = vsel %vm133, %v201, 0.0
      %206 = vadd.xlane.f32.xlu0 %v205
      %v207 = vpop.xlane.xlu0 %206
      %v208 = vrcp.pop 32.0
      %v209 = vmul.f32 %v204, %v208
      %v210 = vmul.f32 %v207, %v208
      %v211 = vsub.f32 %v200, %v209
      %v212 = vsub.f32 %v201, %v210
      %v213 = vmul.f32 %v211, %v211
      %v214 = vmul.f32 %v212, %v212
      %v215 = vsel %vm133, %v213, 0.0
      %216 = vadd.xlane.f32.xlu0 %v215
      %v217 = vpop.xlane.xlu0 %216
      %v218 = vsel %vm133, %v214, 0.0
      %219 = vadd.xlane.f32.xlu0 %v218
      %v220 = vpop.xlane.xlu0 %219
      %v221 = vmul.f32 %v217, %v208
      %v222 = vmul.f32 %v220, %v208
      %v223 = vadd.f32 %v221, 1e-05
      %v224 = vadd.f32 %v222, 1e-05
      %v225 = vrsqrt.pop %v223
      %v226 = vrsqrt.pop %v224
      %v227 = vmul.f32 %v211, %v225
      %v228 = vmul.f32 %v212, %v226
      %v229 = vld [vmem:[#allocation11] sm:$0x1]
      %v231 = vlaneseq
      %v232 = vshrl.u32 %v231, 7
      %v233 = vsub.s32 0, %v232
      %v234 = vrot.slane %v229, %v233
      %v236 = vmul.f32 %v227, %v234
      %v237 = vmul.f32 %v228, %v234
      %v238 = vld [vmem:[#allocation12] sm:$0x1]
      %v240 = vlaneseq
      %v241 = vshrl.u32 %v240, 7
      %v242 = vsub.s32 0, %v241
      %v243 = vrot.slane %v238, %v242
      %v245 = vadd.f32 %v236, %v243
      %v246 = vadd.f32 %v237, %v243
      %v247 = vpack.c.bf16 %v246, %v245
      %v249 = vunpack.c.l.b16 %v247
      %v250 = vunpack.c.h.b16 %v247
      %v251 = vpack.c.b16 %v249, %v249
      %v252 = vpack.c.b16 %v250, %v250
      %vm255 = vcmask 257024
      %256 = vst.msk [vmem:[#allocation14] sm:$0xf] %vm255, %v251
      %257 = vst.msk [vmem:[#allocation14 + $0x4] sm:$0xf] %vm255, %v252
    $region57: #{transformer_forward.35} parent=1 // pred_fallthru
      _
    // Predicated region
    $region58: #{transformer_forward.35} parent=1 // pred_check
      _
    $region59: #{transformer_forward.35} parent=1 // pred_check_branch
      %259 = sbr.rel (0) target = $region61
    $region60: #{transformer_forward.35} parent=1 // pred_region
      %s261 = ssub.s32 128, 128
      %262 = vsyncadd [#allocation5], %s261
      %s263 = sshll.u32 [#allocation14], 4
      %s264 = int_to_ptr.vmem [resolvable:$true] %s263
      %269 = dma.vmem_to_hbm [thread:$0]  %s264, 128, %s6, [#allocation5], 64, 64, 4
    $region61: #{transformer_forward.35} parent=1 // pred_fallthru
      _
    // Predicated region
    $region62: #{transformer_forward.35} parent=1 // pred_check
      _
    $region63: #{transformer_forward.35} parent=1 // pred_check_branch
      %271 = sbr.rel (0) target = $region65
    $region64: #{transformer_forward.35} parent=1 // pred_region
      %272 = dma.done [#allocation5], 128
    $region65: #{transformer_forward.35} parent=1 // pred_fallthru
      _
    %273 = vsyncpa [#allocation4], 1
    %274 = vsyncpa [#allocation7], 1
    %275 = vsyncpa [#allocation10], 1
    %276 = vsyncpa [#allocation13], 1
    %277 = vsyncpa [#allocation5], 1

// kernel: transformer_forward.34
$region0: #{transformer_forward.34}
  #allocation0 [shape = 'u32[]', space=smem, size = 0x4, offset = 0x4, fixed_abs, tag = 'smem constant byte address 0x4 - core index']
  #allocation1 [shape = 'u32[144,128]{1,0:T(1,128)}', space=vmem, size = 0x12000, scoped, tag = 'internal scratch']
  #allocation2 [shape = 'f32[8,4]{1,0:T(8,128)}', space=vmem, size = 0x1000, scoped, tag = 'scratch operand']
  #allocation3 [shape = 'f32[8,4]{1,0:T(8,128)}', space=vmem, size = 0x1000, scoped, tag = 'scratch operand']
  #allocation4 [shape = 'f32[8,32]{1,0:T(8,128)}', space=vmem, size = 0x1000, scoped, tag = 'scratch operand']
  %s0 = inlined_call_operand.hbm [shape: bf16[2,8,32], index: 0, kind: input, shape index: {}]
  %s1 = inlined_call_operand.hbm [shape: bf16[2,8,32], index: 1, kind: input, shape index: {}]
  %s2 = inlined_call_operand.hbm [shape: bf16[2,8,32], index: 2, kind: input, shape index: {}]
  %s3 = inlined_call_operand.hbm [shape: f32[2,1,8], index: 3, kind: input, shape index: {}]
  %s4 = inlined_call_operand.hbm [shape: bf16[2,8,32], index: 4, kind: output, shape index: {}]
  %s5 = sld [smem:[#allocation0]]
  $region77: #{transformer_forward.34} parent=0
    _
  %s7 = ssub.s32 1, %s5
  %s8 = scalar_select 0, %s7, %s5
  $region1: #{transformer_forward.34} parent=0
    #allocation5 [shape = 'u8[4096]{0}', space=vmem, size = 0x1000, scoped, tag = 'input window, operand 0']
    #allocation6 [shape = 's32[2]{0}', space=sflag, size = 0x8, scoped, tag = 'scoped memory for transformer_forward.34']
    #allocation7 [shape = 's32[2]{0}', space=sflag, size = 0x8, scoped, tag = 'scoped memory for transformer_forward.34']
    #allocation8 [shape = 'u8[4096]{0}', space=vmem, size = 0x1000, scoped, tag = 'input window, operand 1']
    #allocation9 [shape = 's32[2]{0}', space=sflag, size = 0x8, scoped, tag = 'scoped memory for transformer_forward.34']
    #allocation10 [shape = 'u8[4096]{0}', space=vmem, size = 0x1000, scoped, tag = 'input window, operand 2']
    #allocation11 [shape = 'u8[1024]{0}', space=vmem, size = 0x400, scoped, tag = 'input window, operand 3']
    #allocation12 [shape = 's32[2]{0}', space=sflag, size = 0x8, scoped, tag = 'scoped memory for transformer_forward.34']
    #allocation13 [shape = 'u8[4096]{0}', space=vmem, size = 0x1000, scoped, tag = 'output window, operand 0']
    %9 = vsyncpa [#allocation6], 0
    %s10 = scalar_lea.sflag [#allocation6], 1
    %11 = vsyncpa %s10, 0
    %12 = vsyncpa [#allocation9], 0
    %s13 = scalar_lea.sflag [#allocation9], 1
    %14 = vsyncpa %s13, 0
    %15 = vsyncpa [#allocation12], 0
    %s16 = scalar_lea.sflag [#allocation12], 1
    %17 = vsyncpa %s16, 0
    %18 = vsyncpa [#allocation7], 0
    %s19 = scalar_lea.sflag [#allocation7], 1
    %20 = vsyncpa %s19, 0
    loop: start=0, step=1, limit=4
    $region2: #{transformer_forward.34} parent=1 // loop_pre_header
      _
    $region3: #{transformer_forward.34} parent=1 // loop_header
      %s22 = sphi 0, %s26
      %p23 = scmp.ge.s32.totalorder %s22, 4
      %s29 = sphi 0, %s48
      %s30 = sphi 0, %s44
      %s31 = sphi 0, %s40
      %s32 = sphi 0, %s29
      %s33 = sphi 0, %s30
      %s34 = sphi 0, %s31
      %s35 = sphi 0, %s32
      %s36 = sphi 0, %s33
      %s37 = sphi 0, %s34
      %s53 = sphi 0, %s55
      %s56 = sphi 0, %s53
      %s57 = sphi 0, %s56
      %s73 = sphi 0, %s57
      %s81 = sphi 0, %s83
      %s84 = sphi 0, %s81
      %s85 = sphi 0, %s84
      %s101 = sphi 0, %s85
      %s109 = sphi 0, %s111
      %s112 = sphi 0, %s109
      %s113 = sphi 0, %s112
      %s129 = sphi 0, %s113
      %s137 = sphi 0, %s139
      %s140 = sphi 0, %s137
      %s141 = sphi 0, %s140
      %s157 = sphi 0, %s141
      %s165 = sphi 0, %s167
      %s168 = sphi 0, %s165
      %s169 = sphi 0, %s168
      %s185 = sphi 0, %s169
    $region4: #{transformer_forward.34} parent=1 // loop_header_branch
      %25 = sbr.rel (%p23) target = $region8
    $region5: #{transformer_forward.34} parent=1 // loop_body
      %s27 = ssub.s32 %s22, 1
      %s28 = ssub.s32 %s22, 2
      %s38 = sadd.s32 1, %s31
      %p39 = scmp.ge.s32.totalorder %s38, 1
      %s40 = scalar_select %p39, 0, %s38
      %s41 = sadd.s32 1, %s30
      %s42 = scalar_select %p39, %s41, %s30
      %p43 = scmp.ge.s32.totalorder %s42, 1
      %s44 = scalar_select %p43, 0, %s42
      %s45 = sadd.s32 1, %s29
      %s46 = scalar_select %p43, %s45, %s29
      %p47 = scmp.ge.s32.totalorder %s46, 2
      %s48 = scalar_select %p47, 0, %s46
      %s49 = ssub.s32 %s29, %s48
      %s50 = ssub.s32 %s30, %s44
      %s51 = sor.u32 %s49, %s50
      %p52 = scmp.eq.s32.totalorder %s51, 0
      %s54 = sadd.s32 %s53, 1
      %s55 = scalar_select %p52, %s53, %s54
      %p58 = pneg %p52
      %p59 = scmp.eq.s32.totalorder %s22, 1
      %p60 = por %p58, %p59
      %p61 = scmp.ne.s32.totalorder %s53, %s56
      %p62 = scmp.eq.s32.totalorder %s22, 0
      %p63 = por %p61, %p62
      %p64 = scmp.ne.s32.totalorder %s53, %s56
      %p65 = scmp.eq.s32.totalorder %s27, 1
      %p66 = por %p64, %p65
      %p67 = scmp.ne.s32.totalorder %s56, %s57
      %p68 = scmp.eq.s32.totalorder %s27, 0
      %p69 = por %p67, %p68
      %p70 = scmp.ne.s32.totalorder %s56, %s57
      %p71 = scmp.eq.s32.totalorder %s28, 1
      %p72 = por %p70, %p71
      %p74 = scmp.ne.s32.totalorder %s57, %s73
      %p75 = scmp.eq.s32.totalorder %s28, 0
      %p76 = por %p74, %p75
      %s77 = ssub.s32 %s29, %s48
      %s78 = ssub.s32 %s31, %s40
      %s79 = sor.u32 %s77, %s78
      %p80 = scmp.eq.s32.totalorder %s79, 0
      %s82 = sadd.s32 %s81, 1
      %s83 = scalar_select %p80, %s81, %s82
      %p86 = pneg %p80
      %p87 = scmp.eq.s32.totalorder %s22, 1
      %p88 = por %p86, %p87
      %p89 = scmp.ne.s32.totalorder %s81, %s84
      %p90 = scmp.eq.s32.totalorder %s22, 0
      %p91 = por %p89, %p90
      %p92 = scmp.ne.s32.totalorder %s81, %s84
      %p93 = scmp.eq.s32.totalorder %s27, 1
      %p94 = por %p92, %p93
      %p95 = scmp.ne.s32.totalorder %s84, %s85
      %p96 = scmp.eq.s32.totalorder %s27, 0
      %p97 = por %p95, %p96
      %p98 = scmp.ne.s32.totalorder %s84, %s85
      %p99 = scmp.eq.s32.totalorder %s28, 1
      %p100 = por %p98, %p99
      %p102 = scmp.ne.s32.totalorder %s85, %s101
      %p103 = scmp.eq.s32.totalorder %s28, 0
      %p104 = por %p102, %p103
      %s105 = ssub.s32 %s29, %s48
      %s106 = ssub.s32 %s31, %s40
      %s107 = sor.u32 %s105, %s106
      %p108 = scmp.eq.s32.totalorder %s107, 0
      %s110 = sadd.s32 %s109, 1
      %s111 = scalar_select %p108, %s109, %s110
      %p114 = pneg %p108
      %p115 = scmp.eq.s32.totalorder %s22, 1
      %p116 = por %p114, %p115
      %p117 = scmp.ne.s32.totalorder %s109, %s112
      %p118 = scmp.eq.s32.totalorder %s22, 0
      %p119 = por %p117, %p118
      %p120 = scmp.ne.s32.totalorder %s109, %s112
      %p121 = scmp.eq.s32.totalorder %s27, 1
      %p122 = por %p120, %p121
      %p123 = scmp.ne.s32.totalorder %s112, %s113
      %p124 = scmp.eq.s32.totalorder %s27, 0
      %p125 = por %p123, %p124
      %p126 = scmp.ne.s32.totalorder %s112, %s113
      %p127 = scmp.eq.s32.totalorder %s28, 1
      %p128 = por %p126, %p127
      %p130 = scmp.ne.s32.totalorder %s113, %s129
      %p131 = scmp.eq.s32.totalorder %s28, 0
      %p132 = por %p130, %p131
      %s133 = ssub.s32 %s29, %s48
      %s134 = ssub.s32 %s31, %s40
      %s135 = sor.u32 %s133, %s134
      %p136 = scmp.eq.s32.totalorder %s135, 0
      %s138 = sadd.s32 %s137, 1
      %s139 = scalar_select %p136, %s137, %s138
      %p142 = pneg %p136
      %p143 = scmp.eq.s32.totalorder %s22, 1
      %p144 = por %p142, %p143
      %p145 = scmp.ne.s32.totalorder %s137, %s140
      %p146 = scmp.eq.s32.totalorder %s22, 0
      %p147 = por %p145, %p146
      %p148 = scmp.ne.s32.totalorder %s137, %s140
      %p149 = scmp.eq.s32.totalorder %s27, 1
      %p150 = por %p148, %p149
      %p151 = scmp.ne.s32.totalorder %s140, %s141
      %p152 = scmp.eq.s32.totalorder %s27, 0
      %p153 = por %p151, %p152
      %p154 = scmp.ne.s32.totalorder %s140, %s141
      %p155 = scmp.eq.s32.totalorder %s28, 1
      %p156 = por %p154, %p155
      %p158 = scmp.ne.s32.totalorder %s141, %s157
      %p159 = scmp.eq.s32.totalorder %s28, 0
      %p160 = por %p158, %p159
      %s161 = ssub.s32 %s29, %s48
      %s162 = ssub.s32 %s30, %s44
      %s163 = sor.u32 %s161, %s162
      %p164 = scmp.eq.s32.totalorder %s163, 0
      %s166 = sadd.s32 %s165, 1
      %s167 = scalar_select %p164, %s165, %s166
      %p170 = pneg %p164
      %p171 = scmp.eq.s32.totalorder %s22, 1
      %p172 = por %p170, %p171
      %p173 = scmp.ne.s32.totalorder %s165, %s168
      %p174 = scmp.eq.s32.totalorder %s22, 0
      %p175 = por %p173, %p174
      %p176 = scmp.ne.s32.totalorder %s165, %s168
      %p177 = scmp.eq.s32.totalorder %s27, 1
      %p178 = por %p176, %p177
      %p179 = scmp.ne.s32.totalorder %s168, %s169
      %p180 = scmp.eq.s32.totalorder %s27, 0
      %p181 = por %p179, %p180
      %p182 = scmp.ne.s32.totalorder %s168, %s169
      %p183 = scmp.eq.s32.totalorder %s28, 1
      %p184 = por %p182, %p183
      %p186 = scmp.ne.s32.totalorder %s169, %s185
      %p187 = scmp.eq.s32.totalorder %s28, 0
      %p188 = por %p186, %p187
      %p189 = scmp.le.s32.totalorder 1, %s22
      %p190 = scmp.lt.s32.totalorder %s22, 3
      %p191 = pnand %p189, %p190
      %p192 = pneg %p191
      // Predicated region
      $region9: #{transformer_forward.34} parent=5 // pred_check
        _
      $region10: #{transformer_forward.34} parent=5 // pred_check_branch
        %194 = sbr.rel (%p191) target = $region12
      $region11: #{transformer_forward.34} parent=5 // pred_region
        %s195 = ssub.s32 %s22, 1
      $region12: #{transformer_forward.34} parent=5 // pred_fallthru
        _
      %p196 = scmp.lt.s32.totalorder %s22, 2
      // Predicated region
      $region13: #{transformer_forward.34} parent=5 // pred_check
        %p197 = pneg %p196
      $region14: #{transformer_forward.34} parent=5 // pred_check_branch
        %199 = sbr.rel (%p197) target = $region16
      $region15: #{transformer_forward.34} parent=5 // pred_region
        // Predicated region
        $region17: #{transformer_forward.34} parent=15 // pred_check
          %p200 = pneg %p63
        $region18: #{transformer_forward.34} parent=15 // pred_check_branch
          %202 = sbr.rel (%p200) target = $region20
        $region19: #{transformer_forward.34} parent=15 // pred_region
          %s203 = sand.u32 %s53, 1
          %s204 = scalar_lea.sflag [#allocation6], %s203
          %s205 = sand.u32 %s53, 1
          %s206 = smul.addr %s205, 4
          %s207 = scalar_lea.vmem [#allocation5], %s206
          %s209 = ssub.s32 64, 64
          %210 = vsyncadd %s204, %s209
          %s211 = sadd.s32 %s30, %s29
          %s212 = smul.addr %s211, 64
          %s213 = scalar_lea.hbm %s0, %s212
          %s215 = sshll.u32 %s207, 4
          %s216 = int_to_ptr.vmem [resolvable:$true] %s215
          %218 = dma.hbm_to_vmem [thread:$0]  %s213, 64, %s216, %s204
        $region20: #{transformer_forward.34} parent=15 // pred_fallthru
          _
        // Predicated region
        $region21: #{transformer_forward.34} parent=15 // pred_check
          %p219 = pneg %p91
        $region22: #{transformer_forward.34} parent=15 // pred_check_branch
          %221 = sbr.rel (%p219) target = $region24
        $region23: #{transformer_forward.34} parent=15 // pred_region
          %s222 = sand.u32 %s22, 1
          %s223 = scalar_lea.sflag [#allocation9], %s222
          %s224 = sand.u32 %s81, 1
          %s225 = smul.addr %s224, 4
          %s226 = scalar_lea.vmem [#allocation8], %s225
          %s228 = ssub.s32 64, 64
          %229 = vsyncadd %s223, %s228
          %s230 = sadd.s32 %s31, %s29
          %s231 = smul.addr %s230, 64
          %s232 = scalar_lea.hbm %s1, %s231
          %s234 = sshll.u32 %s226, 4
          %s235 = int_to_ptr.vmem [resolvable:$true] %s234
          %237 = dma.hbm_to_vmem [thread:$0]  %s232, 64, %s235, %s223
        $region24: #{transformer_forward.34} parent=15 // pred_fallthru
          _
        // Predicated region
        $region25: #{transformer_forward.34} parent=15 // pred_check
          %p238 = pneg %p119
        $region26: #{transformer_forward.34} parent=15 // pred_check_branch
          %240 = sbr.rel (%p238) target = $region28
        $region27: #{transformer_forward.34} parent=15 // pred_region
          %s241 = sand.u32 %s22, 1
          %s242 = scalar_lea.sflag [#allocation9], %s241
          %s243 = sand.u32 %s109, 1
          %s244 = smul.addr %s243, 4
          %s245 = scalar_lea.vmem [#allocation10], %s244
          %s247 = ssub.s32 64, 64
          %248 = vsyncadd %s242, %s247
          %s249 = sadd.s32 %s31, %s29
          %s250 = smul.addr %s249, 64
          %s251 = scalar_lea.hbm %s2, %s250
          %s253 = sshll.u32 %s245, 4
          %s254 = int_to_ptr.vmem [resolvable:$true] %s253
          %256 = dma.hbm_to_vmem [thread:$0]  %s251, 64, %s254, %s242
        $region28: #{transformer_forward.34} parent=15 // pred_fallthru
          _
        // Predicated region
        $region29: #{transformer_forward.34} parent=15 // pred_check
          %p257 = pneg %p147
        $region30: #{transformer_forward.34} parent=15 // pred_check_branch
          %259 = sbr.rel (%p257) target = $region32
        $region31: #{transformer_forward.34} parent=15 // pred_region
          %s260 = sand.u32 %s137, 1
          %s261 = scalar_lea.sflag [#allocation12], %s260
          %s262 = sand.u32 %s137, 1
          %s263 = scalar_lea.vmem [#allocation11], %s262
          %s265 = ssub.s32 16, 16
          %266 = vsyncadd %s261, %s265
          %s267 = sadd.s32 %s31, %s29
          %s268 = smul.addr %s267, 16
          %s269 = scalar_lea.hbm %s3, %s268
          %s271 = sshll.u32 %s263, 4
          %s272 = int_to_ptr.vmem [resolvable:$true] %s271
          %274 = dma.hbm_to_vmem [thread:$0]  %s269, 16, %s272, %s261
        $region32: #{transformer_forward.34} parent=15 // pred_fallthru
          _
      $region16: #{transformer_forward.34} parent=5 // pred_fallthru
        _
      %p275 = scmp.le.s32.totalorder 1, %s22
      %p276 = scmp.lt.s32.totalorder %s22, 3
      %p277 = pnand %p275, %p276
      %p278 = pneg %p277
      // Predicated region
      $region33: #{transformer_forward.34} parent=5 // pred_check
        _
      $region34: #{transformer_forward.34} parent=5 // pred_check_branch
        %280 = sbr.rel (%p277) target = $region36
      $region35: #{transformer_forward.34} parent=5 // pred_region
        %s281 = ssub.s32 %s22, 1
        %s282 = sand.u32 %s56, 1
        %s283 = scalar_lea.sflag [#allocation6], %s282
        %s284 = sand.u32 %s56, 1
        %s285 = smul.addr %s284, 4
        %s286 = scalar_lea.vmem [#allocation5], %s285
        // Predicated region
        $region37: #{transformer_forward.34} parent=35 // pred_check
          %p287 = pneg %p69
        $region38: #{transformer_forward.34} parent=35 // pred_check_branch
          %289 = sbr.rel (%p287) target = $region40
        $region39: #{transformer_forward.34} parent=35 // pred_region
          %290 = dma.done %s283, 64
        $region40: #{transformer_forward.34} parent=35 // pred_fallthru
          _
        %s291 = sand.u32 %s27, 1
        %s292 = scalar_lea.sflag [#allocation9], %s291
        %s293 = sand.u32 %s84, 1
        %s294 = smul.addr %s293, 4
        %s295 = scalar_lea.vmem [#allocation8], %s294
        // Predicated region
        $region41: #{transformer_forward.34} parent=35 // pred_check
          %p296 = pneg %p97
        $region42: #{transformer_forward.34} parent=35 // pred_check_branch
          %298 = sbr.rel (%p296) target = $region44
        $region43: #{transformer_forward.34} parent=35 // pred_region
          %299 = dma.done %s292, 64
        $region44: #{transformer_forward.34} parent=35 // pred_fallthru
          _
        %s300 = sand.u32 %s27, 1
        %s301 = scalar_lea.sflag [#allocation9], %s300
        %s302 = sand.u32 %s112, 1
        %s303 = smul.addr %s302, 4
        %s304 = scalar_lea.vmem [#allocation10], %s303
        // Predicated region
        $region45: #{transformer_forward.34} parent=35 // pred_check
          %p305 = pneg %p125
        $region46: #{transformer_forward.34} parent=35 // pred_check_branch
          %307 = sbr.rel (%p305) target = $region48
        $region47: #{transformer_forward.34} parent=35 // pred_region
          %308 = dma.done %s301, 64
        $region48: #{transformer_forward.34} parent=35 // pred_fallthru
          _
        %s309 = sand.u32 %s140, 1
        %s310 = scalar_lea.sflag [#allocation12], %s309
        %s311 = sand.u32 %s140, 1
        %s312 = scalar_lea.vmem [#allocation11], %s311
        // Predicated region
        $region49: #{transformer_forward.34} parent=35 // pred_check
          %p313 = pneg %p153
        $region50: #{transformer_forward.34} parent=35 // pred_check_branch
          %315 = sbr.rel (%p313) target = $region52
        $region51: #{transformer_forward.34} parent=35 // pred_region
          %316 = dma.done %s310, 16
        $region52: #{transformer_forward.34} parent=35 // pred_fallthru
          _
        %s317 = sand.u32 %s56, 1
        %s318 = scalar_lea.sflag [#allocation6], %s317
        %s319 = sand.u32 %s56, 1
        %s320 = smul.addr %s319, 4
        %s321 = scalar_lea.vmem [#allocation5], %s320
        %p322 = pneg %p69
        %p323 = pneg %p66
        %s324 = sand.u32 %s27, 1
        %s325 = scalar_lea.sflag [#allocation9], %s324
        %s326 = sand.u32 %s84, 1
        %s327 = smul.addr %s326, 4
        %s328 = scalar_lea.vmem [#allocation8], %s327
        %p329 = pneg %p97
        %p330 = pneg %p94
        %s331 = sand.u32 %s27, 1
        %s332 = scalar_lea.sflag [#allocation9], %s331
        %s333 = sand.u32 %s112, 1
        %s334 = smul.addr %s333, 4
        %s335 = scalar_lea.vmem [#allocation10], %s334
        %p336 = pneg %p125
        %p337 = pneg %p122
        %s338 = sand.u32 %s140, 1
        %s339 = scalar_lea.sflag [#allocation12], %s338
        %s340 = sand.u32 %s140, 1
        %s341 = scalar_lea.vmem [#allocation11], %s340
        %p342 = pneg %p153
        %p343 = pneg %p150
        %p344 = pneg %p181
        %p345 = pneg %p178
        %s346 = sand.u32 %s168, 1
        %s347 = scalar_lea.sflag [#allocation7], %s346
        %s348 = sand.u32 %s168, 1
        %s349 = smul.addr %s348, 4
        %s350 = scalar_lea.vmem [#allocation13], %s349
        %p352 = scmp.eq.s32.totalorder %s34, 0
        // Predicated region
        $region53: #{transformer_forward.34} parent=35 // pred_check
          %p353 = pneg %p352
        $region54: #{transformer_forward.34} parent=35 // pred_check_branch
          %355 = sbr.rel (%p353) target = $region56
        $region55: #{transformer_forward.34} parent=35 // pred_region
          %vm356 = vcmask 31744
          %357 = vst.msk [vmem:[#allocation2] sm:$0xff] %vm356, -1e+30
          %358 = vst.msk [vmem:[#allocation3] sm:$0xff] %vm356, 0.0
          %vm359 = vcmask 261120
          %360 = vst.msk [vmem:[#allocation4] sm:$0xff] %vm359, 0.0
        $region56: #{transformer_forward.34} parent=35 // pred_fallthru
          _
        %s361 = smul.u32 %s34, 8
        %s362 = smul.u32 %s33, 8
        %s363 = sadd.s32 %s362, 7
        %p364 = scmp.le.s32.totalorder %s361, %s363
        // Predicated region
        $region57: #{transformer_forward.34} parent=35 // pred_check
          %p365 = pneg %p364
        $region58: #{transformer_forward.34} parent=35 // pred_check_branch
          %367 = sbr.rel (%p365) target = $region60
        $region59: #{transformer_forward.34} parent=35 // pred_region
          %v368 = vld [vmem:[%s286] sm:$0xf]
          %v369 = vld [vmem:[%s295] sm:$0xf]
          %v370 = vld [vmem:[%s304] sm:$0xf]
          %v371 = vld [vmem:[%s312] sm:$0x1]
          %vm372 = vcmp.gt.f32.partialorder %v371, 0.5
          %v373 = vlaneseq
          %v374 = vshrl.u32 %v373, 7
          %v375 = vstv %s362
          %v376 = vadd.s32 %v374, %v375
          %v377 = vlaneseq
          %v378 = vand.u32 %v377, 127
          %v379 = vstv %s361
          %v380 = vadd.s32 %v378, %v379
          %vm381 = vcmp.gt.s32.totalorder %v380, %v376
          %v382 = vsel %vm372, 1, 0
          %v383 = vlaneseq
          %v384 = vshrl.u32 %v383, 7
          %v385 = vsub.s32 0, %v384
          %v386 = vrot.slane %v382, %v385
          %vm387 = vcmp.eq.s32.totalorder %v386, 1
          %vm388 = vmor %vm387, %vm381
          %vm389 = vcmask 64512
          %v391 = vsel %vm389, %v368, 0
          %v394 = vsel %vm389, %v369, 0
          %396 = vmatprep.subr.bf16.mxu0 0
          %397 = vmatpush1.bf16.xpose.msra.mxu0 %v394
          %398 = vmatprep.subr.bf16.mxu0 0
          %399 = vmatpush1.bf16.xpose.msra.mxu0 0
          %400 = vmatprep.subr.bf16.mxu0 0
          %401 = vmatpush1.bf16.xpose.msra.mxu0 0
          %402 = vmatprep.subr.bf16.mxu0 0
          %403 = vmatpush1.bf16.xpose.msra.mxu0 0
          %404 = vmatprep.subr.bf16.mxu0 0
          %405 = vmatpush1.bf16.xpose.msra.mxu0 0
          %406 = vmatprep.subr.bf16.mxu0 0
          %407 = vmatpush1.bf16.xpose.msra.mxu0 0
          %408 = vmatprep.subr.bf16.mxu0 0
          %409 = vmatpush1.bf16.xpose.msra.mxu0 0
          %410 = vmatprep.subr.bf16.mxu0 0
          %411 = vmatpush1.bf16.xpose.msra.mxu0 0
          %412 = vmatprep.subr.bf16.mxu0 0
          %413 = vmatpush1.bf16.xpose.msra.mxu0 0
          %414 = vmatprep.subr.bf16.mxu0 0
          %415 = vmatpush1.bf16.xpose.msra.mxu0 0
          %416 = vmatprep.subr.bf16.mxu0 0
          %417 = vmatpush1.bf16.xpose.msra.mxu0 0
          %418 = vmatprep.subr.bf16.mxu0 0
          %419 = vmatpush1.bf16.xpose.msra.mxu0 0
          %420 = vmatprep.subr.bf16.mxu0 0
          %421 = vmatpush1.bf16.xpose.msra.mxu0 0
          %422 = vmatprep.subr.bf16.mxu0 0
          %423 = vmatpush1.bf16.xpose.msra.mxu0 0
          %424 = vmatprep.subr.bf16.mxu0 0
          %425 = vmatpush1.bf16.xpose.msra.mxu0 0
          %426 = vmatprep.subr.bf16.mxu0 0
          %427 = vmatpush1.bf16.xpose.msra.mxu0 0
          %428 = vmatprep.mubr.bf16.mxu0 0
          %429 = vmatmul.mubr.bf16.gmra.mrb[0].mxu0 %v391
          %v430 = vpop.f32.mrb[0].mxu0
          %v431 = vadd.f32 0.0, %v430
          %v432 = vpop.f32.mrb[0].mxu0
          %v433 = vpop.f32.mrb[0].mxu0
          %v434 = vpop.f32.mrb[0].mxu0
          %435 = vdwg.mxu0
          %v436 = vmul.f32 %v431, 0.35355338
          %v437 = vsel %vm388, -1e+09, %v436
          %v438 = vld [vmem:[#allocation2] sm:$0xff]
          %v439 = vsel %vm389, %v437, -inf
          %440 = vmax.xlane.f32.xlu0 %v439
          %v441 = vpop.xlane.xlu0 %440
          %v442 = vmax.f32 %v438, %v441
          %v443 = vsub.f32 %v438, %v442
          %v444 = vmul.f32 %v443, 1.442695
          %v445 = vpow.pop %v444
          %447 = vset.pattern.permute.xlu0 0
          %448 = vperm.xlu0 %447, %v442
          %v449 = vpop.permute.xlu0 %448
          %v451 = vsub.f32 %v437, %v449
          %v452 = vmul.f32 %v451, 1.442695
          %v453 = vpow.pop %v452
          %v454 = vld [vmem:[#allocation3] sm:$0xff]
          %v455 = vmul.f32 %v445, %v454
          %v456 = vsel %vm389, %v453, 0.0
          %457 = vadd.xlane.f32.xlu0 %v456
          %v458 = vpop.xlane.xlu0 %457
          %v459 = vadd.f32 %v455, %v458
          %vm460 = vcmask 7168
          %461 = vst.msk [vmem:[#allocation3] sm:$0xff] %vm460, %v459
          %v462 = vld [vmem:[#allocation4] sm:$0xff]
          %464 = vset.pattern.permute.xlu0 0
          %465 = vperm.xlu0 %464, %v445
          %v466 = vpop.permute.xlu0 %465
          %v468 = vmul.f32 %v466, %v462
          %v469 = vpack.c.bf16 %v453, %v453
          %v471 = vsel %vm389, %v469, 0
          %vm473 = vcmask 1043456
          %v475 = vsel %vm473, %v370, 0
          %477 = vmatprep.subr.bf16.mxu0 0
          %478 = vmatpush1.bf16.msra.mxu0 %v475
          %479 = vmatprep.subr.bf16.mxu0 0
          %480 = vmatpush1.bf16.msra.mxu0 0
          %481 = vmatprep.subr.bf16.mxu0 0
          %482 = vmatpush1.bf16.msra.mxu0 0
          %483 = vmatprep.subr.bf16.mxu0 0
          %484 = vmatpush1.bf16.msra.mxu0 0
          %485 = vmatprep.subr.bf16.mxu0 0
          %486 = vmatpush1.bf16.msra.mxu0 0
          %487 = vmatprep.subr.bf16.mxu0 0
          %488 = vmatpush1.bf16.msra.mxu0 0
          %489 = vmatprep.subr.bf16.mxu0 0
          %490 = vmatpush1.bf16.msra.mxu0 0
          %491 = vmatprep.subr.bf16.mxu0 0
          %492 = vmatpush1.bf16.msra.mxu0 0
          %493 = vmatprep.subr.bf16.mxu0 0
          %494 = vmatpush1.bf16.msra.mxu0 0
          %495 = vmatprep.subr.bf16.mxu0 0
          %496 = vmatpush1.bf16.msra.mxu0 0
          %497 = vmatprep.subr.bf16.mxu0 0
          %498 = vmatpush1.bf16.msra.mxu0 0
          %499 = vmatprep.subr.bf16.mxu0 0
          %500 = vmatpush1.bf16.msra.mxu0 0
          %501 = vmatprep.subr.bf16.mxu0 0
          %502 = vmatpush1.bf16.msra.mxu0 0
          %503 = vmatprep.subr.bf16.mxu0 0
          %504 = vmatpush1.bf16.msra.mxu0 0
          %505 = vmatprep.subr.bf16.mxu0 0
          %506 = vmatpush1.bf16.msra.mxu0 0
          %507 = vmatprep.subr.bf16.mxu0 0
          %508 = vmatpush1.bf16.msra.mxu0 0
          %509 = vmatprep.mubr.bf16.mxu0 0
          %510 = vmatmul.mubr.bf16.gmra.mrb[0].mxu0 %v471
          %v511 = vpop.f32.mrb[0].mxu0
          %v512 = vadd.f32 0.0, %v511
          %v513 = vpop.f32.mrb[0].mxu0
          %v514 = vpop.f32.mrb[0].mxu0
          %v515 = vpop.f32.mrb[0].mxu0
          %516 = vdwg.mxu0
          %v517 = vadd.f32 %v468, %v512
          %518 = vst.msk [vmem:[#allocation4] sm:$0xff] %vm389, %v517
          %519 = vst.msk [vmem:[#allocation2] sm:$0xff] %vm460, %v442
          %v521 = vunpack.c.l.b16 %v368
          %v522 = vpack.c.b16 %v521, %v521
          %523 = vrot.lane.b32.xlu0 %v522, 120
          %v524 = vpop.permute.xlu0 %523
          %v526 = vunpack.c.l.b16 %v369
          %v527 = vpack.c.b16 %v526, %v526
          %528 = vrot.lane.b32.xlu0 %v527, 120
          %v529 = vpop.permute.xlu0 %528
          %v531 = vsel %vm389, %v524, 0
          %v534 = vsel %vm389, %v529, 0
          %536 = vmatprep.subr.bf16.mxu0 0
          %537 = vmatpush1.bf16.xpose.msra.mxu0 %v534
          %538 = vmatprep.subr.bf16.mxu0 0
          %539 = vmatpush1.bf16.xpose.msra.mxu0 0
          %540 = vmatprep.subr.bf16.mxu0 0
          %541 = vmatpush1.bf16.xpose.msra.mxu0 0
          %542 = vmatprep.subr.bf16.mxu0 0
          %543 = vmatpush1.bf16.xpose.msra.mxu0 0
          %544 = vmatprep.subr.bf16.mxu0 0
          %545 = vmatpush1.bf16.xpose.msra.mxu0 0
          %546 = vmatprep.subr.bf16.mxu0 0
          %547 = vmatpush1.bf16.xpose.msra.mxu0 0
          %548 = vmatprep.subr.bf16.mxu0 0
          %549 = vmatpush1.bf16.xpose.msra.mxu0 0
          %550 = vmatprep.subr.bf16.mxu0 0
          %551 = vmatpush1.bf16.xpose.msra.mxu0 0
          %552 = vmatprep.subr.bf16.mxu0 0
          %553 = vmatpush1.bf16.xpose.msra.mxu0 0
          %554 = vmatprep.subr.bf16.mxu0 0
          %555 = vmatpush1.bf16.xpose.msra.mxu0 0
          %556 = vmatprep.subr.bf16.mxu0 0
          %557 = vmatpush1.bf16.xpose.msra.mxu0 0
          %558 = vmatprep.subr.bf16.mxu0 0
          %559 = vmatpush1.bf16.xpose.msra.mxu0 0
          %560 = vmatprep.subr.bf16.mxu0 0
          %561 = vmatpush1.bf16.xpose.msra.mxu0 0
          %562 = vmatprep.subr.bf16.mxu0 0
          %563 = vmatpush1.bf16.xpose.msra.mxu0 0
          %564 = vmatprep.subr.bf16.mxu0 0
          %565 = vmatpush1.bf16.xpose.msra.mxu0 0
          %566 = vmatprep.subr.bf16.mxu0 0
          %567 = vmatpush1.bf16.xpose.msra.mxu0 0
          %568 = vmatprep.mubr.bf16.mxu0 0
          %569 = vmatmul.mubr.bf16.gmra.mrb[0].mxu0 %v531
          %v570 = vpop.f32.mrb[0].mxu0
          %v571 = vadd.f32 0.0, %v570
          %v572 = vpop.f32.mrb[0].mxu0
          %v573 = vpop.f32.mrb[0].mxu0
          %v574 = vpop.f32.mrb[0].mxu0
          %575 = vdwg.mxu0
          %v576 = vmul.f32 %v571, 0.35355338
          %v577 = vsel %vm388, -1e+09, %v576
          %v578 = vld [vmem:[#allocation2] sm:$0xff]
          %v579 = vsel %vm389, %v577, -inf
          %580 = vmax.xlane.f32.xlu0 %v579
          %v581 = vpop.xlane.xlu0 %580
          %v582 = vmax.f32 %v578, %v581
          %v583 = vsub.f32 %v578, %v582
          %v584 = vmul.f32 %v583, 1.442695
          %v585 = vpow.pop %v584
          %587 = vset.pattern.permute.xlu0 1
          %588 = vperm.xlu0 %587, %v582
          %v589 = vpop.permute.xlu0 %588
          %v591 = vsub.f32 %v577, %v589
          %v592 = vmul.f32 %v591, 1.442695
          %v593 = vpow.pop %v592
          %v594 = vld [vmem:[#allocation3] sm:$0xff]
          %v595 = vmul.f32 %v585, %v594
          %v596 = vsel %vm389, %v593, 0.0
          %597 = vadd.xlane.f32.xlu0 %v596
          %v598 = vpop.xlane.xlu0 %597
          %v599 = vadd.f32 %v595, %v598
          %vm600 = vcmask 15368
          %601 = vst.msk [vmem:[#allocation3] sm:$0xff] %vm600, %v599
          %v602 = vld [vmem:[#allocation4] sm:$0xff]
          %604 = vset.pattern.permute.xlu0 1
          %605 = vperm.xlu0 %604, %v585
          %v606 = vpop.permute.xlu0 %605
          %v608 = vmul.f32 %v606, %v602
          %v609 = vpack.c.bf16 %v593, %v593
          %v611 = vunpack.c.l.b16 %v370
          %v612 = vpack.c.b16 %v611, %v611
          %613 = vrot.lane.b32.xlu0 %v612, 120
          %v614 = vpop.permute.xlu0 %613
          %v616 = vsel %vm389, %v609, 0
          %v619 = vsel %vm473, %v614, 0
          %621 = vmatprep.subr.bf16.mxu0 0
          %622 = vmatpush1.bf16.msra.mxu0 %v619
          %623 = vmatprep.subr.bf16.mxu0 0
          %624 = vmatpush1.bf16.msra.mxu0 0
          %625 = vmatprep.subr.bf16.mxu0 0
          %626 = vmatpush1.bf16.msra.mxu0 0
          %627 = vmatprep.subr.bf16.mxu0 0
          %628 = vmatpush1.bf16.msra.mxu0 0
          %629 = vmatprep.subr.bf16.mxu0 0
          %630 = vmatpush1.bf16.msra.mxu0 0
          %631 = vmatprep.subr.bf16.mxu0 0
          %632 = vmatpush1.bf16.msra.mxu0 0
          %633 = vmatprep.subr.bf16.mxu0 0
          %634 = vmatpush1.bf16.msra.mxu0 0
          %635 = vmatprep.subr.bf16.mxu0 0
          %636 = vmatpush1.bf16.msra.mxu0 0
          %637 = vmatprep.subr.bf16.mxu0 0
          %638 = vmatpush1.bf16.msra.mxu0 0
          %639 = vmatprep.subr.bf16.mxu0 0
          %640 = vmatpush1.bf16.msra.mxu0 0
          %641 = vmatprep.subr.bf16.mxu0 0
          %642 = vmatpush1.bf16.msra.mxu0 0
          %643 = vmatprep.subr.bf16.mxu0 0
          %644 = vmatpush1.bf16.msra.mxu0 0
          %645 = vmatprep.subr.bf16.mxu0 0
          %646 = vmatpush1.bf16.msra.mxu0 0
          %647 = vmatprep.subr.bf16.mxu0 0
          %648 = vmatpush1.bf16.msra.mxu0 0
          %649 = vmatprep.subr.bf16.mxu0 0
          %650 = vmatpush1.bf16.msra.mxu0 0
          %651 = vmatprep.subr.bf16.mxu0 0
          %652 = vmatpush1.bf16.msra.mxu0 0
          %653 = vmatprep.mubr.bf16.mxu0 0
          %654 = vmatmul.mubr.bf16.gmra.mrb[0].mxu0 %v616
          %v655 = vpop.f32.mrb[0].mxu0
          %v656 = vadd.f32 0.0, %v655
          %v657 = vpop.f32.mrb[0].mxu0
          %v658 = vpop.f32.mrb[0].mxu0
          %v659 = vpop.f32.mrb[0].mxu0
          %660 = vdwg.mxu0
          %662 = vrot.lane.b32.xlu0 %v656, 8
          %v663 = vpop.permute.xlu0 %662
          %v665 = vadd.f32 %v608, %v663
          %vm666 = vcmask 130112
          %667 = vst.msk [vmem:[#allocation4] sm:$0xff] %vm666, %v665
          %668 = vst.msk [vmem:[#allocation2] sm:$0xff] %vm600, %v582
          %669 = vrot.lane.b32.xlu0 %v522, 112
          %v670 = vpop.permute.xlu0 %669
          %671 = vrot.lane.b32.xlu0 %v527, 112
          %v672 = vpop.permute.xlu0 %671
          %v674 = vsel %vm389, %v670, 0
          %v677 = vsel %vm389, %v672, 0
          %679 = vmatprep.subr.bf16.mxu0 0
          %680 = vmatpush1.bf16.xpose.msra.mxu0 %v677
          %681 = vmatprep.subr.bf16.mxu0 0
          %682 = vmatpush1.bf16.xpose.msra.mxu0 0
          %683 = vmatprep.subr.bf16.mxu0 0
          %684 = vmatpush1.bf16.xpose.msra.mxu0 0
          %685 = vmatprep.subr.bf16.mxu0 0
          %686 = vmatpush1.bf16.xpose.msra.mxu0 0
          %687 = vmatprep.subr.bf16.mxu0 0
          %688 = vmatpush1.bf16.xpose.msra.mxu0 0
          %689 = vmatprep.subr.bf16.mxu0 0
          %690 = vmatpush1.bf16.xpose.msra.mxu0 0
          %691 = vmatprep.subr.bf16.mxu0 0
          %692 = vmatpush1.bf16.xpose.msra.mxu0 0
          %693 = vmatprep.subr.bf16.mxu0 0
          %694 = vmatpush1.bf16.xpose.msra.mxu0 0
          %695 = vmatprep.subr.bf16.mxu0 0
          %696 = vmatpush1.bf16.xpose.msra.mxu0 0
          %697 = vmatprep.subr.bf16.mxu0 0
          %698 = vmatpush1.bf16.xpose.msra.mxu0 0
          %699 = vmatprep.subr.bf16.mxu0 0
          %700 = vmatpush1.bf16.xpose.msra.mxu0 0
          %701 = vmatprep.subr.bf16.mxu0 0
          %702 = vmatpush1.bf16.xpose.msra.mxu0 0
          %703 = vmatprep.subr.bf16.mxu0 0
          %704 = vmatpush1.bf16.xpose.msra.mxu0 0
          %705 = vmatprep.subr.bf16.mxu0 0
          %706 = vmatpush1.bf16.xpose.msra.mxu0 0
          %707 = vmatprep.subr.bf16.mxu0 0
          %708 = vmatpush1.bf16.xpose.msra.mxu0 0
          %709 = vmatprep.subr.bf16.mxu0 0
          %710 = vmatpush1.bf16.xpose.msra.mxu0 0
          %711 = vmatprep.mubr.bf16.mxu0 0
          %712 = vmatmul.mubr.bf16.gmra.mrb[0].mxu0 %v674
          %v713 = vpop.f32.mrb[0].mxu0
          %v714 = vadd.f32 0.0, %v713
          %v715 = vpop.f32.mrb[0].mxu0
          %v716 = vpop.f32.mrb[0].mxu0
          %v717 = vpop.f32.mrb[0].mxu0
          %718 = vdwg.mxu0
          %v719 = vmul.f32 %v714, 0.35355338
          %v720 = vsel %vm388, -1e+09, %v719
          %v721 = vld [vmem:[#allocation2] sm:$0xff]
          %v722 = vsel %vm389, %v720, -inf
          %723 = vmax.xlane.f32.xlu0 %v722
          %v724 = vpop.xlane.xlu0 %723
          %v725 = vmax.f32 %v721, %v724
          %v726 = vsub.f32 %v721, %v725
          %v727 = vmul.f32 %v726, 1.442695
          %v728 = vpow.pop %v727
          %730 = vset.pattern.permute.xlu0 2
          %731 = vperm.xlu0 %730, %v725
          %v732 = vpop.permute.xlu0 %731
          %v734 = vsub.f32 %v720, %v732
          %v735 = vmul.f32 %v734, 1.442695
          %v736 = vpow.pop %v735
          %v737 = vld [vmem:[#allocation3] sm:$0xff]
          %v738 = vmul.f32 %v728, %v737
          %v739 = vsel %vm389, %v736, 0.0
          %740 = vadd.xlane.f32.xlu0 %v739
          %v741 = vpop.xlane.xlu0 %740
          %v742 = vadd.f32 %v738, %v741
          %vm743 = vcmask 23568
          %744 = vst.msk [vmem:[#allocation3] sm:$0xff] %vm743, %v742
          %v745 = vld [vmem:[#allocation4] sm:$0xff]
          %747 = vset.pattern.permute.xlu0 2
          %748 = vperm.xlu0 %747, %v728
          %v749 = vpop.permute.xlu0 %748
          %v751 = vmul.f32 %v749, %v745
          %v752 = vpack.c.bf16 %v736, %v736
          %753 = vrot.lane.b32.xlu0 %v612, 112
          %v754 = vpop.permute.xlu0 %753
          %v756 = vsel %vm389, %v752, 0
          %v759 = vsel %vm473, %v754, 0
          %761 = vmatprep.subr.bf16.mxu0 0
          %762 = vmatpush1.bf16.msra.mxu0 %v759
          %763 = vmatprep.subr.bf16.mxu0 0
          %764 = vmatpush1.bf16.msra.mxu0 0
          %765 = vmatprep.subr.bf16.mxu0 0
          %766 = vmatpush1.bf16.msra.mxu0 0
          %767 = vmatprep.subr.bf16.mxu0 0
          %768 = vmatpush1.bf16.msra.mxu0 0
          %769 = vmatprep.subr.bf16.mxu0 0
          %770 = vmatpush1.bf16.msra.mxu0 0
          %771 = vmatprep.subr.bf16.mxu0 0
          %772 = vmatpush1.bf16.msra.mxu0 0
          %773 = vmatprep.subr.bf16.mxu0 0
          %774 = vmatpush1.bf16.msra.mxu0 0
          %775 = vmatprep.subr.bf16.mxu0 0
          %776 = vmatpush1.bf16.msra.mxu0 0
          %777 = vmatprep.subr.bf16.mxu0 0
          %778 = vmatpush1.bf16.msra.mxu0 0
          %779 = vmatprep.subr.bf16.mxu0 0
          %780 = vmatpush1.bf16.msra.mxu0 0
          %781 = vmatprep.subr.bf16.mxu0 0
          %782 = vmatpush1.bf16.msra.mxu0 0
          %783 = vmatprep.subr.bf16.mxu0 0
          %784 = vmatpush1.bf16.msra.mxu0 0
          %785 = vmatprep.subr.bf16.mxu0 0
          %786 = vmatpush1.bf16.msra.mxu0 0
          %787 = vmatprep.subr.bf16.mxu0 0
          %788 = vmatpush1.bf16.msra.mxu0 0
          %789 = vmatprep.subr.bf16.mxu0 0
          %790 = vmatpush1.bf16.msra.mxu0 0
          %791 = vmatprep.subr.bf16.mxu0 0
          %792 = vmatpush1.bf16.msra.mxu0 0
          %793 = vmatprep.mubr.bf16.mxu0 0
          %794 = vmatmul.mubr.bf16.gmra.mrb[0].mxu0 %v756
          %v795 = vpop.f32.mrb[0].mxu0
          %v796 = vadd.f32 0.0, %v795
          %v797 = vpop.f32.mrb[0].mxu0
          %v798 = vpop.f32.mrb[0].mxu0
          %v799 = vpop.f32.mrb[0].mxu0
          %800 = vdwg.mxu0
          %802 = vrot.lane.b32.xlu0 %v796, 16
          %v803 = vpop.permute.xlu0 %802
          %v805 = vadd.f32 %v751, %v803
          %vm806 = vcmask 195712
          %807 = vst.msk [vmem:[#allocation4] sm:$0xff] %vm806, %v805
          %808 = vst.msk [vmem:[#allocation2] sm:$0xff] %vm743, %v725
          %809 = vrot.lane.b32.xlu0 %v522, 104
          %v810 = vpop.permute.xlu0 %809
          %811 = vrot.lane.b32.xlu0 %v527, 104
          %v812 = vpop.permute.xlu0 %811
          %v814 = vsel %vm389, %v810, 0
          %v817 = vsel %vm389, %v812, 0
          %819 = vmatprep.subr.bf16.mxu0 0
          %820 = vmatpush1.bf16.xpose.msra.mxu0 %v817
          %821 = vmatprep.subr.bf16.mxu0 0
          %822 = vmatpush1.bf16.xpose.msra.mxu0 0
          %823 = vmatprep.subr.bf16.mxu0 0
          %824 = vmatpush1.bf16.xpose.msra.mxu0 0
          %825 = vmatprep.subr.bf16.mxu0 0
          %826 = vmatpush1.bf16.xpose.msra.mxu0 0
          %827 = vmatprep.subr.bf16.mxu0 0
          %828 = vmatpush1.bf16.xpose.msra.mxu0 0
          %829 = vmatprep.subr.bf16.mxu0 0
          %830 = vmatpush1.bf16.xpose.msra.mxu0 0
          %831 = vmatprep.subr.bf16.mxu0 0
          %832 = vmatpush1.bf16.xpose.msra.mxu0 0
          %833 = vmatprep.subr.bf16.mxu0 0
          %834 = vmatpush1.bf16.xpose.msra.mxu0 0
          %835 = vmatprep.subr.bf16.mxu0 0
          %836 = vmatpush1.bf16.xpose.msra.mxu0 0
          %837 = vmatprep.subr.bf16.mxu0 0
          %838 = vmatpush1.bf16.xpose.msra.mxu0 0
          %839 = vmatprep.subr.bf16.mxu0 0
          %840 = vmatpush1.bf16.xpose.msra.mxu0 0
          %841 = vmatprep.subr.bf16.mxu0 0
          %842 = vmatpush1.bf16.xpose.msra.mxu0 0
          %843 = vmatprep.subr.bf16.mxu0 0
          %844 = vmatpush1.bf16.xpose.msra.mxu0 0
          %845 = vmatprep.subr.bf16.mxu0 0
          %846 = vmatpush1.bf16.xpose.msra.mxu0 0
          %847 = vmatprep.subr.bf16.mxu0 0
          %848 = vmatpush1.bf16.xpose.msra.mxu0 0
          %849 = vmatprep.subr.bf16.mxu0 0
          %850 = vmatpush1.bf16.xpose.msra.mxu0 0
          %851 = vmatprep.mubr.bf16.mxu0 0
          %852 = vmatmul.mubr.bf16.gmra.mrb[0].mxu0 %v814
          %v853 = vpop.f32.mrb[0].mxu0
          %v854 = vadd.f32 0.0, %v853
          %v855 = vpop.f32.mrb[0].mxu0
          %v856 = vpop.f32.mrb[0].mxu0
          %v857 = vpop.f32.mrb[0].mxu0
          %858 = vdwg.mxu0
          %v859 = vmul.f32 %v854, 0.35355338
          %v860 = vsel %vm388, -1e+09, %v859
          %v861 = vld [vmem:[#allocation2] sm:$0xff]
          %v862 = vsel %vm389, %v860, -inf
          %863 = vmax.xlane.f32.xlu0 %v862
          %v864 = vpop.xlane.xlu0 %863
          %v865 = vmax.f32 %v861, %v864
          %v866 = vsub.f32 %v861, %v865
          %v867 = vmul.f32 %v866, 1.442695
          %v868 = vpow.pop %v867
          %870 = vset.pattern.permute.xlu0 3
          %871 = vperm.xlu0 %870, %v865
          %v872 = vpop.permute.xlu0 %871
          %v874 = vsub.f32 %v860, %v872
          %v875 = vmul.f32 %v874, 1.442695
          %v876 = vpow.pop %v875
          %v877 = vld [vmem:[#allocation3] sm:$0xff]
          %v878 = vmul.f32 %v868, %v877
          %v879 = vsel %vm389, %v876, 0.0
          %880 = vadd.xlane.f32.xlu0 %v879
          %v881 = vpop.xlane.xlu0 %880
          %v882 = vadd.f32 %v878, %v881
          %vm883 = vcmask 31768
          %884 = vst.msk [vmem:[#allocation3] sm:$0xff] %vm883, %v882
          %v885 = vld [vmem:[#allocation4] sm:$0xff]
          %887 = vset.pattern.permute.xlu0 3
          %888 = vperm.xlu0 %887, %v868
          %v889 = vpop.permute.xlu0 %888
          %v891 = vmul.f32 %v889, %v885
          %v892 = vpack.c.bf16 %v876, %v876
          %893 = vrot.lane.b32.xlu0 %v612, 104
          %v894 = vpop.permute.xlu0 %893
          %v896 = vsel %vm389, %v892, 0
          %v899 = vsel %vm473, %v894, 0
          %901 = vmatprep.subr.bf16.mxu0 0
          %902 = vmatpush1.bf16.msra.mxu0 %v899
          %903 = vmatprep.subr.bf16.mxu0 0
          %904 = vmatpush1.bf16.msra.mxu0 0
          %905 = vmatprep.subr.bf16.mxu0 0
          %906 = vmatpush1.bf16.msra.mxu0 0
          %907 = vmatprep.subr.bf16.mxu0 0
          %908 = vmatpush1.bf16.msra.mxu0 0
          %909 = vmatprep.subr.bf16.mxu0 0
          %910 = vmatpush1.bf16.msra.mxu0 0
          %911 = vmatprep.subr.bf16.mxu0 0
          %912 = vmatpush1.bf16.msra.mxu0 0
          %913 = vmatprep.subr.bf16.mxu0 0
          %914 = vmatpush1.bf16.msra.mxu0 0
          %915 = vmatprep.subr.bf16.mxu0 0
          %916 = vmatpush1.bf16.msra.mxu0 0
          %917 = vmatprep.subr.bf16.mxu0 0
          %918 = vmatpush1.bf16.msra.mxu0 0
          %919 = vmatprep.subr.bf16.mxu0 0
          %920 = vmatpush1.bf16.msra.mxu0 0
          %921 = vmatprep.subr.bf16.mxu0 0
          %922 = vmatpush1.bf16.msra.mxu0 0
          %923 = vmatprep.subr.bf16.mxu0 0
          %924 = vmatpush1.bf16.msra.mxu0 0
          %925 = vmatprep.subr.bf16.mxu0 0
          %926 = vmatpush1.bf16.msra.mxu0 0
          %927 = vmatprep.subr.bf16.mxu0 0
          %928 = vmatpush1.bf16.msra.mxu0 0
          %929 = vmatprep.subr.bf16.mxu0 0
          %930 = vmatpush1.bf16.msra.mxu0 0
          %931 = vmatprep.subr.bf16.mxu0 0
          %932 = vmatpush1.bf16.msra.mxu0 0
          %933 = vmatprep.mubr.bf16.mxu0 0
          %934 = vmatmul.mubr.bf16.gmra.mrb[0].mxu0 %v896
          %v935 = vpop.f32.mrb[0].mxu0
          %v936 = vadd.f32 0.0, %v935
          %v937 = vpop.f32.mrb[0].mxu0
          %v938 = vpop.f32.mrb[0].mxu0
          %v939 = vpop.f32.mrb[0].mxu0
          %940 = vdwg.mxu0
          %942 = vrot.lane.b32.xlu0 %v936, 24
          %v943 = vpop.permute.xlu0 %942
          %v945 = vadd.f32 %v891, %v943
          %vm946 = vcmask 261312
          %947 = vst.msk [vmem:[#allocation4] sm:$0xff] %vm946, %v945
          %948 = vst.msk [vmem:[#allocation2] sm:$0xff] %vm883, %v865
        $region60: #{transformer_forward.34} parent=35 // pred_fallthru
          _
        // Predicated region
        $region61: #{transformer_forward.34} parent=35 // pred_check
          %p949 = pneg %p352
        $region62: #{transformer_forward.34} parent=35 // pred_check_branch
          %951 = sbr.rel (%p949) target = $region64
        $region63: #{transformer_forward.34} parent=35 // pred_region
          %v952 = vld [vmem:[#allocation3] sm:$0xff]
          %v953 = vrcp.pop %v952
          %v954 = vld [vmem:[#allocation4] sm:$0xff]
          %956 = vset.pattern.permute.xlu0 0
          %957 = vperm.xlu0 %956, %v953
          %v958 = vpop.permute.xlu0 %957
          %v960 = vmul.f32 %v954, %v958
          %v961 = vpack.c.bf16 %v960, %v960
          %vm962 = vcmask 60416
          %963 = vst.msk [vmem:[%s350] sm:$0xf] %vm962, %v961
          %v964 = vld [vmem:[#allocation4] sm:$0xff]
          %965 = vset.pattern.permute.xlu0 1
          %966 = vperm.xlu0 %965, %v953
          %v967 = vpop.permute.xlu0 %966
          %v969 = vmul.f32 %v964, %v967
          %v970 = vpack.c.bf16 %v969, %v969
          %vm971 = vcmask 126016
          %972 = vst.msk [vmem:[%s350] sm:$0xf] %vm971, %v970
          %v973 = vld [vmem:[#allocation4] sm:$0xff]
          %974 = vset.pattern.permute.xlu0 2
          %975 = vperm.xlu0 %974, %v953
          %v976 = vpop.permute.xlu0 %975
          %v978 = vmul.f32 %v973, %v976
          %v979 = vpack.c.bf16 %v978, %v978
          %vm980 = vcmask 191616
          %981 = vst.msk [vmem:[%s350] sm:$0xf] %vm980, %v979
          %v982 = vld [vmem:[#allocation4] sm:$0xff]
          %983 = vset.pattern.permute.xlu0 3
          %984 = vperm.xlu0 %983, %v953
          %v985 = vpop.permute.xlu0 %984
          %v987 = vmul.f32 %v982, %v985
          %v988 = vpack.c.bf16 %v987, %v987
          %vm989 = vcmask 257216
          %990 = vst.msk [vmem:[%s350] sm:$0xf] %vm989, %v988
        $region64: #{transformer_forward.34} parent=35 // pred_fallthru
          _
        %s991 = sand.u32 %s168, 1
        %s992 = scalar_lea.sflag [#allocation7], %s991
        %s993 = sand.u32 %s168, 1
        %s994 = smul.addr %s993, 4
        %s995 = scalar_lea.vmem [#allocation13], %s994
        // Predicated region
        $region65: #{transformer_forward.34} parent=35 // pred_check
          %p996 = pneg %p178
        $region66: #{transformer_forward.34} parent=35 // pred_check_branch
          %998 = sbr.rel (%p996) target = $region68
        $region67: #{transformer_forward.34} parent=35 // pred_region
          %s1000 = ssub.s32 64, 64
          %1001 = vsyncadd %s992, %s1000
          %s1002 = sadd.s32 %s33, %s32
          %s1003 = smul.addr %s1002, 64
          %s1004 = scalar_lea.hbm %s4, %s1003
          %s1006 = sshll.u32 %s995, 4
          %s1007 = int_to_ptr.vmem [resolvable:$true] %s1006
          %1009 = dma.vmem_to_hbm [thread:$0]  %s1007, 64, %s1004, %s992
        $region68: #{transformer_forward.34} parent=35 // pred_fallthru
          _
      $region36: #{transformer_forward.34} parent=5 // pred_fallthru
        _
      %p1010 = scmp.le.s32.totalorder 2, %s22
      // Predicated region
      $region69: #{transformer_forward.34} parent=5 // pred_check
        %p1011 = pneg %p1010
      $region70: #{transformer_forward.34} parent=5 // pred_check_branch
        %1013 = sbr.rel (%p1011) target = $region72
      $region71: #{transformer_forward.34} parent=5 // pred_region
        %s1014 = ssub.s32 %s22, 2
        // Predicated region
        $region73: #{transformer_forward.34} parent=71 // pred_check
          %p1015 = pneg %p184
        $region74: #{transformer_forward.34} parent=71 // pred_check_branch
          %1017 = sbr.rel (%p1015) target = $region76
        $region75: #{transformer_forward.34} parent=71 // pred_region
          %s1018 = sand.u32 %s169, 1
          %s1019 = scalar_lea.sflag [#allocation7], %s1018
          %s1020 = sand.u32 %s169, 1
          %s1021 = smul.addr %s1020, 4
          %s1022 = scalar_lea.vmem [#allocation13], %s1021
          %1023 = dma.done %s1019, 64
        $region76: #{transformer_forward.34} parent=71 // pred_fallthru
          _
      $region72: #{transformer_forward.34} parent=5 // pred_fallthru
        _
    $region6: #{transformer_forward.34} parent=1 // loop_footer
      %s26 = sadd.s32 1, %s22
    $region7: #{transformer_forward.34} parent=1 // loop_footer_branch
      %21 = sbr.rel target = $region3
    $region8: #{transformer_forward.34} parent=1 // loop_exit
      _
    %1024 = vsyncpa [#allocation6], 1
    %s1025 = scalar_lea.sflag [#allocation6], 1
    %1026 = vsyncpa %s1025, 1
    %1027 = vsyncpa [#allocation9], 1
    %s1028 = scalar_lea.sflag [#allocation9], 1
    %1029 = vsyncpa %s1028, 1
    %1030 = vsyncpa [#allocation12], 1
    %s1031 = scalar_lea.sflag [#allocation12], 1
    %1032 = vsyncpa %s1031, 1
    %1033 = vsyncpa [#allocation7], 1
    %s1034 = scalar_lea.sflag [#allocation7], 1
    %1035 = vsyncpa %s1034, 1

// kernel: transformer_forward.37
$region0: #{transformer_forward.37}
  #allocation0 [shape = 'u32[]', space=smem, size = 0x4, offset = 0x4, fixed_abs, tag = 'smem constant byte address 0x4 - core index']
  #allocation1 [shape = 'u32[144,128]{1,0:T(1,128)}', space=vmem, size = 0x12000, scoped, tag = 'internal scratch']
  #allocation2 [shape = 'f32[16,64]{1,0:T(8,128)}', space=vmem, size = 0x2000, scoped, tag = 'scratch operand']
  %s0 = inlined_call_operand.hbm [shape: bf16[16,32], index: 0, kind: input, shape index: {}]
  %s1 = inlined_call_operand.hbm [shape: bf16[32,64], index: 1, kind: input, shape index: {}]
  %s2 = inlined_call_operand.hbm [shape: f32[1,64], index: 2, kind: input, shape index: {}]
  %s3 = inlined_call_operand.hbm [shape: bf16[16,64], index: 3, kind: output, shape index: {}]
  %s4 = sld [smem:[#allocation0]]
  $region42: #{transformer_forward.37} parent=0
    _
  %s6 = ssub.s32 1, %s4
  %s7 = scalar_select 0, %s6, %s4
  $region1: #{transformer_forward.37} parent=0
    #allocation3 [shape = 'u8[4096]{0}', space=vmem, size = 0x1000, scoped, tag = 'input window, operand 0, single buffered']
    #allocation4 [shape = 's32[1]{0}', space=sflag, size = 0x4, scoped, tag = 'scoped memory for transformer_forward.37']
    #allocation5 [shape = 's32[1]{0}', space=sflag, size = 0x4, scoped, tag = 'scoped memory for transformer_forward.37']
    #allocation6 [shape = 'u8[8192]{0}', space=vmem, size = 0x2000, scoped, tag = 'input window, operand 1, single buffered']
    #allocation7 [shape = 's32[1]{0}', space=sflag, size = 0x4, scoped, tag = 'scoped memory for transformer_forward.37']
    #allocation8 [shape = 'u8[512]{0}', space=vmem, size = 0x400, scoped, tag = 'input window, operand 2, single buffered']
    #allocation9 [shape = 'u8[4096]{0}', space=vmem, size = 0x1000, scoped, tag = 'output window, operand 0, single buffered']
    %8 = vsyncpa [#allocation4], 0
    %9 = vsyncpa [#allocation7], 0
    %10 = vsyncpa [#allocation5], 0
    // Predicated region
    $region2: #{transformer_forward.37} parent=1 // pred_check
      _
    $region3: #{transformer_forward.37} parent=1 // pred_check_branch
      %12 = sbr.rel (0) target = $region5
    $region4: #{transformer_forward.37} parent=1 // pred_region
      %s14 = ssub.s32 128, 128
      %15 = vsyncadd [#allocation4], %s14
      %s16 = sshll.u32 [#allocation3], 4
      %s17 = int_to_ptr.vmem [resolvable:$true] %s16
      %22 = dma.hbm_to_vmem [thread:$0]  %s0, 128, %s17, [#allocation4], 64, 64, 4
    $region5: #{transformer_forward.37} parent=1 // pred_fallthru
      _
    // Predicated region
    $region6: #{transformer_forward.37} parent=1 // pred_check
      _
    $region7: #{transformer_forward.37} parent=1 // pred_check_branch
      %24 = sbr.rel (0) target = $region9
    $region8: #{transformer_forward.37} parent=1 // pred_region
      %s26 = ssub.s32 256, 256
      %27 = vsyncadd [#allocation7], %s26
      %s28 = sshll.u32 [#allocation6], 4
      %s29 = int_to_ptr.vmem [resolvable:$true] %s28
      %34 = dma.hbm_to_vmem [thread:$0]  %s1, 256, %s29, [#allocation7], 64, 64, 4
    $region9: #{transformer_forward.37} parent=1 // pred_fallthru
      _
    // Predicated region
    $region10: #{transformer_forward.37} parent=1 // pred_check
      _
    $region11: #{transformer_forward.37} parent=1 // pred_check_branch
      %36 = sbr.rel (0) target = $region13
    $region12: #{transformer_forward.37} parent=1 // pred_region
      %s38 = ssub.s32 16, 16
      %39 = vsyncadd [#allocation7], %s38
      %s41 = sshll.u32 [#allocation8], 4
      %s42 = int_to_ptr.vmem [resolvable:$true] %s41
      %44 = dma.hbm_to_vmem [thread:$0]  %s2, 16, %s42, [#allocation7]
    $region13: #{transformer_forward.37} parent=1 // pred_fallthru
      _
    // Predicated region
    $region14: #{transformer_forward.37} parent=1 // pred_check
      _
    $region15: #{transformer_forward.37} parent=1 // pred_check_branch
      %46 = sbr.rel (0) target = $region17
    $region16: #{transformer_forward.37} parent=1 // pred_region
      %47 = dma.done [#allocation4], 128
    $region17: #{transformer_forward.37} parent=1 // pred_fallthru
      _
    // Predicated region
    $region18: #{transformer_forward.37} parent=1 // pred_check
      _
    $region19: #{transformer_forward.37} parent=1 // pred_check_branch
      %49 = sbr.rel (0) target = $region21
    $region20: #{transformer_forward.37} parent=1 // pred_region
      %50 = dma.done [#allocation7], 256
    $region21: #{transformer_forward.37} parent=1 // pred_fallthru
      _
    // Predicated region
    $region22: #{transformer_forward.37} parent=1 // pred_check
      _
    $region23: #{transformer_forward.37} parent=1 // pred_check_branch
      %52 = sbr.rel (0) target = $region25
    $region24: #{transformer_forward.37} parent=1 // pred_region
      %53 = dma.done [#allocation7], 16
    $region25: #{transformer_forward.37} parent=1 // pred_fallthru
      _
    %p55 = scmp.eq.s32.totalorder 0, 0
    // Predicated region
    $region26: #{transformer_forward.37} parent=1 // pred_check
      %p56 = pneg %p55
    $region27: #{transformer_forward.37} parent=1 // pred_check_branch
      %58 = sbr.rel (%p56) target = $region29
    $region28: #{transformer_forward.37} parent=1 // pred_region
      %vm59 = vcmask 523264
      %60 = vst.msk [vmem:[#allocation2] sm:$0xff] %vm59, 0.0
      %61 = vst.msk [vmem:[#allocation2 + $0x8] sm:$0xff] %vm59, 0.0
    $region29: #{transformer_forward.37} parent=1 // pred_fallthru
      _
    %v62 = vld [vmem:[#allocation2] sm:$0xff]
    %v63 = vld [vmem:[#allocation2 + $0x8] sm:$0xff]
    %v64 = vld [vmem:[#allocation3] sm:$0xf]
    %v65 = vld [vmem:[#allocation3 + $0x4] sm:$0xf]
    %v66 = vld [vmem:[#allocation6] sm:$0xf]
    %v67 = vld [vmem:[#allocation6 + $0x4] sm:$0xf]
    %v68 = vld [vmem:[#allocation6 + $0x8] sm:$0xf]
    %v69 = vld [vmem:[#allocation6 + $0xc] sm:$0xf]
    %v72 = vunpack.c.l.b16 %v64
    %v73 = vunpack.c.l.b16 %v65
    %v74 = vpack.c.b16 %v73, %v72
    %v79 = vunpack.c.l.b16 %v66
    %v80 = vunpack.c.l.b16 %v67
    %v81 = vunpack.c.l.b16 %v68
    %v82 = vunpack.c.l.b16 %v69
    %v83 = vpack.c.b16 %v80, %v79
    %v84 = vpack.c.b16 %v82, %v81
    %vm87 = vcmask 261120
    %v89 = vsel %vm87, %v74, 0
    %91 = vmatprep.subr.bf16.mxu0 0
    %92 = vmatpush1.bf16.msra.mxu0 %v83
    %93 = vmatprep.subr.bf16.mxu0 0
    %94 = vmatpush1.bf16.msra.mxu0 %v84
    %95 = vmatprep.subr.bf16.mxu0 0
    %96 = vmatpush1.bf16.msra.mxu0 0
    %97 = vmatprep.subr.bf16.mxu0 0
    %98 = vmatpush1.bf16.msra.mxu0 0
    %99 = vmatprep.subr.bf16.mxu0 0
    %100 = vmatpush1.bf16.msra.mxu0 0
    %101 = vmatprep.subr.bf16.mxu0 0
    %102 = vmatpush1.bf16.msra.mxu0 0
    %103 = vmatprep.subr.bf16.mxu0 0
    %104 = vmatpush1.bf16.msra.mxu0 0
    %105 = vmatprep.subr.bf16.mxu0 0
    %106 = vmatpush1.bf16.msra.mxu0 0
    %107 = vmatprep.subr.bf16.mxu0 0
    %108 = vmatpush1.bf16.msra.mxu0 0
    %109 = vmatprep.subr.bf16.mxu0 0
    %110 = vmatpush1.bf16.msra.mxu0 0
    %111 = vmatprep.subr.bf16.mxu0 0
    %112 = vmatpush1.bf16.msra.mxu0 0
    %113 = vmatprep.subr.bf16.mxu0 0
    %114 = vmatpush1.bf16.msra.mxu0 0
    %115 = vmatprep.subr.bf16.mxu0 0
    %116 = vmatpush1.bf16.msra.mxu0 0
    %117 = vmatprep.subr.bf16.mxu0 0
    %118 = vmatpush1.bf16.msra.mxu0 0
    %119 = vmatprep.subr.bf16.mxu0 0
    %120 = vmatpush1.bf16.msra.mxu0 0
    %121 = vmatprep.subr.bf16.mxu0 0
    %122 = vmatpush1.bf16.msra.mxu0 0
    %123 = vmatprep.mubr.bf16.mxu0 0
    %124 = vmatmul.mubr.bf16.gmra.mrb[0].mxu0 %v89
    %v125 = vpop.f32.mrb[0].mxu0
    %v126 = vadd.f32 0.0, %v125
    %v127 = vpop.f32.mrb[0].mxu0
    %v128 = vpop.f32.mrb[0].mxu0
    %v129 = vadd.f32 0.0, %v128
    %v130 = vpop.f32.mrb[0].mxu0
    %131 = vdwg.mxu0
    %v132 = vadd.f32 %v62, %v126
    %v133 = vadd.f32 %v63, %v129
    %vm134 = vcmask 523264
    %135 = vst.msk [vmem:[#allocation2] sm:$0xff] %vm134, %v132
    %136 = vst.msk [vmem:[#allocation2 + $0x8] sm:$0xff] %vm134, %v133
    // Predicated region
    $region30: #{transformer_forward.37} parent=1 // pred_check
      %p137 = pneg %p55
    $region31: #{transformer_forward.37} parent=1 // pred_check_branch
      %139 = sbr.rel (%p137) target = $region33
    $region32: #{transformer_forward.37} parent=1 // pred_region
      %v140 = vld [vmem:[#allocation2] sm:$0xff]
      %v141 = vld [vmem:[#allocation2 + $0x8] sm:$0xff]
      %v142 = vld [vmem:[#allocation8] sm:$0x1]
      %v144 = vlaneseq
      %v145 = vshrl.u32 %v144, 7
      %v146 = vsub.s32 0, %v145
      %v147 = vrot.slane %v142, %v146
      %v149 = vadd.f32 %v140, %v147
      %v150 = vadd.f32 %v141, %v147
      %v151 = vpack.c.bf16 %v150, %v149
      %v153 = vunpack.c.l.b16 %v151
      %v154 = vunpack.c.h.b16 %v151
      %v155 = vpack.c.b16 %v153, %v153
      %v156 = vpack.c.b16 %v154, %v154
      %vm159 = vcmask 519168
      %160 = vst.msk [vmem:[#allocation9] sm:$0xf] %vm159, %v155
      %161 = vst.msk [vmem:[#allocation9 + $0x4] sm:$0xf] %vm159, %v156
    $region33: #{transformer_forward.37} parent=1 // pred_fallthru
      _
    // Predicated region
    $region34: #{transformer_forward.37} parent=1 // pred_check
      _
    $region35: #{transformer_forward.37} parent=1 // pred_check_branch
      %163 = sbr.rel (0) target = $region37
    $region36: #{transformer_forward.37} parent=1 // pred_region
      %s165 = ssub.s32 128, 128
      %166 = vsyncadd [#allocation5], %s165
      %s167 = sshll.u32 [#allocation9], 4
      %s168 = int_to_ptr.vmem [resolvable:$true] %s167
      %173 = dma.vmem_to_hbm [thread:$0]  %s168, 128, %s3, [#allocation5], 64, 64, 4
    $region37: #{transformer_forward.37} parent=1 // pred_fallthru
      _
    // Predicated region
    $region38: #{transformer_forward.37} parent=1 // pred_check
      _
    $region39: #{transformer_forward.37} parent=1 // pred_check_branch
      %175 = sbr.rel (0) target = $region41
    $region40: #{transformer_forward.37} parent=1 // pred_region
      %176 = dma.done [#allocation5], 128
    $region41: #{transformer_forward.37} parent=1 // pred_fallthru
      _
    %177 = vsyncpa [#allocation4], 1
    %178 = vsyncpa [#allocation7], 1
    %179 = vsyncpa [#allocation5], 1

// kernel: transformer_forward.49
$region0: #{transformer_forward.49}
  #allocation0 [shape = 'u32[]', space=smem, size = 0x4, offset = 0x4, fixed_abs, tag = 'smem constant byte address 0x4 - core index']
  #allocation1 [shape = 'u32[144,128]{1,0:T(1,128)}', space=vmem, size = 0x12000, scoped, tag = 'internal scratch']
  #allocation2 [shape = 'f32[16,16]{1,0:T(8,128)}', space=vmem, size = 0x2000, scoped, tag = 'scratch operand']
  %s0 = inlined_call_operand.hbm [shape: bf16[16,32], index: 0, kind: input, shape index: {}]
  %s1 = inlined_call_operand.hbm [shape: bf16[32,16], index: 1, kind: input, shape index: {}]
  %s2 = inlined_call_operand.hbm [shape: f32[1,16], index: 2, kind: input, shape index: {}]
  %s3 = inlined_call_operand.hbm [shape: f32[16,16], index: 3, kind: output, shape index: {}]
  %s4 = sld [smem:[#allocation0]]
  $region42: #{transformer_forward.49} parent=0
    _
  %s6 = ssub.s32 1, %s4
  %s7 = scalar_select 0, %s6, %s4
  $region1: #{transformer_forward.49} parent=0
    #allocation3 [shape = 'u8[4096]{0}', space=vmem, size = 0x1000, scoped, tag = 'input window, operand 0, single buffered']
    #allocation4 [shape = 's32[1]{0}', space=sflag, size = 0x4, scoped, tag = 'scoped memory for transformer_forward.49']
    #allocation5 [shape = 's32[1]{0}', space=sflag, size = 0x4, scoped, tag = 'scoped memory for transformer_forward.49']
    #allocation6 [shape = 'u8[8192]{0}', space=vmem, size = 0x2000, scoped, tag = 'input window, operand 1, single buffered']
    #allocation7 [shape = 's32[1]{0}', space=sflag, size = 0x4, scoped, tag = 'scoped memory for transformer_forward.49']
    #allocation8 [shape = 'u8[512]{0}', space=vmem, size = 0x400, scoped, tag = 'input window, operand 2, single buffered']
    #allocation9 [shape = 'u8[8192]{0}', space=vmem, size = 0x2000, scoped, tag = 'output window, operand 0, single buffered']
    %8 = vsyncpa [#allocation4], 0
    %9 = vsyncpa [#allocation7], 0
    %10 = vsyncpa [#allocation5], 0
    // Predicated region
    $region2: #{transformer_forward.49} parent=1 // pred_check
      _
    $region3: #{transformer_forward.49} parent=1 // pred_check_branch
      %12 = sbr.rel (0) target = $region5
    $region4: #{transformer_forward.49} parent=1 // pred_region
      %s14 = ssub.s32 128, 128
      %15 = vsyncadd [#allocation4], %s14
      %s16 = sshll.u32 [#allocation3], 4
      %s17 = int_to_ptr.vmem [resolvable:$true] %s16
      %22 = dma.hbm_to_vmem [thread:$0]  %s0, 128, %s17, [#allocation4], 64, 64, 4
    $region5: #{transformer_forward.49} parent=1 // pred_fallthru
      _
    // Predicated region
    $region6: #{transformer_forward.49} parent=1 // pred_check
      _
    $region7: #{transformer_forward.49} parent=1 // pred_check_branch
      %24 = sbr.rel (0) target = $region9
    $region8: #{transformer_forward.49} parent=1 // pred_region
      %s26 = ssub.s32 256, 256
      %27 = vsyncadd [#allocation7], %s26
      %s28 = sshll.u32 [#allocation6], 4
      %s29 = int_to_ptr.vmem [resolvable:$true] %s28
      %34 = dma.hbm_to_vmem [thread:$0]  %s1, 256, %s29, [#allocation7], 64, 64, 4
    $region9: #{transformer_forward.49} parent=1 // pred_fallthru
      _
    // Predicated region
    $region10: #{transformer_forward.49} parent=1 // pred_check
      _
    $region11: #{transformer_forward.49} parent=1 // pred_check_branch
      %36 = sbr.rel (0) target = $region13
    $region12: #{transformer_forward.49} parent=1 // pred_region
      %s38 = ssub.s32 16, 16
      %39 = vsyncadd [#allocation7], %s38
      %s41 = sshll.u32 [#allocation8], 4
      %s42 = int_to_ptr.vmem [resolvable:$true] %s41
      %44 = dma.hbm_to_vmem [thread:$0]  %s2, 16, %s42, [#allocation7]
    $region13: #{transformer_forward.49} parent=1 // pred_fallthru
      _
    // Predicated region
    $region14: #{transformer_forward.49} parent=1 // pred_check
      _
    $region15: #{transformer_forward.49} parent=1 // pred_check_branch
      %46 = sbr.rel (0) target = $region17
    $region16: #{transformer_forward.49} parent=1 // pred_region
      %47 = dma.done [#allocation4], 128
    $region17: #{transformer_forward.49} parent=1 // pred_fallthru
      _
    // Predicated region
    $region18: #{transformer_forward.49} parent=1 // pred_check
      _
    $region19: #{transformer_forward.49} parent=1 // pred_check_branch
      %49 = sbr.rel (0) target = $region21
    $region20: #{transformer_forward.49} parent=1 // pred_region
      %50 = dma.done [#allocation7], 256
    $region21: #{transformer_forward.49} parent=1 // pred_fallthru
      _
    // Predicated region
    $region22: #{transformer_forward.49} parent=1 // pred_check
      _
    $region23: #{transformer_forward.49} parent=1 // pred_check_branch
      %52 = sbr.rel (0) target = $region25
    $region24: #{transformer_forward.49} parent=1 // pred_region
      %53 = dma.done [#allocation7], 16
    $region25: #{transformer_forward.49} parent=1 // pred_fallthru
      _
    %p55 = scmp.eq.s32.totalorder 0, 0
    // Predicated region
    $region26: #{transformer_forward.49} parent=1 // pred_check
      %p56 = pneg %p55
    $region27: #{transformer_forward.49} parent=1 // pred_check_branch
      %58 = sbr.rel (%p56) target = $region29
    $region28: #{transformer_forward.49} parent=1 // pred_region
      %vm59 = vcmask 130048
      %60 = vst.msk [vmem:[#allocation2] sm:$0xff] %vm59, 0.0
      %61 = vst.msk [vmem:[#allocation2 + $0x8] sm:$0xff] %vm59, 0.0
    $region29: #{transformer_forward.49} parent=1 // pred_fallthru
      _
    %v62 = vld [vmem:[#allocation2] sm:$0xff]
    %v63 = vld [vmem:[#allocation2 + $0x8] sm:$0xff]
    %v64 = vld [vmem:[#allocation3] sm:$0xf]
    %v65 = vld [vmem:[#allocation3 + $0x4] sm:$0xf]
    %v66 = vld [vmem:[#allocation6] sm:$0xf]
    %v67 = vld [vmem:[#allocation6 + $0x4] sm:$0xf]
    %v68 = vld [vmem:[#allocation6 + $0x8] sm:$0xf]
    %v69 = vld [vmem:[#allocation6 + $0xc] sm:$0xf]
    %v72 = vunpack.c.l.b16 %v64
    %v73 = vunpack.c.l.b16 %v65
    %v74 = vpack.c.b16 %v73, %v72
    %v79 = vunpack.c.l.b16 %v66
    %v80 = vunpack.c.l.b16 %v67
    %v81 = vunpack.c.l.b16 %v68
    %v82 = vunpack.c.l.b16 %v69
    %v83 = vpack.c.b16 %v80, %v79
    %v84 = vpack.c.b16 %v82, %v81
    %vm87 = vcmask 261120
    %v89 = vsel %vm87, %v74, 0
    %91 = vmatprep.subr.bf16.mxu0 0
    %92 = vmatpush1.bf16.msra.mxu0 %v83
    %93 = vmatprep.subr.bf16.mxu0 0
    %94 = vmatpush1.bf16.msra.mxu0 %v84
    %95 = vmatprep.subr.bf16.mxu0 0
    %96 = vmatpush1.bf16.msra.mxu0 0
    %97 = vmatprep.subr.bf16.mxu0 0
    %98 = vmatpush1.bf16.msra.mxu0 0
    %99 = vmatprep.subr.bf16.mxu0 0
    %100 = vmatpush1.bf16.msra.mxu0 0
    %101 = vmatprep.subr.bf16.mxu0 0
    %102 = vmatpush1.bf16.msra.mxu0 0
    %103 = vmatprep.subr.bf16.mxu0 0
    %104 = vmatpush1.bf16.msra.mxu0 0
    %105 = vmatprep.subr.bf16.mxu0 0
    %106 = vmatpush1.bf16.msra.mxu0 0
    %107 = vmatprep.subr.bf16.mxu0 0
    %108 = vmatpush1.bf16.msra.mxu0 0
    %109 = vmatprep.subr.bf16.mxu0 0
    %110 = vmatpush1.bf16.msra.mxu0 0
    %111 = vmatprep.subr.bf16.mxu0 0
    %112 = vmatpush1.bf16.msra.mxu0 0
    %113 = vmatprep.subr.bf16.mxu0 0
    %114 = vmatpush1.bf16.msra.mxu0 0
    %115 = vmatprep.subr.bf16.mxu0 0
    %116 = vmatpush1.bf16.msra.mxu0 0
    %117 = vmatprep.subr.bf16.mxu0 0
    %118 = vmatpush1.bf16.msra.mxu0 0
    %119 = vmatprep.subr.bf16.mxu0 0
    %120 = vmatpush1.bf16.msra.mxu0 0
    %121 = vmatprep.subr.bf16.mxu0 0
    %122 = vmatpush1.bf16.msra.mxu0 0
    %123 = vmatprep.mubr.bf16.mxu0 0
    %124 = vmatmul.mubr.bf16.gmra.mrb[0].mxu0 %v89
    %v125 = vpop.f32.mrb[0].mxu0
    %v126 = vadd.f32 0.0, %v125
    %v127 = vpop.f32.mrb[0].mxu0
    %v128 = vpop.f32.mrb[0].mxu0
    %v129 = vadd.f32 0.0, %v128
    %v130 = vpop.f32.mrb[0].mxu0
    %131 = vdwg.mxu0
    %v132 = vadd.f32 %v62, %v126
    %v133 = vadd.f32 %v63, %v129
    %vm134 = vcmask 130048
    %135 = vst.msk [vmem:[#allocation2] sm:$0xff] %vm134, %v132
    %136 = vst.msk [vmem:[#allocation2 + $0x8] sm:$0xff] %vm134, %v133
    // Predicated region
    $region30: #{transformer_forward.49} parent=1 // pred_check
      %p137 = pneg %p55
    $region31: #{transformer_forward.49} parent=1 // pred_check_branch
      %139 = sbr.rel (%p137) target = $region33
    $region32: #{transformer_forward.49} parent=1 // pred_region
      %v140 = vld [vmem:[#allocation2] sm:$0xff]
      %v141 = vld [vmem:[#allocation2 + $0x8] sm:$0xff]
      %v142 = vld [vmem:[#allocation8] sm:$0x1]
      %v144 = vlaneseq
      %v145 = vshrl.u32 %v144, 7
      %v146 = vsub.s32 0, %v145
      %v147 = vrot.slane %v142, %v146
      %v149 = vadd.f32 %v140, %v147
      %v150 = vadd.f32 %v141, %v147
      %151 = vst.msk [vmem:[#allocation9] sm:$0xff] %vm134, %v149
      %152 = vst.msk [vmem:[#allocation9 + $0x8] sm:$0xff] %vm134, %v150
    $region33: #{transformer_forward.49} parent=1 // pred_fallthru
      _
    // Predicated region
    $region34: #{transformer_forward.49} parent=1 // pred_check
      _
    $region35: #{transformer_forward.49} parent=1 // pred_check_branch
      %154 = sbr.rel (0) target = $region37
    $region36: #{transformer_forward.49} parent=1 // pred_region
      %s156 = ssub.s32 256, 256
      %157 = vsyncadd [#allocation5], %s156
      %s158 = sshll.u32 [#allocation9], 4
      %s159 = int_to_ptr.vmem [resolvable:$true] %s158
      %164 = dma.vmem_to_hbm [thread:$0]  %s159, 256, %s3, [#allocation5], 128, 128, 8
    $region37: #{transformer_forward.49} parent=1 // pred_fallthru
      _
    // Predicated region
    $region38: #{transformer_forward.49} parent=1 // pred_check
      _
    $region39: #{transformer_forward.49} parent=1 // pred_check_branch
      %166 = sbr.rel (0) target = $region41
    $region40: #{transformer_forward.49} parent=1 // pred_region
      %167 = dma.done [#allocation5], 256
    $region41: #{transformer_forward.49} parent=1 // pred_fallthru
      _
    %168 = vsyncpa [#allocation4], 1
    %169 = vsyncpa [#allocation7], 1
    %170 = vsyncpa [#allocation5], 1

// kernel: transformer_forward.26
$region0: #{transformer_forward.26}
  #allocation0 [shape = 'u32[]', space=smem, size = 0x4, offset = 0x4, fixed_abs, tag = 'smem constant byte address 0x4 - core index']
  #allocation1 [shape = 'u32[144,128]{1,0:T(1,128)}', space=vmem, size = 0x12000, scoped, tag = 'internal scratch']
  #allocation2 [shape = 'f32[8,4]{1,0:T(8,128)}', space=vmem, size = 0x1000, scoped, tag = 'scratch operand']
  #allocation3 [shape = 'f32[8,4]{1,0:T(8,128)}', space=vmem, size = 0x1000, scoped, tag = 'scratch operand']
  #allocation4 [shape = 'f32[8,32]{1,0:T(8,128)}', space=vmem, size = 0x1000, scoped, tag = 'scratch operand']
  %s0 = inlined_call_operand.hbm [shape: bf16[2,8,32], index: 0, kind: input, shape index: {}]
  %s1 = inlined_call_operand.hbm [shape: bf16[2,8,32], index: 1, kind: input, shape index: {}]
  %s2 = inlined_call_operand.hbm [shape: bf16[2,8,32], index: 2, kind: input, shape index: {}]
  %s3 = inlined_call_operand.hbm [shape: f32[2,1,8], index: 3, kind: input, shape index: {}]
  %s4 = inlined_call_operand.hbm [shape: bf16[2,8,32], index: 4, kind: output, shape index: {}]
  %s5 = sld [smem:[#allocation0]]
  $region73: #{transformer_forward.26} parent=0
    _
  %s7 = ssub.s32 1, %s5
  %s8 = scalar_select 0, %s7, %s5
  $region1: #{transformer_forward.26} parent=0
    #allocation5 [shape = 'u8[4096]{0}', space=vmem, size = 0x1000, scoped, tag = 'input window, operand 0']
    #allocation6 [shape = 's32[2]{0}', space=sflag, size = 0x8, scoped, tag = 'scoped memory for transformer_forward.26']
    #allocation7 [shape = 's32[2]{0}', space=sflag, size = 0x8, scoped, tag = 'scoped memory for transformer_forward.26']
    #allocation8 [shape = 'u8[4096]{0}', space=vmem, size = 0x1000, scoped, tag = 'input window, operand 1']
    #allocation9 [shape = 's32[2]{0}', space=sflag, size = 0x8, scoped, tag = 'scoped memory for transformer_forward.26']
    #allocation10 [shape = 'u8[4096]{0}', space=vmem, size = 0x1000, scoped, tag = 'input window, operand 2']
    #allocation11 [shape = 'u8[1024]{0}', space=vmem, size = 0x400, scoped, tag = 'input window, operand 3']
    #allocation12 [shape = 's32[2]{0}', space=sflag, size = 0x8, scoped, tag = 'scoped memory for transformer_forward.26']
    #allocation13 [shape = 'u8[4096]{0}', space=vmem, size = 0x1000, scoped, tag = 'output window, operand 0']
    %9 = vsyncpa [#allocation6], 0
    %s10 = scalar_lea.sflag [#allocation6], 1
    %11 = vsyncpa %s10, 0
    %12 = vsyncpa [#allocation9], 0
    %s13 = scalar_lea.sflag [#allocation9], 1
    %14 = vsyncpa %s13, 0
    %15 = vsyncpa [#allocation12], 0
    %s16 = scalar_lea.sflag [#allocation12], 1
    %17 = vsyncpa %s16, 0
    %18 = vsyncpa [#allocation7], 0
    %s19 = scalar_lea.sflag [#allocation7], 1
    %20 = vsyncpa %s19, 0
    loop: start=0, step=1, limit=4
    $region2: #{transformer_forward.26} parent=1 // loop_pre_header
      _
    $region3: #{transformer_forward.26} parent=1 // loop_header
      %s22 = sphi 0, %s26
      %p23 = scmp.ge.s32.totalorder %s22, 4
      %s29 = sphi 0, %s48
      %s30 = sphi 0, %s44
      %s31 = sphi 0, %s40
      %s32 = sphi 0, %s29
      %s33 = sphi 0, %s30
      %s34 = sphi 0, %s31
      %s35 = sphi 0, %s32
      %s36 = sphi 0, %s33
      %s37 = sphi 0, %s34
      %s53 = sphi 0, %s55
      %s56 = sphi 0, %s53
      %s57 = sphi 0, %s56
      %s73 = sphi 0, %s57
      %s81 = sphi 0, %s83
      %s84 = sphi 0, %s81
      %s85 = sphi 0, %s84
      %s101 = sphi 0, %s85
      %s109 = sphi 0, %s111
      %s112 = sphi 0, %s109
      %s113 = sphi 0, %s112
      %s129 = sphi 0, %s113
      %s137 = sphi 0, %s139
      %s140 = sphi 0, %s137
      %s141 = sphi 0, %s140
      %s157 = sphi 0, %s141
      %s165 = sphi 0, %s167
      %s168 = sphi 0, %s165
      %s169 = sphi 0, %s168
      %s185 = sphi 0, %s169
    $region4: #{transformer_forward.26} parent=1 // loop_header_branch
      %25 = sbr.rel (%p23) target = $region8
    $region5: #{transformer_forward.26} parent=1 // loop_body
      %s27 = ssub.s32 %s22, 1
      %s28 = ssub.s32 %s22, 2
      %s38 = sadd.s32 1, %s31
      %p39 = scmp.ge.s32.totalorder %s38, 1
      %s40 = scalar_select %p39, 0, %s38
      %s41 = sadd.s32 1, %s30
      %s42 = scalar_select %p39, %s41, %s30
      %p43 = scmp.ge.s32.totalorder %s42, 1
      %s44 = scalar_select %p43, 0, %s42
      %s45 = sadd.s32 1, %s29
      %s46 = scalar_select %p43, %s45, %s29
      %p47 = scmp.ge.s32.totalorder %s46, 2
      %s48 = scalar_select %p47, 0, %s46
      %s49 = ssub.s32 %s29, %s48
      %s50 = ssub.s32 %s30, %s44
      %s51 = sor.u32 %s49, %s50
      %p52 = scmp.eq.s32.totalorder %s51, 0
      %s54 = sadd.s32 %s53, 1
      %s55 = scalar_select %p52, %s53, %s54
      %p58 = pneg %p52
      %p59 = scmp.eq.s32.totalorder %s22, 1
      %p60 = por %p58, %p59
      %p61 = scmp.ne.s32.totalorder %s53, %s56
      %p62 = scmp.eq.s32.totalorder %s22, 0
      %p63 = por %p61, %p62
      %p64 = scmp.ne.s32.totalorder %s53, %s56
      %p65 = scmp.eq.s32.totalorder %s27, 1
      %p66 = por %p64, %p65
      %p67 = scmp.ne.s32.totalorder %s56, %s57
      %p68 = scmp.eq.s32.totalorder %s27, 0
      %p69 = por %p67, %p68
      %p70 = scmp.ne.s32.totalorder %s56, %s57
      %p71 = scmp.eq.s32.totalorder %s28, 1
      %p72 = por %p70, %p71
      %p74 = scmp.ne.s32.totalorder %s57, %s73
      %p75 = scmp.eq.s32.totalorder %s28, 0
      %p76 = por %p74, %p75
      %s77 = ssub.s32 %s29, %s48
      %s78 = ssub.s32 %s31, %s40
      %s79 = sor.u32 %s77, %s78
      %p80 = scmp.eq.s32.totalorder %s79, 0
      %s82 = sadd.s32 %s81, 1
      %s83 = scalar_select %p80, %s81, %s82
      %p86 = pneg %p80
      %p87 = scmp.eq.s32.totalorder %s22, 1
      %p88 = por %p86, %p87
      %p89 = scmp.ne.s32.totalorder %s81, %s84
      %p90 = scmp.eq.s32.totalorder %s22, 0
      %p91 = por %p89, %p90
      %p92 = scmp.ne.s32.totalorder %s81, %s84
      %p93 = scmp.eq.s32.totalorder %s27, 1
      %p94 = por %p92, %p93
      %p95 = scmp.ne.s32.totalorder %s84, %s85
      %p96 = scmp.eq.s32.totalorder %s27, 0
      %p97 = por %p95, %p96
      %p98 = scmp.ne.s32.totalorder %s84, %s85
      %p99 = scmp.eq.s32.totalorder %s28, 1
      %p100 = por %p98, %p99
      %p102 = scmp.ne.s32.totalorder %s85, %s101
      %p103 = scmp.eq.s32.totalorder %s28, 0
      %p104 = por %p102, %p103
      %s105 = ssub.s32 %s29, %s48
      %s106 = ssub.s32 %s31, %s40
      %s107 = sor.u32 %s105, %s106
      %p108 = scmp.eq.s32.totalorder %s107, 0
      %s110 = sadd.s32 %s109, 1
      %s111 = scalar_select %p108, %s109, %s110
      %p114 = pneg %p108
      %p115 = scmp.eq.s32.totalorder %s22, 1
      %p116 = por %p114, %p115
      %p117 = scmp.ne.s32.totalorder %s109, %s112
      %p118 = scmp.eq.s32.totalorder %s22, 0
      %p119 = por %p117, %p118
      %p120 = scmp.ne.s32.totalorder %s109, %s112
      %p121 = scmp.eq.s32.totalorder %s27, 1
      %p122 = por %p120, %p121
      %p123 = scmp.ne.s32.totalorder %s112, %s113
      %p124 = scmp.eq.s32.totalorder %s27, 0
      %p125 = por %p123, %p124
      %p126 = scmp.ne.s32.totalorder %s112, %s113
      %p127 = scmp.eq.s32.totalorder %s28, 1
      %p128 = por %p126, %p127
      %p130 = scmp.ne.s32.totalorder %s113, %s129
      %p131 = scmp.eq.s32.totalorder %s28, 0
      %p132 = por %p130, %p131
      %s133 = ssub.s32 %s29, %s48
      %s134 = ssub.s32 %s31, %s40
      %s135 = sor.u32 %s133, %s134
      %p136 = scmp.eq.s32.totalorder %s135, 0
      %s138 = sadd.s32 %s137, 1
      %s139 = scalar_select %p136, %s137, %s138
      %p142 = pneg %p136
      %p143 = scmp.eq.s32.totalorder %s22, 1
      %p144 = por %p142, %p143
      %p145 = scmp.ne.s32.totalorder %s137, %s140
      %p146 = scmp.eq.s32.totalorder %s22, 0
      %p147 = por %p145, %p146
      %p148 = scmp.ne.s32.totalorder %s137, %s140
      %p149 = scmp.eq.s32.totalorder %s27, 1
      %p150 = por %p148, %p149
      %p151 = scmp.ne.s32.totalorder %s140, %s141
      %p152 = scmp.eq.s32.totalorder %s27, 0
      %p153 = por %p151, %p152
      %p154 = scmp.ne.s32.totalorder %s140, %s141
      %p155 = scmp.eq.s32.totalorder %s28, 1
      %p156 = por %p154, %p155
      %p158 = scmp.ne.s32.totalorder %s141, %s157
      %p159 = scmp.eq.s32.totalorder %s28, 0
      %p160 = por %p158, %p159
      %s161 = ssub.s32 %s29, %s48
      %s162 = ssub.s32 %s30, %s44
      %s163 = sor.u32 %s161, %s162
      %p164 = scmp.eq.s32.totalorder %s163, 0
      %s166 = sadd.s32 %s165, 1
      %s167 = scalar_select %p164, %s165, %s166
      %p170 = pneg %p164
      %p171 = scmp.eq.s32.totalorder %s22, 1
      %p172 = por %p170, %p171
      %p173 = scmp.ne.s32.totalorder %s165, %s168
      %p174 = scmp.eq.s32.totalorder %s22, 0
      %p175 = por %p173, %p174
      %p176 = scmp.ne.s32.totalorder %s165, %s168
      %p177 = scmp.eq.s32.totalorder %s27, 1
      %p178 = por %p176, %p177
      %p179 = scmp.ne.s32.totalorder %s168, %s169
      %p180 = scmp.eq.s32.totalorder %s27, 0
      %p181 = por %p179, %p180
      %p182 = scmp.ne.s32.totalorder %s168, %s169
      %p183 = scmp.eq.s32.totalorder %s28, 1
      %p184 = por %p182, %p183
      %p186 = scmp.ne.s32.totalorder %s169, %s185
      %p187 = scmp.eq.s32.totalorder %s28, 0
      %p188 = por %p186, %p187
      %p189 = scmp.le.s32.totalorder 1, %s22
      %p190 = scmp.lt.s32.totalorder %s22, 3
      %p191 = pnand %p189, %p190
      %p192 = pneg %p191
      // Predicated region
      $region9: #{transformer_forward.26} parent=5 // pred_check
        _
      $region10: #{transformer_forward.26} parent=5 // pred_check_branch
        %194 = sbr.rel (%p191) target = $region12
      $region11: #{transformer_forward.26} parent=5 // pred_region
        %s195 = ssub.s32 %s22, 1
      $region12: #{transformer_forward.26} parent=5 // pred_fallthru
        _
      %p196 = scmp.lt.s32.totalorder %s22, 2
      // Predicated region
      $region13: #{transformer_forward.26} parent=5 // pred_check
        %p197 = pneg %p196
      $region14: #{transformer_forward.26} parent=5 // pred_check_branch
        %199 = sbr.rel (%p197) target = $region16
      $region15: #{transformer_forward.26} parent=5 // pred_region
        // Predicated region
        $region17: #{transformer_forward.26} parent=15 // pred_check
          %p200 = pneg %p63
        $region18: #{transformer_forward.26} parent=15 // pred_check_branch
          %202 = sbr.rel (%p200) target = $region20
        $region19: #{transformer_forward.26} parent=15 // pred_region
          %s203 = sand.u32 %s53, 1
          %s204 = scalar_lea.sflag [#allocation6], %s203
          %s205 = sand.u32 %s53, 1
          %s206 = smul.addr %s205, 4
          %s207 = scalar_lea.vmem [#allocation5], %s206
          %s209 = ssub.s32 64, 64
          %210 = vsyncadd %s204, %s209
          %s211 = sadd.s32 %s30, %s29
          %s212 = smul.addr %s211, 64
          %s213 = scalar_lea.hbm %s0, %s212
          %s215 = sshll.u32 %s207, 4
          %s216 = int_to_ptr.vmem [resolvable:$true] %s215
          %218 = dma.hbm_to_vmem [thread:$0]  %s213, 64, %s216, %s204
        $region20: #{transformer_forward.26} parent=15 // pred_fallthru
          _
        // Predicated region
        $region21: #{transformer_forward.26} parent=15 // pred_check
          %p219 = pneg %p91
        $region22: #{transformer_forward.26} parent=15 // pred_check_branch
          %221 = sbr.rel (%p219) target = $region24
        $region23: #{transformer_forward.26} parent=15 // pred_region
          %s222 = sand.u32 %s22, 1
          %s223 = scalar_lea.sflag [#allocation9], %s222
          %s224 = sand.u32 %s81, 1
          %s225 = smul.addr %s224, 4
          %s226 = scalar_lea.vmem [#allocation8], %s225
          %s228 = ssub.s32 64, 64
          %229 = vsyncadd %s223, %s228
          %s230 = sadd.s32 %s31, %s29
          %s231 = smul.addr %s230, 64
          %s232 = scalar_lea.hbm %s1, %s231
          %s234 = sshll.u32 %s226, 4
          %s235 = int_to_ptr.vmem [resolvable:$true] %s234
          %237 = dma.hbm_to_vmem [thread:$0]  %s232, 64, %s235, %s223
        $region24: #{transformer_forward.26} parent=15 // pred_fallthru
          _
        // Predicated region
        $region25: #{transformer_forward.26} parent=15 // pred_check
          %p238 = pneg %p119
        $region26: #{transformer_forward.26} parent=15 // pred_check_branch
          %240 = sbr.rel (%p238) target = $region28
        $region27: #{transformer_forward.26} parent=15 // pred_region
          %s241 = sand.u32 %s22, 1
          %s242 = scalar_lea.sflag [#allocation9], %s241
          %s243 = sand.u32 %s109, 1
          %s244 = smul.addr %s243, 4
          %s245 = scalar_lea.vmem [#allocation10], %s244
          %s247 = ssub.s32 64, 64
          %248 = vsyncadd %s242, %s247
          %s249 = sadd.s32 %s31, %s29
          %s250 = smul.addr %s249, 64
          %s251 = scalar_lea.hbm %s2, %s250
          %s253 = sshll.u32 %s245, 4
          %s254 = int_to_ptr.vmem [resolvable:$true] %s253
          %256 = dma.hbm_to_vmem [thread:$0]  %s251, 64, %s254, %s242
        $region28: #{transformer_forward.26} parent=15 // pred_fallthru
          _
        // Predicated region
        $region29: #{transformer_forward.26} parent=15 // pred_check
          %p257 = pneg %p147
        $region30: #{transformer_forward.26} parent=15 // pred_check_branch
          %259 = sbr.rel (%p257) target = $region32
        $region31: #{transformer_forward.26} parent=15 // pred_region
          %s260 = sand.u32 %s137, 1
          %s261 = scalar_lea.sflag [#allocation12], %s260
          %s262 = sand.u32 %s137, 1
          %s263 = scalar_lea.vmem [#allocation11], %s262
          %s265 = ssub.s32 16, 16
          %266 = vsyncadd %s261, %s265
          %s267 = sadd.s32 %s31, %s29
          %s268 = smul.addr %s267, 16
          %s269 = scalar_lea.hbm %s3, %s268
          %s271 = sshll.u32 %s263, 4
          %s272 = int_to_ptr.vmem [resolvable:$true] %s271
          %274 = dma.hbm_to_vmem [thread:$0]  %s269, 16, %s272, %s261
        $region32: #{transformer_forward.26} parent=15 // pred_fallthru
          _
      $region16: #{transformer_forward.26} parent=5 // pred_fallthru
        _
      %p275 = scmp.le.s32.totalorder 1, %s22
      %p276 = scmp.lt.s32.totalorder %s22, 3
      %p277 = pnand %p275, %p276
      %p278 = pneg %p277
      // Predicated region
      $region33: #{transformer_forward.26} parent=5 // pred_check
        _
      $region34: #{transformer_forward.26} parent=5 // pred_check_branch
        %280 = sbr.rel (%p277) target = $region36
      $region35: #{transformer_forward.26} parent=5 // pred_region
        %s281 = ssub.s32 %s22, 1
        %s282 = sand.u32 %s56, 1
        %s283 = scalar_lea.sflag [#allocation6], %s282
        %s284 = sand.u32 %s56, 1
        %s285 = smul.addr %s284, 4
        %s286 = scalar_lea.vmem [#allocation5], %s285
        // Predicated region
        $region37: #{transformer_forward.26} parent=35 // pred_check
          %p287 = pneg %p69
        $region38: #{transformer_forward.26} parent=35 // pred_check_branch
          %289 = sbr.rel (%p287) target = $region40
        $region39: #{transformer_forward.26} parent=35 // pred_region
          %290 = dma.done %s283, 64
        $region40: #{transformer_forward.26} parent=35 // pred_fallthru
          _
        %s291 = sand.u32 %s27, 1
        %s292 = scalar_lea.sflag [#allocation9], %s291
        %s293 = sand.u32 %s84, 1
        %s294 = smul.addr %s293, 4
        %s295 = scalar_lea.vmem [#allocation8], %s294
        // Predicated region
        $region41: #{transformer_forward.26} parent=35 // pred_check
          %p296 = pneg %p97
        $region42: #{transformer_forward.26} parent=35 // pred_check_branch
          %298 = sbr.rel (%p296) target = $region44
        $region43: #{transformer_forward.26} parent=35 // pred_region
          %299 = dma.done %s292, 64
        $region44: #{transformer_forward.26} parent=35 // pred_fallthru
          _
        %s300 = sand.u32 %s27, 1
        %s301 = scalar_lea.sflag [#allocation9], %s300
        %s302 = sand.u32 %s112, 1
        %s303 = smul.addr %s302, 4
        %s304 = scalar_lea.vmem [#allocation10], %s303
        // Predicated region
        $region45: #{transformer_forward.26} parent=35 // pred_check
          %p305 = pneg %p125
        $region46: #{transformer_forward.26} parent=35 // pred_check_branch
          %307 = sbr.rel (%p305) target = $region48
        $region47: #{transformer_forward.26} parent=35 // pred_region
          %308 = dma.done %s301, 64
        $region48: #{transformer_forward.26} parent=35 // pred_fallthru
          _
        %s309 = sand.u32 %s140, 1
        %s310 = scalar_lea.sflag [#allocation12], %s309
        %s311 = sand.u32 %s140, 1
        %s312 = scalar_lea.vmem [#allocation11], %s311
        // Predicated region
        $region49: #{transformer_forward.26} parent=35 // pred_check
          %p313 = pneg %p153
        $region50: #{transformer_forward.26} parent=35 // pred_check_branch
          %315 = sbr.rel (%p313) target = $region52
        $region51: #{transformer_forward.26} parent=35 // pred_region
          %316 = dma.done %s310, 16
        $region52: #{transformer_forward.26} parent=35 // pred_fallthru
          _
        %s317 = sand.u32 %s56, 1
        %s318 = scalar_lea.sflag [#allocation6], %s317
        %s319 = sand.u32 %s56, 1
        %s320 = smul.addr %s319, 4
        %s321 = scalar_lea.vmem [#allocation5], %s320
        %p322 = pneg %p69
        %p323 = pneg %p66
        %s324 = sand.u32 %s27, 1
        %s325 = scalar_lea.sflag [#allocation9], %s324
        %s326 = sand.u32 %s84, 1
        %s327 = smul.addr %s326, 4
        %s328 = scalar_lea.vmem [#allocation8], %s327
        %p329 = pneg %p97
        %p330 = pneg %p94
        %s331 = sand.u32 %s27, 1
        %s332 = scalar_lea.sflag [#allocation9], %s331
        %s333 = sand.u32 %s112, 1
        %s334 = smul.addr %s333, 4
        %s335 = scalar_lea.vmem [#allocation10], %s334
        %p336 = pneg %p125
        %p337 = pneg %p122
        %s338 = sand.u32 %s140, 1
        %s339 = scalar_lea.sflag [#allocation12], %s338
        %s340 = sand.u32 %s140, 1
        %s341 = scalar_lea.vmem [#allocation11], %s340
        %p342 = pneg %p153
        %p343 = pneg %p150
        %p344 = pneg %p181
        %p345 = pneg %p178
        %s346 = sand.u32 %s168, 1
        %s347 = scalar_lea.sflag [#allocation7], %s346
        %s348 = sand.u32 %s168, 1
        %s349 = smul.addr %s348, 4
        %s350 = scalar_lea.vmem [#allocation13], %s349
        %p352 = scmp.eq.s32.totalorder %s34, 0
        // Predicated region
        $region53: #{transformer_forward.26} parent=35 // pred_check
          %p353 = pneg %p352
        $region54: #{transformer_forward.26} parent=35 // pred_check_branch
          %355 = sbr.rel (%p353) target = $region56
        $region55: #{transformer_forward.26} parent=35 // pred_region
          %vm356 = vcmask 31744
          %357 = vst.msk [vmem:[#allocation2] sm:$0xff] %vm356, -1e+30
          %358 = vst.msk [vmem:[#allocation3] sm:$0xff] %vm356, 0.0
          %vm359 = vcmask 261120
          %360 = vst.msk [vmem:[#allocation4] sm:$0xff] %vm359, 0.0
        $region56: #{transformer_forward.26} parent=35 // pred_fallthru
          _
        %v361 = vld [vmem:[%s286] sm:$0xf]
        %v362 = vld [vmem:[%s295] sm:$0xf]
        %v363 = vld [vmem:[%s304] sm:$0xf]
        %v364 = vld [vmem:[%s312] sm:$0x1]
        %vm365 = vcmp.gt.f32.partialorder %v364, 0.5
        %vm366 = vcmask 64512
        %v368 = vsel %vm366, %v361, 0
        %v371 = vsel %vm366, %v362, 0
        %373 = vmatprep.subr.bf16.mxu0 0
        %374 = vmatpush1.bf16.xpose.msra.mxu0 %v371
        %375 = vmatprep.subr.bf16.mxu0 0
        %376 = vmatpush1.bf16.xpose.msra.mxu0 0
        %377 = vmatprep.subr.bf16.mxu0 0
        %378 = vmatpush1.bf16.xpose.msra.mxu0 0
        %379 = vmatprep.subr.bf16.mxu0 0
        %380 = vmatpush1.bf16.xpose.msra.mxu0 0
        %381 = vmatprep.subr.bf16.mxu0 0
        %382 = vmatpush1.bf16.xpose.msra.mxu0 0
        %383 = vmatprep.subr.bf16.mxu0 0
        %384 = vmatpush1.bf16.xpose.msra.mxu0 0
        %385 = vmatprep.subr.bf16.mxu0 0
        %386 = vmatpush1.bf16.xpose.msra.mxu0 0
        %387 = vmatprep.subr.bf16.mxu0 0
        %388 = vmatpush1.bf16.xpose.msra.mxu0 0
        %389 = vmatprep.subr.bf16.mxu0 0
        %390 = vmatpush1.bf16.xpose.msra.mxu0 0
        %391 = vmatprep.subr.bf16.mxu0 0
        %392 = vmatpush1.bf16.xpose.msra.mxu0 0
        %393 = vmatprep.subr.bf16.mxu0 0
        %394 = vmatpush1.bf16.xpose.msra.mxu0 0
        %395 = vmatprep.subr.bf16.mxu0 0
        %396 = vmatpush1.bf16.xpose.msra.mxu0 0
        %397 = vmatprep.subr.bf16.mxu0 0
        %398 = vmatpush1.bf16.xpose.msra.mxu0 0
        %399 = vmatprep.subr.bf16.mxu0 0
        %400 = vmatpush1.bf16.xpose.msra.mxu0 0
        %401 = vmatprep.subr.bf16.mxu0 0
        %402 = vmatpush1.bf16.xpose.msra.mxu0 0
        %403 = vmatprep.subr.bf16.mxu0 0
        %404 = vmatpush1.bf16.xpose.msra.mxu0 0
        %405 = vmatprep.mubr.bf16.mxu0 0
        %406 = vmatmul.mubr.bf16.gmra.mrb[0].mxu0 %v368
        %v407 = vpop.f32.mrb[0].mxu0
        %v408 = vadd.f32 0.0, %v407
        %v409 = vpop.f32.mrb[0].mxu0
        %v410 = vpop.f32.mrb[0].mxu0
        %v411 = vpop.f32.mrb[0].mxu0
        %412 = vdwg.mxu0
        %v413 = vmul.f32 %v408, 0.35355338
        %v414 = vsel %vm365, 1, 0
        %v415 = vlaneseq
        %v416 = vshrl.u32 %v415, 7
        %v417 = vsub.s32 0, %v416
        %v418 = vrot.slane %v414, %v417
        %vm419 = vcmp.eq.s32.totalorder %v418, 1
        %v420 = vsel %vm419, -1e+09, %v413
        %v421 = vld [vmem:[#allocation2] sm:$0xff]
        %v422 = vsel %vm366, %v420, -inf
        %423 = vmax.xlane.f32.xlu0 %v422
        %v424 = vpop.xlane.xlu0 %423
        %v425 = vmax.f32 %v421, %v424
        %v426 = vsub.f32 %v421, %v425
        %v427 = vmul.f32 %v426, 1.442695
        %v428 = vpow.pop %v427
        %430 = vset.pattern.permute.xlu0 0
        %431 = vperm.xlu0 %430, %v425
        %v432 = vpop.permute.xlu0 %431
        %v434 = vsub.f32 %v420, %v432
        %v435 = vmul.f32 %v434, 1.442695
        %v436 = vpow.pop %v435
        %v437 = vld [vmem:[#allocation3] sm:$0xff]
        %v438 = vmul.f32 %v428, %v437
        %v439 = vsel %vm366, %v436, 0.0
        %440 = vadd.xlane.f32.xlu0 %v439
        %v441 = vpop.xlane.xlu0 %440
        %v442 = vadd.f32 %v438, %v441
        %vm443 = vcmask 7168
        %444 = vst.msk [vmem:[#allocation3] sm:$0xff] %vm443, %v442
        %v445 = vld [vmem:[#allocation4] sm:$0xff]
        %447 = vset.pattern.permute.xlu0 0
        %448 = vperm.xlu0 %447, %v428
        %v449 = vpop.permute.xlu0 %448
        %v451 = vmul.f32 %v449, %v445
        %v452 = vpack.c.bf16 %v436, %v436
        %v454 = vsel %vm366, %v452, 0
        %vm456 = vcmask 1043456
        %v458 = vsel %vm456, %v363, 0
        %460 = vmatprep.subr.bf16.mxu0 0
        %461 = vmatpush1.bf16.msra.mxu0 %v458
        %462 = vmatprep.subr.bf16.mxu0 0
        %463 = vmatpush1.bf16.msra.mxu0 0
        %464 = vmatprep.subr.bf16.mxu0 0
        %465 = vmatpush1.bf16.msra.mxu0 0
        %466 = vmatprep.subr.bf16.mxu0 0
        %467 = vmatpush1.bf16.msra.mxu0 0
        %468 = vmatprep.subr.bf16.mxu0 0
        %469 = vmatpush1.bf16.msra.mxu0 0
        %470 = vmatprep.subr.bf16.mxu0 0
        %471 = vmatpush1.bf16.msra.mxu0 0
        %472 = vmatprep.subr.bf16.mxu0 0
        %473 = vmatpush1.bf16.msra.mxu0 0
        %474 = vmatprep.subr.bf16.mxu0 0
        %475 = vmatpush1.bf16.msra.mxu0 0
        %476 = vmatprep.subr.bf16.mxu0 0
        %477 = vmatpush1.bf16.msra.mxu0 0
        %478 = vmatprep.subr.bf16.mxu0 0
        %479 = vmatpush1.bf16.msra.mxu0 0
        %480 = vmatprep.subr.bf16.mxu0 0
        %481 = vmatpush1.bf16.msra.mxu0 0
        %482 = vmatprep.subr.bf16.mxu0 0
        %483 = vmatpush1.bf16.msra.mxu0 0
        %484 = vmatprep.subr.bf16.mxu0 0
        %485 = vmatpush1.bf16.msra.mxu0 0
        %486 = vmatprep.subr.bf16.mxu0 0
        %487 = vmatpush1.bf16.msra.mxu0 0
        %488 = vmatprep.subr.bf16.mxu0 0
        %489 = vmatpush1.bf16.msra.mxu0 0
        %490 = vmatprep.subr.bf16.mxu0 0
        %491 = vmatpush1.bf16.msra.mxu0 0
        %492 = vmatprep.mubr.bf16.mxu0 0
        %493 = vmatmul.mubr.bf16.gmra.mrb[0].mxu0 %v454
        %v494 = vpop.f32.mrb[0].mxu0
        %v495 = vadd.f32 0.0, %v494
        %v496 = vpop.f32.mrb[0].mxu0
        %v497 = vpop.f32.mrb[0].mxu0
        %v498 = vpop.f32.mrb[0].mxu0
        %499 = vdwg.mxu0
        %v500 = vadd.f32 %v451, %v495
        %501 = vst.msk [vmem:[#allocation4] sm:$0xff] %vm366, %v500
        %502 = vst.msk [vmem:[#allocation2] sm:$0xff] %vm443, %v425
        %v504 = vunpack.c.l.b16 %v361
        %v505 = vpack.c.b16 %v504, %v504
        %506 = vrot.lane.b32.xlu0 %v505, 120
        %v507 = vpop.permute.xlu0 %506
        %v509 = vunpack.c.l.b16 %v362
        %v510 = vpack.c.b16 %v509, %v509
        %511 = vrot.lane.b32.xlu0 %v510, 120
        %v512 = vpop.permute.xlu0 %511
        %v514 = vsel %vm366, %v507, 0
        %v517 = vsel %vm366, %v512, 0
        %519 = vmatprep.subr.bf16.mxu0 0
        %520 = vmatpush1.bf16.xpose.msra.mxu0 %v517
        %521 = vmatprep.subr.bf16.mxu0 0
        %522 = vmatpush1.bf16.xpose.msra.mxu0 0
        %523 = vmatprep.subr.bf16.mxu0 0
        %524 = vmatpush1.bf16.xpose.msra.mxu0 0
        %525 = vmatprep.subr.bf16.mxu0 0
        %526 = vmatpush1.bf16.xpose.msra.mxu0 0
        %527 = vmatprep.subr.bf16.mxu0 0
        %528 = vmatpush1.bf16.xpose.msra.mxu0 0
        %529 = vmatprep.subr.bf16.mxu0 0
        %530 = vmatpush1.bf16.xpose.msra.mxu0 0
        %531 = vmatprep.subr.bf16.mxu0 0
        %532 = vmatpush1.bf16.xpose.msra.mxu0 0
        %533 = vmatprep.subr.bf16.mxu0 0
        %534 = vmatpush1.bf16.xpose.msra.mxu0 0
        %535 = vmatprep.subr.bf16.mxu0 0
        %536 = vmatpush1.bf16.xpose.msra.mxu0 0
        %537 = vmatprep.subr.bf16.mxu0 0
        %538 = vmatpush1.bf16.xpose.msra.mxu0 0
        %539 = vmatprep.subr.bf16.mxu0 0
        %540 = vmatpush1.bf16.xpose.msra.mxu0 0
        %541 = vmatprep.subr.bf16.mxu0 0
        %542 = vmatpush1.bf16.xpose.msra.mxu0 0
        %543 = vmatprep.subr.bf16.mxu0 0
        %544 = vmatpush1.bf16.xpose.msra.mxu0 0
        %545 = vmatprep.subr.bf16.mxu0 0
        %546 = vmatpush1.bf16.xpose.msra.mxu0 0
        %547 = vmatprep.subr.bf16.mxu0 0
        %548 = vmatpush1.bf16.xpose.msra.mxu0 0
        %549 = vmatprep.subr.bf16.mxu0 0
        %550 = vmatpush1.bf16.xpose.msra.mxu0 0
        %551 = vmatprep.mubr.bf16.mxu0 0
        %552 = vmatmul.mubr.bf16.gmra.mrb[0].mxu0 %v514
        %v553 = vpop.f32.mrb[0].mxu0
        %v554 = vadd.f32 0.0, %v553
        %v555 = vpop.f32.mrb[0].mxu0
        %v556 = vpop.f32.mrb[0].mxu0
        %v557 = vpop.f32.mrb[0].mxu0
        %558 = vdwg.mxu0
        %v559 = vmul.f32 %v554, 0.35355338
        %v560 = vsel %vm419, -1e+09, %v559
        %v561 = vld [vmem:[#allocation2] sm:$0xff]
        %v562 = vsel %vm366, %v560, -inf
        %563 = vmax.xlane.f32.xlu0 %v562
        %v564 = vpop.xlane.xlu0 %563
        %v565 = vmax.f32 %v561, %v564
        %v566 = vsub.f32 %v561, %v565
        %v567 = vmul.f32 %v566, 1.442695
        %v568 = vpow.pop %v567
        %570 = vset.pattern.permute.xlu0 1
        %571 = vperm.xlu0 %570, %v565
        %v572 = vpop.permute.xlu0 %571
        %v574 = vsub.f32 %v560, %v572
        %v575 = vmul.f32 %v574, 1.442695
        %v576 = vpow.pop %v575
        %v577 = vld [vmem:[#allocation3] sm:$0xff]
        %v578 = vmul.f32 %v568, %v577
        %v579 = vsel %vm366, %v576, 0.0
        %580 = vadd.xlane.f32.xlu0 %v579
        %v581 = vpop.xlane.xlu0 %580
        %v582 = vadd.f32 %v578, %v581
        %vm583 = vcmask 15368
        %584 = vst.msk [vmem:[#allocation3] sm:$0xff] %vm583, %v582
        %v585 = vld [vmem:[#allocation4] sm:$0xff]
        %587 = vset.pattern.permute.xlu0 1
        %588 = vperm.xlu0 %587, %v568
        %v589 = vpop.permute.xlu0 %588
        %v591 = vmul.f32 %v589, %v585
        %v592 = vpack.c.bf16 %v576, %v576
        %v594 = vunpack.c.l.b16 %v363
        %v595 = vpack.c.b16 %v594, %v594
        %596 = vrot.lane.b32.xlu0 %v595, 120
        %v597 = vpop.permute.xlu0 %596
        %v599 = vsel %vm366, %v592, 0
        %v602 = vsel %vm456, %v597, 0
        %604 = vmatprep.subr.bf16.mxu0 0
        %605 = vmatpush1.bf16.msra.mxu0 %v602
        %606 = vmatprep.subr.bf16.mxu0 0
        %607 = vmatpush1.bf16.msra.mxu0 0
        %608 = vmatprep.subr.bf16.mxu0 0
        %609 = vmatpush1.bf16.msra.mxu0 0
        %610 = vmatprep.subr.bf16.mxu0 0
        %611 = vmatpush1.bf16.msra.mxu0 0
        %612 = vmatprep.subr.bf16.mxu0 0
        %613 = vmatpush1.bf16.msra.mxu0 0
        %614 = vmatprep.subr.bf16.mxu0 0
        %615 = vmatpush1.bf16.msra.mxu0 0
        %616 = vmatprep.subr.bf16.mxu0 0
        %617 = vmatpush1.bf16.msra.mxu0 0
        %618 = vmatprep.subr.bf16.mxu0 0
        %619 = vmatpush1.bf16.msra.mxu0 0
        %620 = vmatprep.subr.bf16.mxu0 0
        %621 = vmatpush1.bf16.msra.mxu0 0
        %622 = vmatprep.subr.bf16.mxu0 0
        %623 = vmatpush1.bf16.msra.mxu0 0
        %624 = vmatprep.subr.bf16.mxu0 0
        %625 = vmatpush1.bf16.msra.mxu0 0
        %626 = vmatprep.subr.bf16.mxu0 0
        %627 = vmatpush1.bf16.msra.mxu0 0
        %628 = vmatprep.subr.bf16.mxu0 0
        %629 = vmatpush1.bf16.msra.mxu0 0
        %630 = vmatprep.subr.bf16.mxu0 0
        %631 = vmatpush1.bf16.msra.mxu0 0
        %632 = vmatprep.subr.bf16.mxu0 0
        %633 = vmatpush1.bf16.msra.mxu0 0
        %634 = vmatprep.subr.bf16.mxu0 0
        %635 = vmatpush1.bf16.msra.mxu0 0
        %636 = vmatprep.mubr.bf16.mxu0 0
        %637 = vmatmul.mubr.bf16.gmra.mrb[0].mxu0 %v599
        %v638 = vpop.f32.mrb[0].mxu0
        %v639 = vadd.f32 0.0, %v638
        %v640 = vpop.f32.mrb[0].mxu0
        %v641 = vpop.f32.mrb[0].mxu0
        %v642 = vpop.f32.mrb[0].mxu0
        %643 = vdwg.mxu0
        %645 = vrot.lane.b32.xlu0 %v639, 8
        %v646 = vpop.permute.xlu0 %645
        %v648 = vadd.f32 %v591, %v646
        %vm649 = vcmask 130112
        %650 = vst.msk [vmem:[#allocation4] sm:$0xff] %vm649, %v648
        %651 = vst.msk [vmem:[#allocation2] sm:$0xff] %vm583, %v565
        %652 = vrot.lane.b32.xlu0 %v505, 112
        %v653 = vpop.permute.xlu0 %652
        %654 = vrot.lane.b32.xlu0 %v510, 112
        %v655 = vpop.permute.xlu0 %654
        %v657 = vsel %vm366, %v653, 0
        %v660 = vsel %vm366, %v655, 0
        %662 = vmatprep.subr.bf16.mxu0 0
        %663 = vmatpush1.bf16.xpose.msra.mxu0 %v660
        %664 = vmatprep.subr.bf16.mxu0 0
        %665 = vmatpush1.bf16.xpose.msra.mxu0 0
        %666 = vmatprep.subr.bf16.mxu0 0
        %667 = vmatpush1.bf16.xpose.msra.mxu0 0
        %668 = vmatprep.subr.bf16.mxu0 0
        %669 = vmatpush1.bf16.xpose.msra.mxu0 0
        %670 = vmatprep.subr.bf16.mxu0 0
        %671 = vmatpush1.bf16.xpose.msra.mxu0 0
        %672 = vmatprep.subr.bf16.mxu0 0
        %673 = vmatpush1.bf16.xpose.msra.mxu0 0
        %674 = vmatprep.subr.bf16.mxu0 0
        %675 = vmatpush1.bf16.xpose.msra.mxu0 0
        %676 = vmatprep.subr.bf16.mxu0 0
        %677 = vmatpush1.bf16.xpose.msra.mxu0 0
        %678 = vmatprep.subr.bf16.mxu0 0
        %679 = vmatpush1.bf16.xpose.msra.mxu0 0
        %680 = vmatprep.subr.bf16.mxu0 0
        %681 = vmatpush1.bf16.xpose.msra.mxu0 0
        %682 = vmatprep.subr.bf16.mxu0 0
        %683 = vmatpush1.bf16.xpose.msra.mxu0 0
        %684 = vmatprep.subr.bf16.mxu0 0
        %685 = vmatpush1.bf16.xpose.msra.mxu0 0
        %686 = vmatprep.subr.bf16.mxu0 0
        %687 = vmatpush1.bf16.xpose.msra.mxu0 0
        %688 = vmatprep.subr.bf16.mxu0 0
        %689 = vmatpush1.bf16.xpose.msra.mxu0 0
        %690 = vmatprep.subr.bf16.mxu0 0
        %691 = vmatpush1.bf16.xpose.msra.mxu0 0
        %692 = vmatprep.subr.bf16.mxu0 0
        %693 = vmatpush1.bf16.xpose.msra.mxu0 0
        %694 = vmatprep.mubr.bf16.mxu0 0
        %695 = vmatmul.mubr.bf16.gmra.mrb[0].mxu0 %v657
        %v696 = vpop.f32.mrb[0].mxu0
        %v697 = vadd.f32 0.0, %v696
        %v698 = vpop.f32.mrb[0].mxu0
        %v699 = vpop.f32.mrb[0].mxu0
        %v700 = vpop.f32.mrb[0].mxu0
        %701 = vdwg.mxu0
        %v702 = vmul.f32 %v697, 0.35355338
        %v703 = vsel %vm419, -1e+09, %v702
        %v704 = vld [vmem:[#allocation2] sm:$0xff]
        %v705 = vsel %vm366, %v703, -inf
        %706 = vmax.xlane.f32.xlu0 %v705
        %v707 = vpop.xlane.xlu0 %706
        %v708 = vmax.f32 %v704, %v707
        %v709 = vsub.f32 %v704, %v708
        %v710 = vmul.f32 %v709, 1.442695
        %v711 = vpow.pop %v710
        %713 = vset.pattern.permute.xlu0 2
        %714 = vperm.xlu0 %713, %v708
        %v715 = vpop.permute.xlu0 %714
        %v717 = vsub.f32 %v703, %v715
        %v718 = vmul.f32 %v717, 1.442695
        %v719 = vpow.pop %v718
        %v720 = vld [vmem:[#allocation3] sm:$0xff]
        %v721 = vmul.f32 %v711, %v720
        %v722 = vsel %vm366, %v719, 0.0
        %723 = vadd.xlane.f32.xlu0 %v722
        %v724 = vpop.xlane.xlu0 %723
        %v725 = vadd.f32 %v721, %v724
        %vm726 = vcmask 23568
        %727 = vst.msk [vmem:[#allocation3] sm:$0xff] %vm726, %v725
        %v728 = vld [vmem:[#allocation4] sm:$0xff]
        %730 = vset.pattern.permute.xlu0 2
        %731 = vperm.xlu0 %730, %v711
        %v732 = vpop.permute.xlu0 %731
        %v734 = vmul.f32 %v732, %v728
        %v735 = vpack.c.bf16 %v719, %v719
        %736 = vrot.lane.b32.xlu0 %v595, 112
        %v737 = vpop.permute.xlu0 %736
        %v739 = vsel %vm366, %v735, 0
        %v742 = vsel %vm456, %v737, 0
        %744 = vmatprep.subr.bf16.mxu0 0
        %745 = vmatpush1.bf16.msra.mxu0 %v742
        %746 = vmatprep.subr.bf16.mxu0 0
        %747 = vmatpush1.bf16.msra.mxu0 0
        %748 = vmatprep.subr.bf16.mxu0 0
        %749 = vmatpush1.bf16.msra.mxu0 0
        %750 = vmatprep.subr.bf16.mxu0 0
        %751 = vmatpush1.bf16.msra.mxu0 0
        %752 = vmatprep.subr.bf16.mxu0 0
        %753 = vmatpush1.bf16.msra.mxu0 0
        %754 = vmatprep.subr.bf16.mxu0 0
        %755 = vmatpush1.bf16.msra.mxu0 0
        %756 = vmatprep.subr.bf16.mxu0 0
        %757 = vmatpush1.bf16.msra.mxu0 0
        %758 = vmatprep.subr.bf16.mxu0 0
        %759 = vmatpush1.bf16.msra.mxu0 0
        %760 = vmatprep.subr.bf16.mxu0 0
        %761 = vmatpush1.bf16.msra.mxu0 0
        %762 = vmatprep.subr.bf16.mxu0 0
        %763 = vmatpush1.bf16.msra.mxu0 0
        %764 = vmatprep.subr.bf16.mxu0 0
        %765 = vmatpush1.bf16.msra.mxu0 0
        %766 = vmatprep.subr.bf16.mxu0 0
        %767 = vmatpush1.bf16.msra.mxu0 0
        %768 = vmatprep.subr.bf16.mxu0 0
        %769 = vmatpush1.bf16.msra.mxu0 0
        %770 = vmatprep.subr.bf16.mxu0 0
        %771 = vmatpush1.bf16.msra.mxu0 0
        %772 = vmatprep.subr.bf16.mxu0 0
        %773 = vmatpush1.bf16.msra.mxu0 0
        %774 = vmatprep.subr.bf16.mxu0 0
        %775 = vmatpush1.bf16.msra.mxu0 0
        %776 = vmatprep.mubr.bf16.mxu0 0
        %777 = vmatmul.mubr.bf16.gmra.mrb[0].mxu0 %v739
        %v778 = vpop.f32.mrb[0].mxu0
        %v779 = vadd.f32 0.0, %v778
        %v780 = vpop.f32.mrb[0].mxu0
        %v781 = vpop.f32.mrb[0].mxu0
        %v782 = vpop.f32.mrb[0].mxu0
        %783 = vdwg.mxu0
        %785 = vrot.lane.b32.xlu0 %v779, 16
        %v786 = vpop.permute.xlu0 %785
        %v788 = vadd.f32 %v734, %v786
        %vm789 = vcmask 195712
        %790 = vst.msk [vmem:[#allocation4] sm:$0xff] %vm789, %v788
        %791 = vst.msk [vmem:[#allocation2] sm:$0xff] %vm726, %v708
        %792 = vrot.lane.b32.xlu0 %v505, 104
        %v793 = vpop.permute.xlu0 %792
        %794 = vrot.lane.b32.xlu0 %v510, 104
        %v795 = vpop.permute.xlu0 %794
        %v797 = vsel %vm366, %v793, 0
        %v800 = vsel %vm366, %v795, 0
        %802 = vmatprep.subr.bf16.mxu0 0
        %803 = vmatpush1.bf16.xpose.msra.mxu0 %v800
        %804 = vmatprep.subr.bf16.mxu0 0
        %805 = vmatpush1.bf16.xpose.msra.mxu0 0
        %806 = vmatprep.subr.bf16.mxu0 0
        %807 = vmatpush1.bf16.xpose.msra.mxu0 0
        %808 = vmatprep.subr.bf16.mxu0 0
        %809 = vmatpush1.bf16.xpose.msra.mxu0 0
        %810 = vmatprep.subr.bf16.mxu0 0
        %811 = vmatpush1.bf16.xpose.msra.mxu0 0
        %812 = vmatprep.subr.bf16.mxu0 0
        %813 = vmatpush1.bf16.xpose.msra.mxu0 0
        %814 = vmatprep.subr.bf16.mxu0 0
        %815 = vmatpush1.bf16.xpose.msra.mxu0 0
        %816 = vmatprep.subr.bf16.mxu0 0
        %817 = vmatpush1.bf16.xpose.msra.mxu0 0
        %818 = vmatprep.subr.bf16.mxu0 0
        %819 = vmatpush1.bf16.xpose.msra.mxu0 0
        %820 = vmatprep.subr.bf16.mxu0 0
        %821 = vmatpush1.bf16.xpose.msra.mxu0 0
        %822 = vmatprep.subr.bf16.mxu0 0
        %823 = vmatpush1.bf16.xpose.msra.mxu0 0
        %824 = vmatprep.subr.bf16.mxu0 0
        %825 = vmatpush1.bf16.xpose.msra.mxu0 0
        %826 = vmatprep.subr.bf16.mxu0 0
        %827 = vmatpush1.bf16.xpose.msra.mxu0 0
        %828 = vmatprep.subr.bf16.mxu0 0
        %829 = vmatpush1.bf16.xpose.msra.mxu0 0
        %830 = vmatprep.subr.bf16.mxu0 0
        %831 = vmatpush1.bf16.xpose.msra.mxu0 0
        %832 = vmatprep.subr.bf16.mxu0 0
        %833 = vmatpush1.bf16.xpose.msra.mxu0 0
        %834 = vmatprep.mubr.bf16.mxu0 0
        %835 = vmatmul.mubr.bf16.gmra.mrb[0].mxu0 %v797
        %v836 = vpop.f32.mrb[0].mxu0
        %v837 = vadd.f32 0.0, %v836
        %v838 = vpop.f32.mrb[0].mxu0
        %v839 = vpop.f32.mrb[0].mxu0
        %v840 = vpop.f32.mrb[0].mxu0
        %841 = vdwg.mxu0
        %v842 = vmul.f32 %v837, 0.35355338
        %v843 = vsel %vm419, -1e+09, %v842
        %v844 = vld [vmem:[#allocation2] sm:$0xff]
        %v845 = vsel %vm366, %v843, -inf
        %846 = vmax.xlane.f32.xlu0 %v845
        %v847 = vpop.xlane.xlu0 %846
        %v848 = vmax.f32 %v844, %v847
        %v849 = vsub.f32 %v844, %v848
        %v850 = vmul.f32 %v849, 1.442695
        %v851 = vpow.pop %v850
        %853 = vset.pattern.permute.xlu0 3
        %854 = vperm.xlu0 %853, %v848
        %v855 = vpop.permute.xlu0 %854
        %v857 = vsub.f32 %v843, %v855
        %v858 = vmul.f32 %v857, 1.442695
        %v859 = vpow.pop %v858
        %v860 = vld [vmem:[#allocation3] sm:$0xff]
        %v861 = vmul.f32 %v851, %v860
        %v862 = vsel %vm366, %v859, 0.0
        %863 = vadd.xlane.f32.xlu0 %v862
        %v864 = vpop.xlane.xlu0 %863
        %v865 = vadd.f32 %v861, %v864
        %vm866 = vcmask 31768
        %867 = vst.msk [vmem:[#allocation3] sm:$0xff] %vm866, %v865
        %v868 = vld [vmem:[#allocation4] sm:$0xff]
        %870 = vset.pattern.permute.xlu0 3
        %871 = vperm.xlu0 %870, %v851
        %v872 = vpop.permute.xlu0 %871
        %v874 = vmul.f32 %v872, %v868
        %v875 = vpack.c.bf16 %v859, %v859
        %876 = vrot.lane.b32.xlu0 %v595, 104
        %v877 = vpop.permute.xlu0 %876
        %v879 = vsel %vm366, %v875, 0
        %v882 = vsel %vm456, %v877, 0
        %884 = vmatprep.subr.bf16.mxu0 0
        %885 = vmatpush1.bf16.msra.mxu0 %v882
        %886 = vmatprep.subr.bf16.mxu0 0
        %887 = vmatpush1.bf16.msra.mxu0 0
        %888 = vmatprep.subr.bf16.mxu0 0
        %889 = vmatpush1.bf16.msra.mxu0 0
        %890 = vmatprep.subr.bf16.mxu0 0
        %891 = vmatpush1.bf16.msra.mxu0 0
        %892 = vmatprep.subr.bf16.mxu0 0
        %893 = vmatpush1.bf16.msra.mxu0 0
        %894 = vmatprep.subr.bf16.mxu0 0
        %895 = vmatpush1.bf16.msra.mxu0 0
        %896 = vmatprep.subr.bf16.mxu0 0
        %897 = vmatpush1.bf16.msra.mxu0 0
        %898 = vmatprep.subr.bf16.mxu0 0
        %899 = vmatpush1.bf16.msra.mxu0 0
        %900 = vmatprep.subr.bf16.mxu0 0
        %901 = vmatpush1.bf16.msra.mxu0 0
        %902 = vmatprep.subr.bf16.mxu0 0
        %903 = vmatpush1.bf16.msra.mxu0 0
        %904 = vmatprep.subr.bf16.mxu0 0
        %905 = vmatpush1.bf16.msra.mxu0 0
        %906 = vmatprep.subr.bf16.mxu0 0
        %907 = vmatpush1.bf16.msra.mxu0 0
        %908 = vmatprep.subr.bf16.mxu0 0
        %909 = vmatpush1.bf16.msra.mxu0 0
        %910 = vmatprep.subr.bf16.mxu0 0
        %911 = vmatpush1.bf16.msra.mxu0 0
        %912 = vmatprep.subr.bf16.mxu0 0
        %913 = vmatpush1.bf16.msra.mxu0 0
        %914 = vmatprep.subr.bf16.mxu0 0
        %915 = vmatpush1.bf16.msra.mxu0 0
        %916 = vmatprep.mubr.bf16.mxu0 0
        %917 = vmatmul.mubr.bf16.gmra.mrb[0].mxu0 %v879
        %v918 = vpop.f32.mrb[0].mxu0
        %v919 = vadd.f32 0.0, %v918
        %v920 = vpop.f32.mrb[0].mxu0
        %v921 = vpop.f32.mrb[0].mxu0
        %v922 = vpop.f32.mrb[0].mxu0
        %923 = vdwg.mxu0
        %925 = vrot.lane.b32.xlu0 %v919, 24
        %v926 = vpop.permute.xlu0 %925
        %v928 = vadd.f32 %v874, %v926
        %vm929 = vcmask 261312
        %930 = vst.msk [vmem:[#allocation4] sm:$0xff] %vm929, %v928
        %931 = vst.msk [vmem:[#allocation2] sm:$0xff] %vm866, %v848
        // Predicated region
        $region57: #{transformer_forward.26} parent=35 // pred_check
          %p932 = pneg %p352
        $region58: #{transformer_forward.26} parent=35 // pred_check_branch
          %934 = sbr.rel (%p932) target = $region60
        $region59: #{transformer_forward.26} parent=35 // pred_region
          %v935 = vld [vmem:[#allocation3] sm:$0xff]
          %v936 = vrcp.pop %v935
          %v937 = vld [vmem:[#allocation4] sm:$0xff]
          %939 = vset.pattern.permute.xlu0 0
          %940 = vperm.xlu0 %939, %v936
          %v941 = vpop.permute.xlu0 %940
          %v943 = vmul.f32 %v937, %v941
          %v944 = vpack.c.bf16 %v943, %v943
          %vm945 = vcmask 60416
          %946 = vst.msk [vmem:[%s350] sm:$0xf] %vm945, %v944
          %v947 = vld [vmem:[#allocation4] sm:$0xff]
          %948 = vset.pattern.permute.xlu0 1
          %949 = vperm.xlu0 %948, %v936
          %v950 = vpop.permute.xlu0 %949
          %v952 = vmul.f32 %v947, %v950
          %v953 = vpack.c.bf16 %v952, %v952
          %vm954 = vcmask 126016
          %955 = vst.msk [vmem:[%s350] sm:$0xf] %vm954, %v953
          %v956 = vld [vmem:[#allocation4] sm:$0xff]
          %957 = vset.pattern.permute.xlu0 2
          %958 = vperm.xlu0 %957, %v936
          %v959 = vpop.permute.xlu0 %958
          %v961 = vmul.f32 %v956, %v959
          %v962 = vpack.c.bf16 %v961, %v961
          %vm963 = vcmask 191616
          %964 = vst.msk [vmem:[%s350] sm:$0xf] %vm963, %v962
          %v965 = vld [vmem:[#allocation4] sm:$0xff]
          %966 = vset.pattern.permute.xlu0 3
          %967 = vperm.xlu0 %966, %v936
          %v968 = vpop.permute.xlu0 %967
          %v970 = vmul.f32 %v965, %v968
          %v971 = vpack.c.bf16 %v970, %v970
          %vm972 = vcmask 257216
          %973 = vst.msk [vmem:[%s350] sm:$0xf] %vm972, %v971
        $region60: #{transformer_forward.26} parent=35 // pred_fallthru
          _
        %s974 = sand.u32 %s168, 1
        %s975 = scalar_lea.sflag [#allocation7], %s974
        %s976 = sand.u32 %s168, 1
        %s977 = smul.addr %s976, 4
        %s978 = scalar_lea.vmem [#allocation13], %s977
        // Predicated region
        $region61: #{transformer_forward.26} parent=35 // pred_check
          %p979 = pneg %p178
        $region62: #{transformer_forward.26} parent=35 // pred_check_branch
          %981 = sbr.rel (%p979) target = $region64
        $region63: #{transformer_forward.26} parent=35 // pred_region
          %s983 = ssub.s32 64, 64
          %984 = vsyncadd %s975, %s983
          %s985 = sadd.s32 %s33, %s32
          %s986 = smul.addr %s985, 64
          %s987 = scalar_lea.hbm %s4, %s986
          %s989 = sshll.u32 %s978, 4
          %s990 = int_to_ptr.vmem [resolvable:$true] %s989
          %992 = dma.vmem_to_hbm [thread:$0]  %s990, 64, %s987, %s975
        $region64: #{transformer_forward.26} parent=35 // pred_fallthru
          _
      $region36: #{transformer_forward.26} parent=5 // pred_fallthru
        _
      %p993 = scmp.le.s32.totalorder 2, %s22
      // Predicated region
      $region65: #{transformer_forward.26} parent=5 // pred_check
        %p994 = pneg %p993
      $region66: #{transformer_forward.26} parent=5 // pred_check_branch
        %996 = sbr.rel (%p994) target = $region68
      $region67: #{transformer_forward.26} parent=5 // pred_region
        %s997 = ssub.s32 %s22, 2
        // Predicated region
        $region69: #{transformer_forward.26} parent=67 // pred_check
          %p998 = pneg %p184
        $region70: #{transformer_forward.26} parent=67 // pred_check_branch
          %1000 = sbr.rel (%p998) target = $region72
        $region71: #{transformer_forward.26} parent=67 // pred_region
          %s1001 = sand.u32 %s169, 1
          %s1002 = scalar_lea.sflag [#allocation7], %s1001
          %s1003 = sand.u32 %s169, 1
          %s1004 = smul.addr %s1003, 4
          %s1005 = scalar_lea.vmem [#allocation13], %s1004
          %1006 = dma.done %s1002, 64
        $region72: #{transformer_forward.26} parent=67 // pred_fallthru
          _
      $region68: #{transformer_forward.26} parent=5 // pred_fallthru
        _
    $region6: #{transformer_forward.26} parent=1 // loop_footer
      %s26 = sadd.s32 1, %s22
    $region7: #{transformer_forward.26} parent=1 // loop_footer_branch
      %21 = sbr.rel target = $region3
    $region8: #{transformer_forward.26} parent=1 // loop_exit
      _
    %1007 = vsyncpa [#allocation6], 1
    %s1008 = scalar_lea.sflag [#allocation6], 1
    %1009 = vsyncpa %s1008, 1
    %1010 = vsyncpa [#allocation9], 1
    %s1011 = scalar_lea.sflag [#allocation9], 1
    %1012 = vsyncpa %s1011, 1
    %1013 = vsyncpa [#allocation12], 1
    %s1014 = scalar_lea.sflag [#allocation12], 1
    %1015 = vsyncpa %s1014, 1
    %1016 = vsyncpa [#allocation7], 1
    %s1017 = scalar_lea.sflag [#allocation7], 1
    %1018 = vsyncpa %s1017, 1

</llo_original>
